<compile_context>
chip_gen: v5e
topology: v5e:2x2
jax: 0.10.0
libtpu: 0.0.40
codegen_flags: <defaults>
</compile_context>

<pallas_src>
import functools
import math

import jax
import jax.numpy as jnp
from jax.experimental import pallas as pl
from jax.experimental.pallas import tpu as pltpu

_GELU_C = math.sqrt(2.0 / math.pi)
_VMEM_LIMIT = 48 * 1024 * 1024   # < 64 MiB physical on v7x, > 16/32 MiB scoped defaults


def _pick_tile(dim, target, mult):
    """Largest multiple of `mult` that divides `dim` and is <= max(mult, target)."""
    assert dim % mult == 0, f"dimension {dim} must be a multiple of {mult}"
    best = mult
    t = mult
    limit = min(dim, max(target, mult))
    while t <= limit:
        if dim % t == 0:
            best = t
        t += mult
    return best


# ----------------------------------------------------------------------------
# Kernels
# ----------------------------------------------------------------------------

def _ln_matmul_kernel(x_ref, g_ref, b_ref, w_ref, bias_ref, o_ref, xn_ref, *,
                      activation):
    # Fused LayerNorm + matmul (+ optional NewGELU).  The LN result for the current
    # row-tile is computed once (j == 0, f32 statistics) and cached in VMEM scratch
    # in the matmul input dtype, then reused for every output column tile.
    @pl.when(pl.program_id(1) == 0)
    def _():
        x = x_ref[...].astype(jnp.float32)
        mean = jnp.mean(x, axis=-1, keepdims=True)
        xc = x - mean
        var = jnp.mean(xc * xc, axis=-1, keepdims=True)
        xn = xc * jax.lax.rsqrt(var + 1e-5)                   # torch LayerNorm eps
        xn = xn * g_ref[...].astype(jnp.float32) + b_ref[...].astype(jnp.float32)
        xn_ref[...] = xn.astype(xn_ref.dtype)

    h = jnp.dot(xn_ref[...], w_ref[...], preferred_element_type=jnp.float32)
    h = h + bias_ref[...].astype(jnp.float32)
    if activation == "gelu":                                  # NewGELU (tanh approx)
        h = 0.5 * h * (1.0 + jnp.tanh(_GELU_C * (h + 0.044715 * h * h * h)))
    o_ref[...] = h.astype(o_ref.dtype)


def _matmul_resid_kernel(x_ref, w_ref, bias_ref, r_ref, o_ref, acc_ref):
    # K-tiled matmul with f32 VMEM accumulator; bias + residual fused into the
    # finalize step.  Residual HBM buffer is aliased to the output.
    @pl.when(pl.program_id(2) == 0)
    def _():
        acc_ref[...] = jnp.zeros_like(acc_ref)

    acc_ref[...] += jnp.dot(x_ref[...], w_ref[...],
                            preferred_element_type=jnp.float32)

    @pl.when(pl.program_id(2) == pl.num_programs(2) - 1)
    def _():
        o_ref[...] = (acc_ref[...] + bias_ref[...].astype(jnp.float32)
                      + r_ref[...].astype(jnp.float32)).astype(o_ref.dtype)


def _attn_kernel(q_ref, k_ref, v_ref, o_ref, *, n_head, scale):
    # One batch element per grid step; refs are (T, C) slices of the QKV slab
    # (column offsets 0 / C / 2C selected by the BlockSpec index maps).  All heads
    # are processed here and written as a single lane-dense (T, C) store.  Matmuls
    # stay in the native dtype (bf16 MXU path) with f32 accumulation; mask/softmax
    # math is f32.
    t, c = q_ref.shape
    dh = c // n_head
    q = q_ref[...]
    k = k_ref[...]
    v = v_ref[...]
    row = jax.lax.broadcasted_iota(jnp.int32, (t, t), 0)
    col = jax.lax.broadcasted_iota(jnp.int32, (t, t), 1)
    causal = row >= col
    heads = []
    for h in range(n_head):                                   # static unroll over heads
        qh = q[:, h * dh:(h + 1) * dh]
        kh = k[:, h * dh:(h + 1) * dh]
        vh = v[:, h * dh:(h + 1) * dh]
        # contract on the last axes directly -> no kh.T transpose through the XLU
        s = jax.lax.dot_general(qh, kh, (((1,), (1,)), ((), ())),
                                preferred_element_type=jnp.float32) * scale
        s = jnp.where(causal, s, -1e30)                       # f32 mask / softmax math
        s = s - jnp.max(s, axis=-1, keepdims=True)
        p = jnp.exp(s)
        p = p * pl.reciprocal(jnp.sum(p, axis=-1, keepdims=True), approx=True)
        heads.append(jnp.dot(p.astype(v.dtype), vh,
                             preferred_element_type=jnp.float32))
    o_ref[...] = jnp.concatenate(heads, axis=-1).astype(o_ref.dtype)
    # TODO(synk): flash-style tiling over T (online softmax) for long contexts;
    # this kernel holds a full (T, T) score matrix per head.


# ----------------------------------------------------------------------------
# pallas_call wrappers
# ----------------------------------------------------------------------------

def ln_matmul(x, g, b, w, bias, *, activation="none", tm_target=256, tn_target=256):
    M, C = x.shape
    N = w.shape[1]
    tm = _pick_tile(M, tm_target, 8)
    tn = _pick_tile(N, tn_target, 128)
    return pl.pallas_call(
        functools.partial(_ln_matmul_kernel, activation=activation),
        grid=(M // tm, N // tn),
        in_specs=[
            pl.BlockSpec((tm, C), lambda i, j: (i, 0)),    # x row-tile, resident over j
            pl.BlockSpec((1, C), lambda i, j: (0, 0)),     # LN gamma
            pl.BlockSpec((1, C), lambda i, j: (0, 0)),     # LN beta
            pl.BlockSpec((C, tn), lambda i, j: (0, j)),    # weight column-tile (streamed)
            pl.BlockSpec((1, tn), lambda i, j: (0, j)),    # bias
        ],
        out_specs=pl.BlockSpec((tm, tn), lambda i, j: (i, j)),
        out_shape=jax.ShapeDtypeStruct((M, N), x.dtype),
        scratch_shapes=[pltpu.VMEM((tm, C), w.dtype)],     # cached LN(x) row-tile
        compiler_params=pltpu.CompilerParams(
            # N axis "arbitrary": guarantees j==0 runs first for every row-tile on
            # whichever core owns it, so the LN cache is always initialized.
            dimension_semantics=("parallel", "arbitrary"),
            vmem_limit_bytes=_VMEM_LIMIT),
    )(x, g, b, w, bias)


def matmul_resid(x, w, bias, resid, *, tm_target=256, tn_target=256, tk_target=512):
    M, K = x.shape
    N = w.shape[1]
    tm = _pick_tile(M, tm_target, 8)
    tn = _pick_tile(N, tn_target, 128)
    tk = _pick_tile(K, tk_target, 128)
    return pl.pallas_call(
        _matmul_resid_kernel,
        grid=(M // tm, N // tn, K // tk),
        in_specs=[
            pl.BlockSpec((tm, tk), lambda i, j, k: (i, k)),
            pl.BlockSpec((tk, tn), lambda i, j, k: (k, j)),
            pl.BlockSpec((1, tn), lambda i, j, k: (0, j)),
            pl.BlockSpec((tm, tn), lambda i, j, k: (i, j)),   # residual (aliased to out)
        ],
        out_specs=pl.BlockSpec((tm, tn), lambda i, j, k: (i, j)),
        out_shape=jax.ShapeDtypeStruct((M, N), x.dtype),
        scratch_shapes=[pltpu.VMEM((tm, tn), jnp.float32)],
        input_output_aliases={3: 0},                          # residual buffer -> output
        compiler_params=pltpu.CompilerParams(
            dimension_semantics=("parallel", "parallel", "arbitrary"),
            vmem_limit_bytes=_VMEM_LIMIT),
    )(x, w, bias, resid)


def causal_attention(qkv, *, n_head, batch, seq):
    # qkv: (B*T, 3C) slab straight from the QKV projection.  BlockSpec index maps
    # pick one batch element's rows and the Q / K / V column thirds per grid step,
    # so no XLA-side split / reshape / head transpose is needed.
    M, threeC = qkv.shape
    C = threeC // 3
    dh = C // n_head
    scale = 1.0 / math.sqrt(dh)
    blk = (seq, C)
    return pl.pallas_call(
        functools.partial(_attn_kernel, n_head=n_head, scale=scale),
        grid=(batch,),
        in_specs=[
            pl.BlockSpec(blk, lambda b: (b, 0)),   # Q columns [0, C)
            pl.BlockSpec(blk, lambda b: (b, 1)),   # K columns [C, 2C)
            pl.BlockSpec(blk, lambda b: (b, 2)),   # V columns [2C, 3C)
        ],
        out_specs=pl.BlockSpec(blk, lambda b: (b, 0)),
        out_shape=jax.ShapeDtypeStruct((M, C), qkv.dtype),
        compiler_params=pltpu.CompilerParams(
            dimension_semantics=("parallel",),
            vmem_limit_bytes=_VMEM_LIMIT),
    )(qkv, qkv, qkv)


# ----------------------------------------------------------------------------
# Parameters (deterministic, GPT-2 style init) + forward
# ----------------------------------------------------------------------------

def init_params(key, *, vocab_size, block_size, n_layer, n_head, n_embd,
                dtype=jnp.float32):
    def normal(k, shape, std=0.02):
        return (std * jax.random.normal(k, shape, dtype=jnp.float32)).astype(dtype)

    keys = iter(jax.random.split(key, 3 + n_layer))
    params = {
        "wte": normal(next(keys), (vocab_size, n_embd)),
        "wpe": normal(next(keys), (block_size, n_embd)),
        "lnf_g": jnp.ones((1, n_embd), dtype),
        "lnf_b": jnp.zeros((1, n_embd), dtype),
        "lm_head_w": normal(next(keys), (n_embd, vocab_size)),  # stored (in, out)
        "lm_head_b": jnp.zeros((1, vocab_size), dtype),          # lm_head has no bias
        "blocks": [],
    }
    resid_std = 0.02 / math.sqrt(2 * n_layer)
    for _ in range(n_layer):
        k1, k2, k3, k4 = jax.random.split(next(keys), 4)
        params["blocks"].append({
            "ln1_g": jnp.ones((1, n_embd), dtype),
            "ln1_b": jnp.zeros((1, n_embd), dtype),
            "attn_w": normal(k1, (n_embd, 3 * n_embd)),
            "attn_b": jnp.zeros((1, 3 * n_embd), dtype),
            "attn_proj_w": normal(k2, (n_embd, n_embd), resid_std),
            "attn_proj_b": jnp.zeros((1, n_embd), dtype),
            "ln2_g": jnp.ones((1, n_embd), dtype),
            "ln2_b": jnp.zeros((1, n_embd), dtype),
            "fc_w": normal(k3, (n_embd, 4 * n_embd)),
            "fc_b": jnp.zeros((1, 4 * n_embd), dtype),
            "mlp_proj_w": normal(k4, (4 * n_embd, n_embd), resid_std),
            "mlp_proj_b": jnp.zeros((1, n_embd), dtype),
        })
    return params


def gpt_forward(params, idx, *, n_head):
    """idx: int32 (B, T) token ids -> logits (B, T, vocab_size).  Eval mode."""
    B, T = idx.shape
    C = params["wte"].shape[1]

    # Embedding gather + positional add: cheap glue, left to XLA.
    te = jnp.take(params["wte"], idx, axis=0)          # (B, T, C)
    pe = params["wpe"][:T]                             # (T, C)
    x = (te + pe[None]).reshape(B * T, C)
    # drop_embd / attn / resid dropouts: identity in eval mode

    for blk in params["blocks"]:
        # ---- causal self-attention sub-block (ln1 fused into QKV matmul) ----
        qkv = ln_matmul(x, blk["ln1_g"], blk["ln1_b"], blk["attn_w"], blk["attn_b"])
        o = causal_attention(qkv, n_head=n_head, batch=B, seq=T)
        x = matmul_resid(o, blk["attn_proj_w"], blk["attn_proj_b"], x)
        # ---- MLP sub-block (ln2 + fc + GELU fused; proj + residual fused) ----
        h = ln_matmul(x, blk["ln2_g"], blk["ln2_b"], blk["fc_w"], blk["fc_b"],
                      activation="gelu")
        x = matmul_resid(h, blk["mlp_proj_w"], blk["mlp_proj_b"], x)

    # final LayerNorm fused into lm_head; vocab (N) streamed in up-to-1024-lane tiles
    logits = ln_matmul(x, params["lnf_g"], params["lnf_b"], params["lm_head_w"],
                       params["lm_head_b"], tn_target=1024)
    return logits.reshape(B, T, -1)


# ----------------------------------------------------------------------------
# Pure-JAX reference for a correctness check
# ----------------------------------------------------------------------------

def gpt_forward_ref(params, idx, *, n_head):
    B, T = idx.shape
    C = params["wte"].shape[1]
    dh = C // n_head

    def ln(x, g, b):
        m = jnp.mean(x, -1, keepdims=True)
        v = jnp.mean((x - m) ** 2, -1, keepdims=True)
        return (x - m) * jax.lax.rsqrt(v + 1e-5) * g + b

    def gelu(x):
        return 0.5 * x * (1.0 + jnp.tanh(_GELU_C * (x + 0.044715 * x ** 3)))

    x = params["wte"][idx] + params["wpe"][:T]
    for blk in params["blocks"]:
        h = ln(x, blk["ln1_g"], blk["ln1_b"])
        qkv = h @ blk["attn_w"] + blk["attn_b"]
        q, k, v = jnp.split(qkv, 3, axis=-1)
        q = q.reshape(B, T, n_head, dh).transpose(0, 2, 1, 3)
        k = k.reshape(B, T, n_head, dh).transpose(0, 2, 1, 3)
        v = v.reshape(B, T, n_head, dh).transpose(0, 2, 1, 3)
        s = (q @ jnp.swapaxes(k, -1, -2)) / math.sqrt(dh)
        mask = jnp.tril(jnp.ones((T, T), bool))
        s = jnp.where(mask, s, -1e30)
        p = jax.nn.softmax(s, axis=-1)
        o = (p @ v).transpose(0, 2, 1, 3).reshape(B, T, C)
        x = x + (o @ blk["attn_proj_w"] + blk["attn_proj_b"])
        h = ln(x, blk["ln2_g"], blk["ln2_b"])
        x = x + (gelu(h @ blk["fc_w"] + blk["fc_b"]) @ blk["mlp_proj_w"] + blk["mlp_proj_b"])
    x = ln(x, params["lnf_g"], params["lnf_b"])
    return x @ params["lm_head_w"]


# ----------------------------------------------------------------------------

if __name__ == "__main__":
    # Small, TPU-friendly config: C multiple of 128 (lane-dense), T multiple of 8.
    vocab_size, block_size = 256, 32
    n_layer, n_head, n_embd = 2, 4, 128
    B, T = 2, 16

    key = jax.random.PRNGKey(0)
    pkey, ikey = jax.random.split(key)
    params = init_params(pkey, vocab_size=vocab_size, block_size=block_size,
                         n_layer=n_layer, n_head=n_head, n_embd=n_embd)
    idx = jax.random.randint(ikey, (B, T), 0, vocab_size, dtype=jnp.int32)

    fwd = jax.jit(functools.partial(gpt_forward, n_head=n_head))

    # f32 run + correctness check vs pure-JAX reference
    logits = jax.block_until_ready(fwd(params, idx))
    assert logits.shape == (B, T, vocab_size)
    ref = jax.block_until_ready(gpt_forward_ref(params, idx, n_head=n_head))
    assert jnp.allclose(logits, ref, atol=2e-3, rtol=2e-3), "mismatch vs JAX reference"

    # bf16 weights/activations (half the HBM traffic, bf16 MXU path; kernels keep
    # f32 accumulation and f32 softmax/LayerNorm statistics).
    params_bf16 = jax.tree_util.tree_map(
        lambda a: a.astype(jnp.bfloat16)
        if isinstance(a, jax.Array) and a.dtype == jnp.float32 else a, params)
    logits_bf16 = jax.block_until_ready(fwd(params_bf16, idx))
    assert logits_bf16.shape == (B, T, vocab_size)
    assert bool(jnp.all(jnp.isfinite(logits_bf16.astype(jnp.float32))))

    # TODO(synk): cross-entropy loss branch (tgt is not None) and generate()
    # sampling loop are host-side conveniences, not implemented as kernels.
    print("KERNEL_OK")
</pallas_src>

<mosaic_0001>
module attributes {stable_mosaic.version = 11 : i64} {
  func.func @_attn_kernel(%arg0: i32, %arg1: memref<16x128xf32, #tpu.memory_space<vmem>>, %arg2: memref<16x128xf32, #tpu.memory_space<vmem>>, %arg3: memref<16x128xf32, #tpu.memory_space<vmem>>, %arg4: memref<16x128xf32, #tpu.memory_space<vmem>>) attributes {dimension_semantics = [#tpu.dimension_semantics<parallel>], iteration_bounds = array<i64: 2>, scalar_prefetch = 0 : i64, scratch_operands = 0 : i64, tpu.core_type = #tpu.core_type<tc>, window_params = [{transform_indices = @transform_0, window_bounds = array<i64: 16, 128>}, {transform_indices = @transform_1, window_bounds = array<i64: 16, 128>}, {transform_indices = @transform_2, window_bounds = array<i64: 16, 128>}, {transform_indices = @transform_3, window_bounds = array<i64: 16, 128>}]} {
    %c0 = arith.constant 0 : index
    %c0_0 = arith.constant 0 : index
    %0 = vector.load %arg1[%c0, %c0_0] : memref<16x128xf32, #tpu.memory_space<vmem>>, vector<16x128xf32>
    %c0_1 = arith.constant 0 : index
    %c0_2 = arith.constant 0 : index
    %1 = vector.load %arg2[%c0_1, %c0_2] : memref<16x128xf32, #tpu.memory_space<vmem>>, vector<16x128xf32>
    %c0_3 = arith.constant 0 : index
    %c0_4 = arith.constant 0 : index
    %2 = vector.load %arg3[%c0_3, %c0_4] : memref<16x128xf32, #tpu.memory_space<vmem>>, vector<16x128xf32>
    %3 = tpu.iota {dimensions = array<i32: 0>} : vector<16x16xi32>
    %4 = tpu.iota {dimensions = array<i32: 1>} : vector<16x16xi32>
    %5 = arith.cmpi sge, %3, %4 : vector<16x16xi32>
    %6 = vector.extract_strided_slice %0 {offsets = [0, 0], sizes = [16, 32], strides = [1, 1]} : vector<16x128xf32> to vector<16x32xf32>
    %7 = vector.extract_strided_slice %1 {offsets = [0, 0], sizes = [16, 32], strides = [1, 1]} : vector<16x128xf32> to vector<16x32xf32>
    %8 = vector.extract_strided_slice %2 {offsets = [0, 0], sizes = [16, 32], strides = [1, 1]} : vector<16x128xf32> to vector<16x32xf32>
    %cst = arith.constant dense<0.000000e+00> : vector<16x16xf32>
    %9 = tpu.matmul %6, %7, %cst {dimension_numbers = #tpu.dot_dimension_numbers<[1], [1], [0], [0], [0, 0, 1, 0], [], []>} : vector<16x32xf32>, vector<16x32xf32>, vector<16x16xf32> -> vector<16x16xf32>
    %cst_5 = arith.constant 0.176776692 : f32
    %10 = vector.broadcast %cst_5 : f32 to vector<16x16xf32>
    %11 = arith.mulf %9, %10 : vector<16x16xf32>
    %cst_6 = arith.constant -1.000000e+30 : f32
    %12 = vector.broadcast %cst_6 : f32 to vector<16x16xf32>
    %13 = arith.select %5, %11, %12 : vector<16x16xi1>, vector<16x16xf32>
    %cst_7 = arith.constant dense<0xFF800000> : vector<16xf32>
    %14 = vector.multi_reduction <maximumf>, %13, %cst_7 [1] : vector<16x16xf32> to vector<16xf32>
    %15 = vector.shape_cast %14 : vector<16xf32> to vector<16x1xf32>
    %16 = vector.broadcast %15 : vector<16x1xf32> to vector<16x16xf32>
    %17 = arith.subf %13, %16 : vector<16x16xf32>
    %18 = math.exp %17 : vector<16x16xf32>
    %cst_8 = arith.constant dense<0.000000e+00> : vector<16xf32>
    %19 = vector.multi_reduction <add>, %18, %cst_8 [1] : vector<16x16xf32> to vector<16xf32>
    %20 = vector.shape_cast %19 : vector<16xf32> to vector<16x1xf32>
    %21 = tpu.reciprocal %20 {approx = true} : vector<16x1xf32> -> vector<16x1xf32>
    %22 = vector.broadcast %21 : vector<16x1xf32> to vector<16x16xf32>
    %23 = arith.mulf %18, %22 : vector<16x16xf32>
    %cst_9 = arith.constant dense<0.000000e+00> : vector<16x32xf32>
    %24 = tpu.matmul %23, %8, %cst_9 {dimension_numbers = #tpu.dot_dimension_numbers<[1], [0], [0], [1], [0, 0, 1, 1], [], []>} : vector<16x16xf32>, vector<16x32xf32>, vector<16x32xf32> -> vector<16x32xf32>
    %25 = vector.extract_strided_slice %0 {offsets = [0, 32], sizes = [16, 32], strides = [1, 1]} : vector<16x128xf32> to vector<16x32xf32>
    %26 = vector.extract_strided_slice %1 {offsets = [0, 32], sizes = [16, 32], strides = [1, 1]} : vector<16x128xf32> to vector<16x32xf32>
    %27 = vector.extract_strided_slice %2 {offsets = [0, 32], sizes = [16, 32], strides = [1, 1]} : vector<16x128xf32> to vector<16x32xf32>
    %cst_10 = arith.constant dense<0.000000e+00> : vector<16x16xf32>
    %28 = tpu.matmul %25, %26, %cst_10 {dimension_numbers = #tpu.dot_dimension_numbers<[1], [1], [0], [0], [0, 0, 1, 0], [], []>} : vector<16x32xf32>, vector<16x32xf32>, vector<16x16xf32> -> vector<16x16xf32>
    %cst_11 = arith.constant 0.176776692 : f32
    %29 = vector.broadcast %cst_11 : f32 to vector<16x16xf32>
    %30 = arith.mulf %28, %29 : vector<16x16xf32>
    %cst_12 = arith.constant -1.000000e+30 : f32
    %31 = vector.broadcast %cst_12 : f32 to vector<16x16xf32>
    %32 = arith.select %5, %30, %31 : vector<16x16xi1>, vector<16x16xf32>
    %cst_13 = arith.constant dense<0xFF800000> : vector<16xf32>
    %33 = vector.multi_reduction <maximumf>, %32, %cst_13 [1] : vector<16x16xf32> to vector<16xf32>
    %34 = vector.shape_cast %33 : vector<16xf32> to vector<16x1xf32>
    %35 = vector.broadcast %34 : vector<16x1xf32> to vector<16x16xf32>
    %36 = arith.subf %32, %35 : vector<16x16xf32>
    %37 = math.exp %36 : vector<16x16xf32>
    %cst_14 = arith.constant dense<0.000000e+00> : vector<16xf32>
    %38 = vector.multi_reduction <add>, %37, %cst_14 [1] : vector<16x16xf32> to vector<16xf32>
    %39 = vector.shape_cast %38 : vector<16xf32> to vector<16x1xf32>
    %40 = tpu.reciprocal %39 {approx = true} : vector<16x1xf32> -> vector<16x1xf32>
    %41 = vector.broadcast %40 : vector<16x1xf32> to vector<16x16xf32>
    %42 = arith.mulf %37, %41 : vector<16x16xf32>
    %cst_15 = arith.constant dense<0.000000e+00> : vector<16x32xf32>
    %43 = tpu.matmul %42, %27, %cst_15 {dimension_numbers = #tpu.dot_dimension_numbers<[1], [0], [0], [1], [0, 0, 1, 1], [], []>} : vector<16x16xf32>, vector<16x32xf32>, vector<16x32xf32> -> vector<16x32xf32>
    %44 = vector.extract_strided_slice %0 {offsets = [0, 64], sizes = [16, 32], strides = [1, 1]} : vector<16x128xf32> to vector<16x32xf32>
    %45 = vector.extract_strided_slice %1 {offsets = [0, 64], sizes = [16, 32], strides = [1, 1]} : vector<16x128xf32> to vector<16x32xf32>
    %46 = vector.extract_strided_slice %2 {offsets = [0, 64], sizes = [16, 32], strides = [1, 1]} : vector<16x128xf32> to vector<16x32xf32>
    %cst_16 = arith.constant dense<0.000000e+00> : vector<16x16xf32>
    %47 = tpu.matmul %44, %45, %cst_16 {dimension_numbers = #tpu.dot_dimension_numbers<[1], [1], [0], [0], [0, 0, 1, 0], [], []>} : vector<16x32xf32>, vector<16x32xf32>, vector<16x16xf32> -> vector<16x16xf32>
    %cst_17 = arith.constant 0.176776692 : f32
    %48 = vector.broadcast %cst_17 : f32 to vector<16x16xf32>
    %49 = arith.mulf %47, %48 : vector<16x16xf32>
    %cst_18 = arith.constant -1.000000e+30 : f32
    %50 = vector.broadcast %cst_18 : f32 to vector<16x16xf32>
    %51 = arith.select %5, %49, %50 : vector<16x16xi1>, vector<16x16xf32>
    %cst_19 = arith.constant dense<0xFF800000> : vector<16xf32>
    %52 = vector.multi_reduction <maximumf>, %51, %cst_19 [1] : vector<16x16xf32> to vector<16xf32>
    %53 = vector.shape_cast %52 : vector<16xf32> to vector<16x1xf32>
    %54 = vector.broadcast %53 : vector<16x1xf32> to vector<16x16xf32>
    %55 = arith.subf %51, %54 : vector<16x16xf32>
    %56 = math.exp %55 : vector<16x16xf32>
    %cst_20 = arith.constant dense<0.000000e+00> : vector<16xf32>
    %57 = vector.multi_reduction <add>, %56, %cst_20 [1] : vector<16x16xf32> to vector<16xf32>
    %58 = vector.shape_cast %57 : vector<16xf32> to vector<16x1xf32>
    %59 = tpu.reciprocal %58 {approx = true} : vector<16x1xf32> -> vector<16x1xf32>
    %60 = vector.broadcast %59 : vector<16x1xf32> to vector<16x16xf32>
    %61 = arith.mulf %56, %60 : vector<16x16xf32>
    %cst_21 = arith.constant dense<0.000000e+00> : vector<16x32xf32>
    %62 = tpu.matmul %61, %46, %cst_21 {dimension_numbers = #tpu.dot_dimension_numbers<[1], [0], [0], [1], [0, 0, 1, 1], [], []>} : vector<16x16xf32>, vector<16x32xf32>, vector<16x32xf32> -> vector<16x32xf32>
    %63 = vector.extract_strided_slice %0 {offsets = [0, 96], sizes = [16, 32], strides = [1, 1]} : vector<16x128xf32> to vector<16x32xf32>
    %64 = vector.extract_strided_slice %1 {offsets = [0, 96], sizes = [16, 32], strides = [1, 1]} : vector<16x128xf32> to vector<16x32xf32>
    %65 = vector.extract_strided_slice %2 {offsets = [0, 96], sizes = [16, 32], strides = [1, 1]} : vector<16x128xf32> to vector<16x32xf32>
    %cst_22 = arith.constant dense<0.000000e+00> : vector<16x16xf32>
    %66 = tpu.matmul %63, %64, %cst_22 {dimension_numbers = #tpu.dot_dimension_numbers<[1], [1], [0], [0], [0, 0, 1, 0], [], []>} : vector<16x32xf32>, vector<16x32xf32>, vector<16x16xf32> -> vector<16x16xf32>
    %cst_23 = arith.constant 0.176776692 : f32
    %67 = vector.broadcast %cst_23 : f32 to vector<16x16xf32>
    %68 = arith.mulf %66, %67 : vector<16x16xf32>
    %cst_24 = arith.constant -1.000000e+30 : f32
    %69 = vector.broadcast %cst_24 : f32 to vector<16x16xf32>
    %70 = arith.select %5, %68, %69 : vector<16x16xi1>, vector<16x16xf32>
    %cst_25 = arith.constant dense<0xFF800000> : vector<16xf32>
    %71 = vector.multi_reduction <maximumf>, %70, %cst_25 [1] : vector<16x16xf32> to vector<16xf32>
    %72 = vector.shape_cast %71 : vector<16xf32> to vector<16x1xf32>
    %73 = vector.broadcast %72 : vector<16x1xf32> to vector<16x16xf32>
    %74 = arith.subf %70, %73 : vector<16x16xf32>
    %75 = math.exp %74 : vector<16x16xf32>
    %cst_26 = arith.constant dense<0.000000e+00> : vector<16xf32>
    %76 = vector.multi_reduction <add>, %75, %cst_26 [1] : vector<16x16xf32> to vector<16xf32>
    %77 = vector.shape_cast %76 : vector<16xf32> to vector<16x1xf32>
    %78 = tpu.reciprocal %77 {approx = true} : vector<16x1xf32> -> vector<16x1xf32>
    %79 = vector.broadcast %78 : vector<16x1xf32> to vector<16x16xf32>
    %80 = arith.mulf %75, %79 : vector<16x16xf32>
    %cst_27 = arith.constant dense<0.000000e+00> : vector<16x32xf32>
    %81 = tpu.matmul %80, %65, %cst_27 {dimension_numbers = #tpu.dot_dimension_numbers<[1], [0], [0], [1], [0, 0, 1, 1], [], []>} : vector<16x16xf32>, vector<16x32xf32>, vector<16x32xf32> -> vector<16x32xf32>
    %82 = tpu.concatenate %24, %43, %62, %81 in 1 : vector<16x32xf32>, vector<16x32xf32>, vector<16x32xf32>, vector<16x32xf32> -> vector<16x128xf32>
    %c0_28 = arith.constant 0 : index
    %c0_29 = arith.constant 0 : index
    %83 = vector.load %arg4[%c0_28, %c0_29] : memref<16x128xf32, #tpu.memory_space<vmem>>, vector<16x128xf32>
    tpu.vector_store %arg4[%c0_28, %c0_29], %82 {strides = array<i32>} : memref<16x128xf32, #tpu.memory_space<vmem>>, vector<16x128xf32>,
    return
  }
  func.func @transform_0(%arg0: i32) -> (i32, i32) {
    %c0_i32 = arith.constant 0 : i32
    %c0_i32_0 = arith.constant 0 : i32
    return %arg0, %c0_i32 : i32, i32
  }
  func.func @transform_1(%arg0: i32) -> (i32, i32) {
    %c1_i32 = arith.constant 1 : i32
    %c0_i32 = arith.constant 0 : i32
    return %arg0, %c1_i32 : i32, i32
  }
  func.func @transform_2(%arg0: i32) -> (i32, i32) {
    %c2_i32 = arith.constant 2 : i32
    %c0_i32 = arith.constant 0 : i32
    return %arg0, %c2_i32 : i32, i32
  }
  func.func @transform_3(%arg0: i32) -> (i32, i32) {
    %c0_i32 = arith.constant 0 : i32
    %c0_i32_0 = arith.constant 0 : i32
    return %arg0, %c0_i32 : i32, i32
  }
}

module attributes {stable_mosaic.version = 11 : i64} {
  func.func @_ln_matmul_kernel(%arg0: i32, %arg1: i32, %arg2: memref<32x128xf32, #tpu.memory_space<vmem>>, %arg3: memref<1x128xf32, #tpu.memory_space<vmem>>, %arg4: memref<1x128xf32, #tpu.memory_space<vmem>>, %arg5: memref<128x128xf32, #tpu.memory_space<vmem>>, %arg6: memref<1x128xf32, #tpu.memory_space<vmem>>, %arg7: memref<32x128xf32, #tpu.memory_space<vmem>>, %arg8: memref<32x128xf32, #tpu.memory_space<vmem>>) attributes {dimension_semantics = [#tpu.dimension_semantics<parallel>, #tpu.dimension_semantics<arbitrary>], iteration_bounds = array<i64: 1, 3>, scalar_prefetch = 0 : i64, scratch_operands = 1 : i64, tpu.core_type = #tpu.core_type<tc>, window_params = [{transform_indices = @transform_0, window_bounds = array<i64: 32, 128>}, {pipeline_mode = #tpu.pipeline_mode<synchronous>, transform_indices = @transform_1, window_bounds = array<i64: 1, 128>}, {pipeline_mode = #tpu.pipeline_mode<synchronous>, transform_indices = @transform_2, window_bounds = array<i64: 1, 128>}, {transform_indices = @transform_3, window_bounds = array<i64: 128, 128>}, {transform_indices = @transform_4, window_bounds = array<i64: 1, 128>}, {transform_indices = @transform_5, window_bounds = array<i64: 32, 128>}]} {
    %c0_i32 = arith.constant 0 : i32
    %0 = arith.cmpi eq, %arg1, %c0_i32 : i32
    %1 = arith.extui %0 : i1 to i32
    %c0_i32_0 = arith.constant 0 : i32
    %2 = arith.cmpi ne, %1, %c0_i32_0 : i32
    scf.if %2 {
      %c0_8 = arith.constant 0 : index
      %c0_9 = arith.constant 0 : index
      %10 = vector.load %arg2[%c0_8, %c0_9] : memref<32x128xf32, #tpu.memory_space<vmem>>, vector<32x128xf32>
      %cst_10 = arith.constant dense<0.000000e+00> : vector<32xf32>
      %11 = vector.multi_reduction <add>, %10, %cst_10 [1] : vector<32x128xf32> to vector<32xf32>
      %12 = vector.shape_cast %11 : vector<32xf32> to vector<32x1xf32>
      %cst_11 = arith.constant 1.280000e+02 : f32
      %13 = vector.broadcast %cst_11 : f32 to vector<32x1xf32>
      %14 = arith.divf %12, %13 : vector<32x1xf32>
      %15 = vector.broadcast %14 : vector<32x1xf32> to vector<32x128xf32>
      %16 = arith.subf %10, %15 : vector<32x128xf32>
      %17 = arith.mulf %16, %16 : vector<32x128xf32>
      %cst_12 = arith.constant dense<0.000000e+00> : vector<32xf32>
      %18 = vector.multi_reduction <add>, %17, %cst_12 [1] : vector<32x128xf32> to vector<32xf32>
      %19 = vector.shape_cast %18 : vector<32xf32> to vector<32x1xf32>
      %cst_13 = arith.constant 1.280000e+02 : f32
      %20 = vector.broadcast %cst_13 : f32 to vector<32x1xf32>
      %21 = arith.divf %19, %20 : vector<32x1xf32>
      %cst_14 = arith.constant 9.99999974E-6 : f32
      %22 = vector.broadcast %cst_14 : f32 to vector<32x1xf32>
      %23 = arith.addf %21, %22 : vector<32x1xf32>
      %24 = math.rsqrt %23 : vector<32x1xf32>
      %25 = vector.broadcast %24 : vector<32x1xf32> to vector<32x128xf32>
      %26 = arith.mulf %16, %25 : vector<32x128xf32>
      %c0_15 = arith.constant 0 : index
      %c0_16 = arith.constant 0 : index
      %27 = vector.load %arg3[%c0_15, %c0_16] : memref<1x128xf32, #tpu.memory_space<vmem>>, vector<1x128xf32>
      %28 = vector.broadcast %27 : vector<1x128xf32> to vector<32x128xf32>
      %29 = arith.mulf %26, %28 : vector<32x128xf32>
      %c0_17 = arith.constant 0 : index
      %c0_18 = arith.constant 0 : index
      %30 = vector.load %arg4[%c0_17, %c0_18] : memref<1x128xf32, #tpu.memory_space<vmem>>, vector<1x128xf32>
      %31 = vector.broadcast %30 : vector<1x128xf32> to vector<32x128xf32>
      %32 = arith.addf %29, %31 : vector<32x128xf32>
      %c0_19 = arith.constant 0 : index
      %c0_20 = arith.constant 0 : index
      %33 = vector.load %arg8[%c0_19, %c0_20] : memref<32x128xf32, #tpu.memory_space<vmem>>, vector<32x128xf32>
      tpu.vector_store %arg8[%c0_19, %c0_20], %32 {strides = array<i32>} : memref<32x128xf32, #tpu.memory_space<vmem>>, vector<32x128xf32>,
    } else {
    }
    %c0 = arith.constant 0 : index
    %c0_1 = arith.constant 0 : index
    %3 = vector.load %arg8[%c0, %c0_1] : memref<32x128xf32, #tpu.memory_space<vmem>>, vector<32x128xf32>
    %c0_2 = arith.constant 0 : index
    %c0_3 = arith.constant 0 : index
    %4 = vector.load %arg5[%c0_2, %c0_3] : memref<128x128xf32, #tpu.memory_space<vmem>>, vector<128x128xf32>
    %cst = arith.constant dense<0.000000e+00> : vector<32x128xf32>
    %5 = tpu.matmul %3, %4, %cst {dimension_numbers = #tpu.dot_dimension_numbers<[1], [0], [0], [1], [0, 0, 1, 1], [], []>} : vector<32x128xf32>, vector<128x128xf32>, vector<32x128xf32> -> vector<32x128xf32>
    %c0_4 = arith.constant 0 : index
    %c0_5 = arith.constant 0 : index
    %6 = vector.load %arg6[%c0_4, %c0_5] : memref<1x128xf32, #tpu.memory_space<vmem>>, vector<1x128xf32>
    %7 = vector.broadcast %6 : vector<1x128xf32> to vector<32x128xf32>
    %8 = arith.addf %5, %7 : vector<32x128xf32>
    %c0_6 = arith.constant 0 : index
    %c0_7 = arith.constant 0 : index
    %9 = vector.load %arg7[%c0_6, %c0_7] : memref<32x128xf32, #tpu.memory_space<vmem>>, vector<32x128xf32>
    tpu.vector_store %arg7[%c0_6, %c0_7], %8 {strides = array<i32>} : memref<32x128xf32, #tpu.memory_space<vmem>>, vector<32x128xf32>,
    return
  }
  func.func @transform_0(%arg0: i32, %arg1: i32) -> (i32, i32) {
    %c0_i32 = arith.constant 0 : i32
    %c0_i32_0 = arith.constant 0 : i32
    return %arg0, %c0_i32 : i32, i32
  }
  func.func @transform_1(%arg0: i32, %arg1: i32) -> (i32, i32) {
    %c0_i32 = arith.constant 0 : i32
    %c0_i32_0 = arith.constant 0 : i32
    %c0_i32_1 = arith.constant 0 : i32
    return %c0_i32, %c0_i32_0 : i32, i32
  }
  func.func @transform_2(%arg0: i32, %arg1: i32) -> (i32, i32) {
    %c0_i32 = arith.constant 0 : i32
    %c0_i32_0 = arith.constant 0 : i32
    %c0_i32_1 = arith.constant 0 : i32
    return %c0_i32, %c0_i32_0 : i32, i32
  }
  func.func @transform_3(%arg0: i32, %arg1: i32) -> (i32, i32) {
    %c0_i32 = arith.constant 0 : i32
    %c0_i32_0 = arith.constant 0 : i32
    return %c0_i32, %arg1 : i32, i32
  }
  func.func @transform_4(%arg0: i32, %arg1: i32) -> (i32, i32) {
    %c0_i32 = arith.constant 0 : i32
    %c0_i32_0 = arith.constant 0 : i32
    return %c0_i32, %arg1 : i32, i32
  }
  func.func @transform_5(%arg0: i32, %arg1: i32) -> (i32, i32) {
    %c0_i32 = arith.constant 0 : i32
    return %arg0, %arg1 : i32, i32
  }
}

module attributes {stable_mosaic.version = 11 : i64} {
  func.func @_matmul_resid_kernel(%arg0: i32, %arg1: i32, %arg2: i32, %arg3: memref<32x128xf32, #tpu.memory_space<vmem>>, %arg4: memref<128x128xf32, #tpu.memory_space<vmem>>, %arg5: memref<1x128xf32, #tpu.memory_space<vmem>>, %arg6: memref<32x128xf32, #tpu.memory_space<vmem>>, %arg7: memref<32x128xf32, #tpu.memory_space<vmem>>, %arg8: memref<32x128xf32, #tpu.memory_space<vmem>>) attributes {dimension_semantics = [#tpu.dimension_semantics<parallel>, #tpu.dimension_semantics<parallel>, #tpu.dimension_semantics<arbitrary>], iteration_bounds = array<i64: 1, 1, 1>, scalar_prefetch = 0 : i64, scratch_operands = 1 : i64, tpu.core_type = #tpu.core_type<tc>, window_params = [{transform_indices = @transform_0, window_bounds = array<i64: 32, 128>}, {transform_indices = @transform_1, window_bounds = array<i64: 128, 128>}, {transform_indices = @transform_2, window_bounds = array<i64: 1, 128>}, {transform_indices = @transform_3, window_bounds = array<i64: 32, 128>}, {transform_indices = @transform_4, window_bounds = array<i64: 32, 128>}]} {
    %c0_i32 = arith.constant 0 : i32
    %0 = arith.cmpi eq, %arg2, %c0_i32 : i32
    %1 = arith.extui %0 : i1 to i32
    %c0_i32_0 = arith.constant 0 : i32
    %2 = arith.cmpi ne, %1, %c0_i32_0 : i32
    scf.if %2 {
      %cst_10 = arith.constant 0.000000e+00 : f32
      %12 = vector.broadcast %cst_10 : f32 to vector<32x128xf32>
      %c0_11 = arith.constant 0 : index
      %c0_12 = arith.constant 0 : index
      %13 = vector.load %arg8[%c0_11, %c0_12] : memref<32x128xf32, #tpu.memory_space<vmem>>, vector<32x128xf32>
      tpu.vector_store %arg8[%c0_11, %c0_12], %12 {strides = array<i32>} : memref<32x128xf32, #tpu.memory_space<vmem>>, vector<32x128xf32>,
    } else {
    }
    %c0 = arith.constant 0 : index
    %c0_1 = arith.constant 0 : index
    %3 = vector.load %arg8[%c0, %c0_1] : memref<32x128xf32, #tpu.memory_space<vmem>>, vector<32x128xf32>
    %c0_2 = arith.constant 0 : index
    %c0_3 = arith.constant 0 : index
    %4 = vector.load %arg3[%c0_2, %c0_3] : memref<32x128xf32, #tpu.memory_space<vmem>>, vector<32x128xf32>
    %c0_4 = arith.constant 0 : index
    %c0_5 = arith.constant 0 : index
    %5 = vector.load %arg4[%c0_4, %c0_5] : memref<128x128xf32, #tpu.memory_space<vmem>>, vector<128x128xf32>
    %cst = arith.constant dense<0.000000e+00> : vector<32x128xf32>
    %6 = tpu.matmul %4, %5, %cst {dimension_numbers = #tpu.dot_dimension_numbers<[1], [0], [0], [1], [0, 0, 1, 1], [], []>} : vector<32x128xf32>, vector<128x128xf32>, vector<32x128xf32> -> vector<32x128xf32>
    %7 = arith.addf %3, %6 : vector<32x128xf32>
    %c0_6 = arith.constant 0 : index
    %c0_7 = arith.constant 0 : index
    %8 = vector.load %arg8[%c0_6, %c0_7] : memref<32x128xf32, #tpu.memory_space<vmem>>, vector<32x128xf32>
    tpu.vector_store %arg8[%c0_6, %c0_7], %7 {strides = array<i32>} : memref<32x128xf32, #tpu.memory_space<vmem>>, vector<32x128xf32>,
    %c0_i32_8 = arith.constant 0 : i32
    %9 = arith.cmpi eq, %arg2, %c0_i32_8 : i32
    %10 = arith.extui %9 : i1 to i32
    %c0_i32_9 = arith.constant 0 : i32
    %11 = arith.cmpi ne, %10, %c0_i32_9 : i32
    scf.if %11 {
      %c0_10 = arith.constant 0 : index
      %c0_11 = arith.constant 0 : index
      %12 = vector.load %arg8[%c0_10, %c0_11] : memref<32x128xf32, #tpu.memory_space<vmem>>, vector<32x128xf32>
      %c0_12 = arith.constant 0 : index
      %c0_13 = arith.constant 0 : index
      %13 = vector.load %arg5[%c0_12, %c0_13] : memref<1x128xf32, #tpu.memory_space<vmem>>, vector<1x128xf32>
      %14 = vector.broadcast %13 : vector<1x128xf32> to vector<32x128xf32>
      %15 = arith.addf %12, %14 : vector<32x128xf32>
      %c0_14 = arith.constant 0 : index
      %c0_15 = arith.constant 0 : index
      %16 = vector.load %arg6[%c0_14, %c0_15] : memref<32x128xf32, #tpu.memory_space<vmem>>, vector<32x128xf32>
      %17 = arith.addf %15, %16 : vector<32x128xf32>
      %c0_16 = arith.constant 0 : index
      %c0_17 = arith.constant 0 : index
      %18 = vector.load %arg7[%c0_16, %c0_17] : memref<32x128xf32, #tpu.memory_space<vmem>>, vector<32x128xf32>
      tpu.vector_store %arg7[%c0_16, %c0_17], %17 {strides = array<i32>} : memref<32x128xf32, #tpu.memory_space<vmem>>, vector<32x128xf32>,
    } else {
    }
    return
  }
  func.func @transform_0(%arg0: i32, %arg1: i32, %arg2: i32) -> (i32, i32) {
    %c0_i32 = arith.constant 0 : i32
    return %arg0, %arg2 : i32, i32
  }
  func.func @transform_1(%arg0: i32, %arg1: i32, %arg2: i32) -> (i32, i32) {
    %c0_i32 = arith.constant 0 : i32
    return %arg2, %arg1 : i32, i32
  }
  func.func @transform_2(%arg0: i32, %arg1: i32, %arg2: i32) -> (i32, i32) {
    %c0_i32 = arith.constant 0 : i32
    %c0_i32_0 = arith.constant 0 : i32
    return %c0_i32, %arg1 : i32, i32
  }
  func.func @transform_3(%arg0: i32, %arg1: i32, %arg2: i32) -> (i32, i32) {
    %c0_i32 = arith.constant 0 : i32
    return %arg0, %arg1 : i32, i32
  }
  func.func @transform_4(%arg0: i32, %arg1: i32, %arg2: i32) -> (i32, i32) {
    %c0_i32 = arith.constant 0 : i32
    return %arg0, %arg1 : i32, i32
  }
}

module attributes {stable_mosaic.version = 11 : i64} {
  func.func @_ln_matmul_kernel(%arg0: i32, %arg1: i32, %arg2: memref<32x128xf32, #tpu.memory_space<vmem>>, %arg3: memref<1x128xf32, #tpu.memory_space<vmem>>, %arg4: memref<1x128xf32, #tpu.memory_space<vmem>>, %arg5: memref<128x256xf32, #tpu.memory_space<vmem>>, %arg6: memref<1x256xf32, #tpu.memory_space<vmem>>, %arg7: memref<32x256xf32, #tpu.memory_space<vmem>>, %arg8: memref<32x128xf32, #tpu.memory_space<vmem>>) attributes {dimension_semantics = [#tpu.dimension_semantics<parallel>, #tpu.dimension_semantics<arbitrary>], iteration_bounds = array<i64: 1, 2>, scalar_prefetch = 0 : i64, scratch_operands = 1 : i64, tpu.core_type = #tpu.core_type<tc>, window_params = [{transform_indices = @transform_0, window_bounds = array<i64: 32, 128>}, {pipeline_mode = #tpu.pipeline_mode<synchronous>, transform_indices = @transform_1, window_bounds = array<i64: 1, 128>}, {pipeline_mode = #tpu.pipeline_mode<synchronous>, transform_indices = @transform_2, window_bounds = array<i64: 1, 128>}, {transform_indices = @transform_3, window_bounds = array<i64: 128, 256>}, {transform_indices = @transform_4, window_bounds = array<i64: 1, 256>}, {transform_indices = @transform_5, window_bounds = array<i64: 32, 256>}]} {
    %c0_i32 = arith.constant 0 : i32
    %0 = arith.cmpi eq, %arg1, %c0_i32 : i32
    %1 = arith.extui %0 : i1 to i32
    %c0_i32_0 = arith.constant 0 : i32
    %2 = arith.cmpi ne, %1, %c0_i32_0 : i32
    scf.if %2 {
      %c0_12 = arith.constant 0 : index
      %c0_13 = arith.constant 0 : index
      %23 = vector.load %arg2[%c0_12, %c0_13] : memref<32x128xf32, #tpu.memory_space<vmem>>, vector<32x128xf32>
      %cst_14 = arith.constant dense<0.000000e+00> : vector<32xf32>
      %24 = vector.multi_reduction <add>, %23, %cst_14 [1] : vector<32x128xf32> to vector<32xf32>
      %25 = vector.shape_cast %24 : vector<32xf32> to vector<32x1xf32>
      %cst_15 = arith.constant 1.280000e+02 : f32
      %26 = vector.broadcast %cst_15 : f32 to vector<32x1xf32>
      %27 = arith.divf %25, %26 : vector<32x1xf32>
      %28 = vector.broadcast %27 : vector<32x1xf32> to vector<32x128xf32>
      %29 = arith.subf %23, %28 : vector<32x128xf32>
      %30 = arith.mulf %29, %29 : vector<32x128xf32>
      %cst_16 = arith.constant dense<0.000000e+00> : vector<32xf32>
      %31 = vector.multi_reduction <add>, %30, %cst_16 [1] : vector<32x128xf32> to vector<32xf32>
      %32 = vector.shape_cast %31 : vector<32xf32> to vector<32x1xf32>
      %cst_17 = arith.constant 1.280000e+02 : f32
      %33 = vector.broadcast %cst_17 : f32 to vector<32x1xf32>
      %34 = arith.divf %32, %33 : vector<32x1xf32>
      %cst_18 = arith.constant 9.99999974E-6 : f32
      %35 = vector.broadcast %cst_18 : f32 to vector<32x1xf32>
      %36 = arith.addf %34, %35 : vector<32x1xf32>
      %37 = math.rsqrt %36 : vector<32x1xf32>
      %38 = vector.broadcast %37 : vector<32x1xf32> to vector<32x128xf32>
      %39 = arith.mulf %29, %38 : vector<32x128xf32>
      %c0_19 = arith.constant 0 : index
      %c0_20 = arith.constant 0 : index
      %40 = vector.load %arg3[%c0_19, %c0_20] : memref<1x128xf32, #tpu.memory_space<vmem>>, vector<1x128xf32>
      %41 = vector.broadcast %40 : vector<1x128xf32> to vector<32x128xf32>
      %42 = arith.mulf %39, %41 : vector<32x128xf32>
      %c0_21 = arith.constant 0 : index
      %c0_22 = arith.constant 0 : index
      %43 = vector.load %arg4[%c0_21, %c0_22] : memref<1x128xf32, #tpu.memory_space<vmem>>, vector<1x128xf32>
      %44 = vector.broadcast %43 : vector<1x128xf32> to vector<32x128xf32>
      %45 = arith.addf %42, %44 : vector<32x128xf32>
      %c0_23 = arith.constant 0 : index
      %c0_24 = arith.constant 0 : index
      %46 = vector.load %arg8[%c0_23, %c0_24] : memref<32x128xf32, #tpu.memory_space<vmem>>, vector<32x128xf32>
      tpu.vector_store %arg8[%c0_23, %c0_24], %45 {strides = array<i32>} : memref<32x128xf32, #tpu.memory_space<vmem>>, vector<32x128xf32>,
    } else {
    }
    %c0 = arith.constant 0 : index
    %c0_1 = arith.constant 0 : index
    %3 = vector.load %arg8[%c0, %c0_1] : memref<32x128xf32, #tpu.memory_space<vmem>>, vector<32x128xf32>
    %c0_2 = arith.constant 0 : index
    %c0_3 = arith.constant 0 : index
    %4 = vector.load %arg5[%c0_2, %c0_3] : memref<128x256xf32, #tpu.memory_space<vmem>>, vector<128x256xf32>
    %cst = arith.constant dense<0.000000e+00> : vector<32x256xf32>
    %5 = tpu.matmul %3, %4, %cst {dimension_numbers = #tpu.dot_dimension_numbers<[1], [0], [0], [1], [0, 0, 1, 1], [], []>} : vector<32x128xf32>, vector<128x256xf32>, vector<32x256xf32> -> vector<32x256xf32>
    %c0_4 = arith.constant 0 : index
    %c0_5 = arith.constant 0 : index
    %6 = vector.load %arg6[%c0_4, %c0_5] : memref<1x256xf32, #tpu.memory_space<vmem>>, vector<1x256xf32>
    %7 = vector.broadcast %6 : vector<1x256xf32> to vector<32x256xf32>
    %8 = arith.addf %5, %7 : vector<32x256xf32>
    %cst_6 = arith.constant 5.000000e-01 : f32
    %9 = vector.broadcast %cst_6 : f32 to vector<32x256xf32>
    %10 = arith.mulf %9, %8 : vector<32x256xf32>
    %cst_7 = arith.constant 4.471500e-02 : f32
    %11 = vector.broadcast %cst_7 : f32 to vector<32x256xf32>
    %12 = arith.mulf %11, %8 : vector<32x256xf32>
    %13 = arith.mulf %12, %8 : vector<32x256xf32>
    %14 = arith.mulf %13, %8 : vector<32x256xf32>
    %15 = arith.addf %8, %14 : vector<32x256xf32>
    %cst_8 = arith.constant 0.797884583 : f32
    %16 = vector.broadcast %cst_8 : f32 to vector<32x256xf32>
    %17 = arith.mulf %16, %15 : vector<32x256xf32>
    %18 = math.tanh %17 : vector<32x256xf32>
    %cst_9 = arith.constant 1.000000e+00 : f32
    %19 = vector.broadcast %cst_9 : f32 to vector<32x256xf32>
    %20 = arith.addf %19, %18 : vector<32x256xf32>
    %21 = arith.mulf %10, %20 : vector<32x256xf32>
    %c0_10 = arith.constant 0 : index
    %c0_11 = arith.constant 0 : index
    %22 = vector.load %arg7[%c0_10, %c0_11] : memref<32x256xf32, #tpu.memory_space<vmem>>, vector<32x256xf32>
    tpu.vector_store %arg7[%c0_10, %c0_11], %21 {strides = array<i32>} : memref<32x256xf32, #tpu.memory_space<vmem>>, vector<32x256xf32>,
    return
  }
  func.func @transform_0(%arg0: i32, %arg1: i32) -> (i32, i32) {
    %c0_i32 = arith.constant 0 : i32
    %c0_i32_0 = arith.constant 0 : i32
    return %arg0, %c0_i32 : i32, i32
  }
  func.func @transform_1(%arg0: i32, %arg1: i32) -> (i32, i32) {
    %c0_i32 = arith.constant 0 : i32
    %c0_i32_0 = arith.constant 0 : i32
    %c0_i32_1 = arith.constant 0 : i32
    return %c0_i32, %c0_i32_0 : i32, i32
  }
  func.func @transform_2(%arg0: i32, %arg1: i32) -> (i32, i32) {
    %c0_i32 = arith.constant 0 : i32
    %c0_i32_0 = arith.constant 0 : i32
    %c0_i32_1 = arith.constant 0 : i32
    return %c0_i32, %c0_i32_0 : i32, i32
  }
  func.func @transform_3(%arg0: i32, %arg1: i32) -> (i32, i32) {
    %c0_i32 = arith.constant 0 : i32
    %c0_i32_0 = arith.constant 0 : i32
    return %c0_i32, %arg1 : i32, i32
  }
  func.func @transform_4(%arg0: i32, %arg1: i32) -> (i32, i32) {
    %c0_i32 = arith.constant 0 : i32
    %c0_i32_0 = arith.constant 0 : i32
    return %c0_i32, %arg1 : i32, i32
  }
  func.func @transform_5(%arg0: i32, %arg1: i32) -> (i32, i32) {
    %c0_i32 = arith.constant 0 : i32
    return %arg0, %arg1 : i32, i32
  }
}

module attributes {stable_mosaic.version = 11 : i64} {
  func.func @_matmul_resid_kernel(%arg0: i32, %arg1: i32, %arg2: i32, %arg3: memref<32x512xf32, #tpu.memory_space<vmem>>, %arg4: memref<512x128xf32, #tpu.memory_space<vmem>>, %arg5: memref<1x128xf32, #tpu.memory_space<vmem>>, %arg6: memref<32x128xf32, #tpu.memory_space<vmem>>, %arg7: memref<32x128xf32, #tpu.memory_space<vmem>>, %arg8: memref<32x128xf32, #tpu.memory_space<vmem>>) attributes {dimension_semantics = [#tpu.dimension_semantics<parallel>, #tpu.dimension_semantics<parallel>, #tpu.dimension_semantics<arbitrary>], iteration_bounds = array<i64: 1, 1, 1>, scalar_prefetch = 0 : i64, scratch_operands = 1 : i64, tpu.core_type = #tpu.core_type<tc>, window_params = [{transform_indices = @transform_0, window_bounds = array<i64: 32, 512>}, {transform_indices = @transform_1, window_bounds = array<i64: 512, 128>}, {transform_indices = @transform_2, window_bounds = array<i64: 1, 128>}, {transform_indices = @transform_3, window_bounds = array<i64: 32, 128>}, {transform_indices = @transform_4, window_bounds = array<i64: 32, 128>}]} {
    %c0_i32 = arith.constant 0 : i32
    %0 = arith.cmpi eq, %arg2, %c0_i32 : i32
    %1 = arith.extui %0 : i1 to i32
    %c0_i32_0 = arith.constant 0 : i32
    %2 = arith.cmpi ne, %1, %c0_i32_0 : i32
    scf.if %2 {
      %cst_10 = arith.constant 0.000000e+00 : f32
      %12 = vector.broadcast %cst_10 : f32 to vector<32x128xf32>
      %c0_11 = arith.constant 0 : index
      %c0_12 = arith.constant 0 : index
      %13 = vector.load %arg8[%c0_11, %c0_12] : memref<32x128xf32, #tpu.memory_space<vmem>>, vector<32x128xf32>
      tpu.vector_store %arg8[%c0_11, %c0_12], %12 {strides = array<i32>} : memref<32x128xf32, #tpu.memory_space<vmem>>, vector<32x128xf32>,
    } else {
    }
    %c0 = arith.constant 0 : index
    %c0_1 = arith.constant 0 : index
    %3 = vector.load %arg8[%c0, %c0_1] : memref<32x128xf32, #tpu.memory_space<vmem>>, vector<32x128xf32>
    %c0_2 = arith.constant 0 : index
    %c0_3 = arith.constant 0 : index
    %4 = vector.load %arg3[%c0_2, %c0_3] : memref<32x512xf32, #tpu.memory_space<vmem>>, vector<32x512xf32>
    %c0_4 = arith.constant 0 : index
    %c0_5 = arith.constant 0 : index
    %5 = vector.load %arg4[%c0_4, %c0_5] : memref<512x128xf32, #tpu.memory_space<vmem>>, vector<512x128xf32>
    %cst = arith.constant dense<0.000000e+00> : vector<32x128xf32>
    %6 = tpu.matmul %4, %5, %cst {dimension_numbers = #tpu.dot_dimension_numbers<[1], [0], [0], [1], [0, 0, 1, 1], [], []>} : vector<32x512xf32>, vector<512x128xf32>, vector<32x128xf32> -> vector<32x128xf32>
    %7 = arith.addf %3, %6 : vector<32x128xf32>
    %c0_6 = arith.constant 0 : index
    %c0_7 = arith.constant 0 : index
    %8 = vector.load %arg8[%c0_6, %c0_7] : memref<32x128xf32, #tpu.memory_space<vmem>>, vector<32x128xf32>
    tpu.vector_store %arg8[%c0_6, %c0_7], %7 {strides = array<i32>} : memref<32x128xf32, #tpu.memory_space<vmem>>, vector<32x128xf32>,
    %c0_i32_8 = arith.constant 0 : i32
    %9 = arith.cmpi eq, %arg2, %c0_i32_8 : i32
    %10 = arith.extui %9 : i1 to i32
    %c0_i32_9 = arith.constant 0 : i32
    %11 = arith.cmpi ne, %10, %c0_i32_9 : i32
    scf.if %11 {
      %c0_10 = arith.constant 0 : index
      %c0_11 = arith.constant 0 : index
      %12 = vector.load %arg8[%c0_10, %c0_11] : memref<32x128xf32, #tpu.memory_space<vmem>>, vector<32x128xf32>
      %c0_12 = arith.constant 0 : index
      %c0_13 = arith.constant 0 : index
      %13 = vector.load %arg5[%c0_12, %c0_13] : memref<1x128xf32, #tpu.memory_space<vmem>>, vector<1x128xf32>
      %14 = vector.broadcast %13 : vector<1x128xf32> to vector<32x128xf32>
      %15 = arith.addf %12, %14 : vector<32x128xf32>
      %c0_14 = arith.constant 0 : index
      %c0_15 = arith.constant 0 : index
      %16 = vector.load %arg6[%c0_14, %c0_15] : memref<32x128xf32, #tpu.memory_space<vmem>>, vector<32x128xf32>
      %17 = arith.addf %15, %16 : vector<32x128xf32>
      %c0_16 = arith.constant 0 : index
      %c0_17 = arith.constant 0 : index
      %18 = vector.load %arg7[%c0_16, %c0_17] : memref<32x128xf32, #tpu.memory_space<vmem>>, vector<32x128xf32>
      tpu.vector_store %arg7[%c0_16, %c0_17], %17 {strides = array<i32>} : memref<32x128xf32, #tpu.memory_space<vmem>>, vector<32x128xf32>,
    } else {
    }
    return
  }
  func.func @transform_0(%arg0: i32, %arg1: i32, %arg2: i32) -> (i32, i32) {
    %c0_i32 = arith.constant 0 : i32
    return %arg0, %arg2 : i32, i32
  }
  func.func @transform_1(%arg0: i32, %arg1: i32, %arg2: i32) -> (i32, i32) {
    %c0_i32 = arith.constant 0 : i32
    return %arg2, %arg1 : i32, i32
  }
  func.func @transform_2(%arg0: i32, %arg1: i32, %arg2: i32) -> (i32, i32) {
    %c0_i32 = arith.constant 0 : i32
    %c0_i32_0 = arith.constant 0 : i32
    return %c0_i32, %arg1 : i32, i32
  }
  func.func @transform_3(%arg0: i32, %arg1: i32, %arg2: i32) -> (i32, i32) {
    %c0_i32 = arith.constant 0 : i32
    return %arg0, %arg1 : i32, i32
  }
  func.func @transform_4(%arg0: i32, %arg1: i32, %arg2: i32) -> (i32, i32) {
    %c0_i32 = arith.constant 0 : i32
    return %arg0, %arg1 : i32, i32
  }
}

module attributes {stable_mosaic.version = 11 : i64} {
  func.func @_ln_matmul_kernel(%arg0: i32, %arg1: i32, %arg2: memref<32x128xf32, #tpu.memory_space<vmem>>, %arg3: memref<1x128xf32, #tpu.memory_space<vmem>>, %arg4: memref<1x128xf32, #tpu.memory_space<vmem>>, %arg5: memref<128x128xf32, #tpu.memory_space<vmem>>, %arg6: memref<1x128xf32, #tpu.memory_space<vmem>>, %arg7: memref<32x128xf32, #tpu.memory_space<vmem>>, %arg8: memref<32x128xf32, #tpu.memory_space<vmem>>) attributes {dimension_semantics = [#tpu.dimension_semantics<parallel>, #tpu.dimension_semantics<arbitrary>], iteration_bounds = array<i64: 1, 3>, scalar_prefetch = 0 : i64, scratch_operands = 1 : i64, tpu.core_type = #tpu.core_type<tc>, window_params = [{transform_indices = @transform_0, window_bounds = array<i64: 32, 128>}, {pipeline_mode = #tpu.pipeline_mode<synchronous>, transform_indices = @transform_1, window_bounds = array<i64: 1, 128>}, {pipeline_mode = #tpu.pipeline_mode<synchronous>, transform_indices = @transform_2, window_bounds = array<i64: 1, 128>}, {transform_indices = @transform_3, window_bounds = array<i64: 128, 128>}, {transform_indices = @transform_4, window_bounds = array<i64: 1, 128>}, {transform_indices = @transform_5, window_bounds = array<i64: 32, 128>}]} {
    %c0_i32 = arith.constant 0 : i32
    %0 = arith.cmpi eq, %arg1, %c0_i32 : i32
    %1 = arith.extui %0 : i1 to i32
    %c0_i32_0 = arith.constant 0 : i32
    %2 = arith.cmpi ne, %1, %c0_i32_0 : i32
    scf.if %2 {
      %c0_8 = arith.constant 0 : index
      %c0_9 = arith.constant 0 : index
      %10 = vector.load %arg2[%c0_8, %c0_9] : memref<32x128xf32, #tpu.memory_space<vmem>>, vector<32x128xf32>
      %cst_10 = arith.constant dense<0.000000e+00> : vector<32xf32>
      %11 = vector.multi_reduction <add>, %10, %cst_10 [1] : vector<32x128xf32> to vector<32xf32>
      %12 = vector.shape_cast %11 : vector<32xf32> to vector<32x1xf32>
      %cst_11 = arith.constant 1.280000e+02 : f32
      %13 = vector.broadcast %cst_11 : f32 to vector<32x1xf32>
      %14 = arith.divf %12, %13 : vector<32x1xf32>
      %15 = vector.broadcast %14 : vector<32x1xf32> to vector<32x128xf32>
      %16 = arith.subf %10, %15 : vector<32x128xf32>
      %17 = arith.mulf %16, %16 : vector<32x128xf32>
      %cst_12 = arith.constant dense<0.000000e+00> : vector<32xf32>
      %18 = vector.multi_reduction <add>, %17, %cst_12 [1] : vector<32x128xf32> to vector<32xf32>
      %19 = vector.shape_cast %18 : vector<32xf32> to vector<32x1xf32>
      %cst_13 = arith.constant 1.280000e+02 : f32
      %20 = vector.broadcast %cst_13 : f32 to vector<32x1xf32>
      %21 = arith.divf %19, %20 : vector<32x1xf32>
      %cst_14 = arith.constant 9.99999974E-6 : f32
      %22 = vector.broadcast %cst_14 : f32 to vector<32x1xf32>
      %23 = arith.addf %21, %22 : vector<32x1xf32>
      %24 = math.rsqrt %23 : vector<32x1xf32>
      %25 = vector.broadcast %24 : vector<32x1xf32> to vector<32x128xf32>
      %26 = arith.mulf %16, %25 : vector<32x128xf32>
      %c0_15 = arith.constant 0 : index
      %c0_16 = arith.constant 0 : index
      %27 = vector.load %arg3[%c0_15, %c0_16] : memref<1x128xf32, #tpu.memory_space<vmem>>, vector<1x128xf32>
      %28 = vector.broadcast %27 : vector<1x128xf32> to vector<32x128xf32>
      %29 = arith.mulf %26, %28 : vector<32x128xf32>
      %c0_17 = arith.constant 0 : index
      %c0_18 = arith.constant 0 : index
      %30 = vector.load %arg4[%c0_17, %c0_18] : memref<1x128xf32, #tpu.memory_space<vmem>>, vector<1x128xf32>
      %31 = vector.broadcast %30 : vector<1x128xf32> to vector<32x128xf32>
      %32 = arith.addf %29, %31 : vector<32x128xf32>
      %c0_19 = arith.constant 0 : index
      %c0_20 = arith.constant 0 : index
      %33 = vector.load %arg8[%c0_19, %c0_20] : memref<32x128xf32, #tpu.memory_space<vmem>>, vector<32x128xf32>
      tpu.vector_store %arg8[%c0_19, %c0_20], %32 {strides = array<i32>} : memref<32x128xf32, #tpu.memory_space<vmem>>, vector<32x128xf32>,
    } else {
    }
    %c0 = arith.constant 0 : index
    %c0_1 = arith.constant 0 : index
    %3 = vector.load %arg8[%c0, %c0_1] : memref<32x128xf32, #tpu.memory_space<vmem>>, vector<32x128xf32>
    %c0_2 = arith.constant 0 : index
    %c0_3 = arith.constant 0 : index
    %4 = vector.load %arg5[%c0_2, %c0_3] : memref<128x128xf32, #tpu.memory_space<vmem>>, vector<128x128xf32>
    %cst = arith.constant dense<0.000000e+00> : vector<32x128xf32>
    %5 = tpu.matmul %3, %4, %cst {dimension_numbers = #tpu.dot_dimension_numbers<[1], [0], [0], [1], [0, 0, 1, 1], [], []>} : vector<32x128xf32>, vector<128x128xf32>, vector<32x128xf32> -> vector<32x128xf32>
    %c0_4 = arith.constant 0 : index
    %c0_5 = arith.constant 0 : index
    %6 = vector.load %arg6[%c0_4, %c0_5] : memref<1x128xf32, #tpu.memory_space<vmem>>, vector<1x128xf32>
    %7 = vector.broadcast %6 : vector<1x128xf32> to vector<32x128xf32>
    %8 = arith.addf %5, %7 : vector<32x128xf32>
    %c0_6 = arith.constant 0 : index
    %c0_7 = arith.constant 0 : index
    %9 = vector.load %arg7[%c0_6, %c0_7] : memref<32x128xf32, #tpu.memory_space<vmem>>, vector<32x128xf32>
    tpu.vector_store %arg7[%c0_6, %c0_7], %8 {strides = array<i32>} : memref<32x128xf32, #tpu.memory_space<vmem>>, vector<32x128xf32>,
    return
  }
  func.func @transform_0(%arg0: i32, %arg1: i32) -> (i32, i32) {
    %c0_i32 = arith.constant 0 : i32
    %c0_i32_0 = arith.constant 0 : i32
    return %arg0, %c0_i32 : i32, i32
  }
  func.func @transform_1(%arg0: i32, %arg1: i32) -> (i32, i32) {
    %c0_i32 = arith.constant 0 : i32
    %c0_i32_0 = arith.constant 0 : i32
    %c0_i32_1 = arith.constant 0 : i32
    return %c0_i32, %c0_i32_0 : i32, i32
  }
  func.func @transform_2(%arg0: i32, %arg1: i32) -> (i32, i32) {
    %c0_i32 = arith.constant 0 : i32
    %c0_i32_0 = arith.constant 0 : i32
    %c0_i32_1 = arith.constant 0 : i32
    return %c0_i32, %c0_i32_0 : i32, i32
  }
  func.func @transform_3(%arg0: i32, %arg1: i32) -> (i32, i32) {
    %c0_i32 = arith.constant 0 : i32
    %c0_i32_0 = arith.constant 0 : i32
    return %c0_i32, %arg1 : i32, i32
  }
  func.func @transform_4(%arg0: i32, %arg1: i32) -> (i32, i32) {
    %c0_i32 = arith.constant 0 : i32
    %c0_i32_0 = arith.constant 0 : i32
    return %c0_i32, %arg1 : i32, i32
  }
  func.func @transform_5(%arg0: i32, %arg1: i32) -> (i32, i32) {
    %c0_i32 = arith.constant 0 : i32
    return %arg0, %arg1 : i32, i32
  }
}

module attributes {stable_mosaic.version = 11 : i64} {
  func.func @_ln_matmul_kernel(%arg0: i32, %arg1: i32, %arg2: memref<32x128xf32, #tpu.memory_space<vmem>>, %arg3: memref<1x128xf32, #tpu.memory_space<vmem>>, %arg4: memref<1x128xf32, #tpu.memory_space<vmem>>, %arg5: memref<128x256xf32, #tpu.memory_space<vmem>>, %arg6: memref<1x256xf32, #tpu.memory_space<vmem>>, %arg7: memref<32x256xf32, #tpu.memory_space<vmem>>, %arg8: memref<32x128xf32, #tpu.memory_space<vmem>>) attributes {dimension_semantics = [#tpu.dimension_semantics<parallel>, #tpu.dimension_semantics<arbitrary>], iteration_bounds = array<i64: 1, 1>, scalar_prefetch = 0 : i64, scratch_operands = 1 : i64, tpu.core_type = #tpu.core_type<tc>, window_params = [{transform_indices = @transform_0, window_bounds = array<i64: 32, 128>}, {pipeline_mode = #tpu.pipeline_mode<synchronous>, transform_indices = @transform_1, window_bounds = array<i64: 1, 128>}, {pipeline_mode = #tpu.pipeline_mode<synchronous>, transform_indices = @transform_2, window_bounds = array<i64: 1, 128>}, {transform_indices = @transform_3, window_bounds = array<i64: 128, 256>}, {transform_indices = @transform_4, window_bounds = array<i64: 1, 256>}, {transform_indices = @transform_5, window_bounds = array<i64: 32, 256>}]} {
    %c0_i32 = arith.constant 0 : i32
    %0 = arith.cmpi eq, %arg1, %c0_i32 : i32
    %1 = arith.extui %0 : i1 to i32
    %c0_i32_0 = arith.constant 0 : i32
    %2 = arith.cmpi ne, %1, %c0_i32_0 : i32
    scf.if %2 {
      %c0_8 = arith.constant 0 : index
      %c0_9 = arith.constant 0 : index
      %10 = vector.load %arg2[%c0_8, %c0_9] : memref<32x128xf32, #tpu.memory_space<vmem>>, vector<32x128xf32>
      %cst_10 = arith.constant dense<0.000000e+00> : vector<32xf32>
      %11 = vector.multi_reduction <add>, %10, %cst_10 [1] : vector<32x128xf32> to vector<32xf32>
      %12 = vector.shape_cast %11 : vector<32xf32> to vector<32x1xf32>
      %cst_11 = arith.constant 1.280000e+02 : f32
      %13 = vector.broadcast %cst_11 : f32 to vector<32x1xf32>
      %14 = arith.divf %12, %13 : vector<32x1xf32>
      %15 = vector.broadcast %14 : vector<32x1xf32> to vector<32x128xf32>
      %16 = arith.subf %10, %15 : vector<32x128xf32>
      %17 = arith.mulf %16, %16 : vector<32x128xf32>
      %cst_12 = arith.constant dense<0.000000e+00> : vector<32xf32>
      %18 = vector.multi_reduction <add>, %17, %cst_12 [1] : vector<32x128xf32> to vector<32xf32>
      %19 = vector.shape_cast %18 : vector<32xf32> to vector<32x1xf32>
      %cst_13 = arith.constant 1.280000e+02 : f32
      %20 = vector.broadcast %cst_13 : f32 to vector<32x1xf32>
      %21 = arith.divf %19, %20 : vector<32x1xf32>
      %cst_14 = arith.constant 9.99999974E-6 : f32
      %22 = vector.broadcast %cst_14 : f32 to vector<32x1xf32>
      %23 = arith.addf %21, %22 : vector<32x1xf32>
      %24 = math.rsqrt %23 : vector<32x1xf32>
      %25 = vector.broadcast %24 : vector<32x1xf32> to vector<32x128xf32>
      %26 = arith.mulf %16, %25 : vector<32x128xf32>
      %c0_15 = arith.constant 0 : index
      %c0_16 = arith.constant 0 : index
      %27 = vector.load %arg3[%c0_15, %c0_16] : memref<1x128xf32, #tpu.memory_space<vmem>>, vector<1x128xf32>
      %28 = vector.broadcast %27 : vector<1x128xf32> to vector<32x128xf32>
      %29 = arith.mulf %26, %28 : vector<32x128xf32>
      %c0_17 = arith.constant 0 : index
      %c0_18 = arith.constant 0 : index
      %30 = vector.load %arg4[%c0_17, %c0_18] : memref<1x128xf32, #tpu.memory_space<vmem>>, vector<1x128xf32>
      %31 = vector.broadcast %30 : vector<1x128xf32> to vector<32x128xf32>
      %32 = arith.addf %29, %31 : vector<32x128xf32>
      %c0_19 = arith.constant 0 : index
      %c0_20 = arith.constant 0 : index
      %33 = vector.load %arg8[%c0_19, %c0_20] : memref<32x128xf32, #tpu.memory_space<vmem>>, vector<32x128xf32>
      tpu.vector_store %arg8[%c0_19, %c0_20], %32 {strides = array<i32>} : memref<32x128xf32, #tpu.memory_space<vmem>>, vector<32x128xf32>,
    } else {
    }
    %c0 = arith.constant 0 : index
    %c0_1 = arith.constant 0 : index
    %3 = vector.load %arg8[%c0, %c0_1] : memref<32x128xf32, #tpu.memory_space<vmem>>, vector<32x128xf32>
    %c0_2 = arith.constant 0 : index
    %c0_3 = arith.constant 0 : index
    %4 = vector.load %arg5[%c0_2, %c0_3] : memref<128x256xf32, #tpu.memory_space<vmem>>, vector<128x256xf32>
    %cst = arith.constant dense<0.000000e+00> : vector<32x256xf32>
    %5 = tpu.matmul %3, %4, %cst {dimension_numbers = #tpu.dot_dimension_numbers<[1], [0], [0], [1], [0, 0, 1, 1], [], []>} : vector<32x128xf32>, vector<128x256xf32>, vector<32x256xf32> -> vector<32x256xf32>
    %c0_4 = arith.constant 0 : index
    %c0_5 = arith.constant 0 : index
    %6 = vector.load %arg6[%c0_4, %c0_5] : memref<1x256xf32, #tpu.memory_space<vmem>>, vector<1x256xf32>
    %7 = vector.broadcast %6 : vector<1x256xf32> to vector<32x256xf32>
    %8 = arith.addf %5, %7 : vector<32x256xf32>
    %c0_6 = arith.constant 0 : index
    %c0_7 = arith.constant 0 : index
    %9 = vector.load %arg7[%c0_6, %c0_7] : memref<32x256xf32, #tpu.memory_space<vmem>>, vector<32x256xf32>
    tpu.vector_store %arg7[%c0_6, %c0_7], %8 {strides = array<i32>} : memref<32x256xf32, #tpu.memory_space<vmem>>, vector<32x256xf32>,
    return
  }
  func.func @transform_0(%arg0: i32, %arg1: i32) -> (i32, i32) {
    %c0_i32 = arith.constant 0 : i32
    %c0_i32_0 = arith.constant 0 : i32
    return %arg0, %c0_i32 : i32, i32
  }
  func.func @transform_1(%arg0: i32, %arg1: i32) -> (i32, i32) {
    %c0_i32 = arith.constant 0 : i32
    %c0_i32_0 = arith.constant 0 : i32
    %c0_i32_1 = arith.constant 0 : i32
    return %c0_i32, %c0_i32_0 : i32, i32
  }
  func.func @transform_2(%arg0: i32, %arg1: i32) -> (i32, i32) {
    %c0_i32 = arith.constant 0 : i32
    %c0_i32_0 = arith.constant 0 : i32
    %c0_i32_1 = arith.constant 0 : i32
    return %c0_i32, %c0_i32_0 : i32, i32
  }
  func.func @transform_3(%arg0: i32, %arg1: i32) -> (i32, i32) {
    %c0_i32 = arith.constant 0 : i32
    %c0_i32_0 = arith.constant 0 : i32
    return %c0_i32, %arg1 : i32, i32
  }
  func.func @transform_4(%arg0: i32, %arg1: i32) -> (i32, i32) {
    %c0_i32 = arith.constant 0 : i32
    %c0_i32_0 = arith.constant 0 : i32
    return %c0_i32, %arg1 : i32, i32
  }
  func.func @transform_5(%arg0: i32, %arg1: i32) -> (i32, i32) {
    %c0_i32 = arith.constant 0 : i32
    return %arg0, %arg1 : i32, i32
  }
}

</mosaic_0001>

<llo_original>
// kernel: gpt_forward.11
$region0: #{gpt_forward.11}
  #allocation0 [shape = 'u32[]', space=smem, size = 0x4, offset = 0x4, fixed_abs, tag = 'smem constant byte address 0x4 - core index']
  #allocation1 [shape = 'u32[72,128]{1,0:T(1,128)}', space=vmem, size = 0x9000, scoped, tag = 'internal scratch']
  #allocation2 [shape = 'f32[32,128]{1,0:T(8,128)}', space=vmem, size = 0x4000, scoped, tag = 'scratch operand']
  %s0 = inlined_call_operand.vmem [shape: f32[32,128], index: 0, kind: input, shape index: {}]
  %s1 = inlined_call_operand.vmem [shape: f32[1,128], index: 1, kind: input, shape index: {}]
  %s2 = inlined_call_operand.vmem [shape: f32[1,128], index: 2, kind: input, shape index: {}]
  %s3 = inlined_call_operand.vmem [shape: f32[128,384], index: 3, kind: input, shape index: {}]
  %s4 = inlined_call_operand.vmem [shape: f32[1,384], index: 4, kind: input, shape index: {}]
  %s5 = inlined_call_operand.vmem [shape: f32[32,384], index: 5, kind: output, shape index: {}]
  %s6 = sld [smem:[#allocation0]]
  $region129: #{gpt_forward.11} parent=0
    _
  %s8 = ssub.s32 1, %s6
  %s9 = scalar_select 0, %s8, %s6
  $region1: #{gpt_forward.11} parent=0
    #allocation3 [shape = 'u8[131072]{0}', space=vmem, size = 0x20000, scoped, tag = 'input window, operand 3']
    #allocation4 [shape = 'u8[32768]{0}', space=vmem, size = 0x8000, scoped, tag = 'output window, operand 0']
    loop: start=0, step=1, limit=5
    $region2: #{gpt_forward.11} parent=1 // loop_pre_header
      _
    $region3: #{gpt_forward.11} parent=1 // loop_header
      %s11 = sphi 0, %s15
      %p12 = scmp.ge.s32.totalorder %s11, 5
      %s18 = sphi 0, %s30
      %s19 = sphi 0, %s26
      %s20 = sphi 0, %s18
      %s21 = sphi 0, %s19
      %s22 = sphi 0, %s20
      %s23 = sphi 0, %s21
      %s33 = sphi 0, %s35
      %s36 = sphi 0, %s33
      %s37 = sphi 0, %s36
      %s53 = sphi 0, %s37
      %s57 = sphi 0, %s57
      %s59 = sphi 0, %s57
      %s60 = sphi 0, %s59
      %s74 = sphi 0, %s60
      %s78 = sphi 0, %s78
      %s80 = sphi 0, %s78
      %s81 = sphi 0, %s80
      %s95 = sphi 0, %s81
      %s101 = sphi 0, %s103
      %s104 = sphi 0, %s101
      %s105 = sphi 0, %s104
      %s121 = sphi 0, %s105
      %s127 = sphi 0, %s129
      %s130 = sphi 0, %s127
      %s131 = sphi 0, %s130
      %s147 = sphi 0, %s131
      %s155 = sphi 0, %s157
      %s158 = sphi 0, %s155
      %s159 = sphi 0, %s158
      %s175 = sphi 0, %s159
    $region4: #{gpt_forward.11} parent=1 // loop_header_branch
      %14 = sbr.rel (%p12) target = $region8
    $region5: #{gpt_forward.11} parent=1 // loop_body
      %s16 = ssub.s32 %s11, 1
      %s17 = ssub.s32 %s11, 2
      %s24 = sadd.s32 1, %s19
      %p25 = scmp.ge.s32.totalorder %s24, 3
      %s26 = scalar_select %p25, 0, %s24
      %s27 = sadd.s32 1, %s18
      %s28 = scalar_select %p25, %s27, %s18
      %p29 = scmp.ge.s32.totalorder %s28, 1
      %s30 = scalar_select %p29, 0, %s28
      %s31 = ssub.s32 %s18, %s30
      %p32 = scmp.eq.s32.totalorder %s31, 0
      %s34 = sadd.s32 %s33, 1
      %s35 = scalar_select %p32, %s33, %s34
      %p38 = pneg %p32
      %p39 = scmp.eq.s32.totalorder %s11, 2
      %p40 = por %p38, %p39
      %p41 = scmp.ne.s32.totalorder %s33, %s36
      %p42 = scmp.eq.s32.totalorder %s11, 0
      %p43 = por %p41, %p42
      %p44 = scmp.ne.s32.totalorder %s33, %s36
      %p45 = scmp.eq.s32.totalorder %s16, 2
      %p46 = por %p44, %p45
      %p47 = scmp.ne.s32.totalorder %s36, %s37
      %p48 = scmp.eq.s32.totalorder %s16, 0
      %p49 = por %p47, %p48
      %p50 = scmp.ne.s32.totalorder %s36, %s37
      %p51 = scmp.eq.s32.totalorder %s17, 2
      %p52 = por %p50, %p51
      %p54 = scmp.ne.s32.totalorder %s37, %s53
      %p55 = scmp.eq.s32.totalorder %s17, 0
      %p56 = por %p54, %p55
      %s58 = sadd.s32 %s57, 1
      %p61 = scmp.eq.s32.totalorder %s11, 2
      %p62 = scmp.ne.s32.totalorder %s57, %s59
      %p63 = scmp.eq.s32.totalorder %s11, 0
      %p64 = por %p62, %p63
      %p65 = scmp.ne.s32.totalorder %s57, %s59
      %p66 = scmp.eq.s32.totalorder %s16, 2
      %p67 = por %p65, %p66
      %p68 = scmp.ne.s32.totalorder %s59, %s60
      %p69 = scmp.eq.s32.totalorder %s16, 0
      %p70 = por %p68, %p69
      %p71 = scmp.ne.s32.totalorder %s59, %s60
      %p72 = scmp.eq.s32.totalorder %s17, 2
      %p73 = por %p71, %p72
      %p75 = scmp.ne.s32.totalorder %s60, %s74
      %p76 = scmp.eq.s32.totalorder %s17, 0
      %p77 = por %p75, %p76
      %s79 = sadd.s32 %s78, 1
      %p82 = scmp.eq.s32.totalorder %s11, 2
      %p83 = scmp.ne.s32.totalorder %s78, %s80
      %p84 = scmp.eq.s32.totalorder %s11, 0
      %p85 = por %p83, %p84
      %p86 = scmp.ne.s32.totalorder %s78, %s80
      %p87 = scmp.eq.s32.totalorder %s16, 2
      %p88 = por %p86, %p87
      %p89 = scmp.ne.s32.totalorder %s80, %s81
      %p90 = scmp.eq.s32.totalorder %s16, 0
      %p91 = por %p89, %p90
      %p92 = scmp.ne.s32.totalorder %s80, %s81
      %p93 = scmp.eq.s32.totalorder %s17, 2
      %p94 = por %p92, %p93
      %p96 = scmp.ne.s32.totalorder %s81, %s95
      %p97 = scmp.eq.s32.totalorder %s17, 0
      %p98 = por %p96, %p97
      %s99 = ssub.s32 %s19, %s26
      %p100 = scmp.eq.s32.totalorder %s99, 0
      %s102 = sadd.s32 %s101, 1
      %s103 = scalar_select %p100, %s101, %s102
      %p106 = pneg %p100
      %p107 = scmp.eq.s32.totalorder %s11, 2
      %p108 = por %p106, %p107
      %p109 = scmp.ne.s32.totalorder %s101, %s104
      %p110 = scmp.eq.s32.totalorder %s11, 0
      %p111 = por %p109, %p110
      %p112 = scmp.ne.s32.totalorder %s101, %s104
      %p113 = scmp.eq.s32.totalorder %s16, 2
      %p114 = por %p112, %p113
      %p115 = scmp.ne.s32.totalorder %s104, %s105
      %p116 = scmp.eq.s32.totalorder %s16, 0
      %p117 = por %p115, %p116
      %p118 = scmp.ne.s32.totalorder %s104, %s105
      %p119 = scmp.eq.s32.totalorder %s17, 2
      %p120 = por %p118, %p119
      %p122 = scmp.ne.s32.totalorder %s105, %s121
      %p123 = scmp.eq.s32.totalorder %s17, 0
      %p124 = por %p122, %p123
      %s125 = ssub.s32 %s19, %s26
      %p126 = scmp.eq.s32.totalorder %s125, 0
      %s128 = sadd.s32 %s127, 1
      %s129 = scalar_select %p126, %s127, %s128
      %p132 = pneg %p126
      %p133 = scmp.eq.s32.totalorder %s11, 2
      %p134 = por %p132, %p133
      %p135 = scmp.ne.s32.totalorder %s127, %s130
      %p136 = scmp.eq.s32.totalorder %s11, 0
      %p137 = por %p135, %p136
      %p138 = scmp.ne.s32.totalorder %s127, %s130
      %p139 = scmp.eq.s32.totalorder %s16, 2
      %p140 = por %p138, %p139
      %p141 = scmp.ne.s32.totalorder %s130, %s131
      %p142 = scmp.eq.s32.totalorder %s16, 0
      %p143 = por %p141, %p142
      %p144 = scmp.ne.s32.totalorder %s130, %s131
      %p145 = scmp.eq.s32.totalorder %s17, 2
      %p146 = por %p144, %p145
      %p148 = scmp.ne.s32.totalorder %s131, %s147
      %p149 = scmp.eq.s32.totalorder %s17, 0
      %p150 = por %p148, %p149
      %s151 = ssub.s32 %s18, %s30
      %s152 = ssub.s32 %s19, %s26
      %s153 = sor.u32 %s151, %s152
      %p154 = scmp.eq.s32.totalorder %s153, 0
      %s156 = sadd.s32 %s155, 1
      %s157 = scalar_select %p154, %s155, %s156
      %p160 = pneg %p154
      %p161 = scmp.eq.s32.totalorder %s11, 2
      %p162 = por %p160, %p161
      %p163 = scmp.ne.s32.totalorder %s155, %s158
      %p164 = scmp.eq.s32.totalorder %s11, 0
      %p165 = por %p163, %p164
      %p166 = scmp.ne.s32.totalorder %s155, %s158
      %p167 = scmp.eq.s32.totalorder %s16, 2
      %p168 = por %p166, %p167
      %p169 = scmp.ne.s32.totalorder %s158, %s159
      %p170 = scmp.eq.s32.totalorder %s16, 0
      %p171 = por %p169, %p170
      %p172 = scmp.ne.s32.totalorder %s158, %s159
      %p173 = scmp.eq.s32.totalorder %s17, 2
      %p174 = por %p172, %p173
      %p176 = scmp.ne.s32.totalorder %s159, %s175
      %p177 = scmp.eq.s32.totalorder %s17, 0
      %p178 = por %p176, %p177
      %p179 = scmp.le.s32.totalorder 1, %s11
      %p180 = scmp.lt.s32.totalorder %s11, 4
      %p181 = pnand %p179, %p180
      %p182 = pneg %p181
      // Predicated region
      $region9: #{gpt_forward.11} parent=5 // pred_check
        _
      $region10: #{gpt_forward.11} parent=5 // pred_check_branch
        %184 = sbr.rel (%p181) target = $region12
      $region11: #{gpt_forward.11} parent=5 // pred_region
        %s185 = ssub.s32 %s11, 1
        // Predicated region
        $region13: #{gpt_forward.11} parent=11 // pred_check
          %p186 = pneg %p49
        $region14: #{gpt_forward.11} parent=11 // pred_check_branch
          %188 = sbr.rel (%p186) target = $region16
        $region15: #{gpt_forward.11} parent=11 // pred_region
          %s189 = smul.u32 4, %s20
          %p190 = scmp.lt.s32.totalorder %s189, 3
          %s191 = scalar_select %p190, %s189, 3
          %s192 = smul.addr %s191, 8
          %s193 = scalar_lea.vmem %s0, %s192
          %s194 = smul.u32 4, %s20
        $region16: #{gpt_forward.11} parent=11 // pred_fallthru
          _
        // Predicated region
        $region17: #{gpt_forward.11} parent=11 // pred_check
          %p195 = pneg %p70
        $region18: #{gpt_forward.11} parent=11 // pred_check_branch
          %197 = sbr.rel (%p195) target = $region20
        $region19: #{gpt_forward.11} parent=11 // pred_region
          _
        $region20: #{gpt_forward.11} parent=11 // pred_fallthru
          _
        // Predicated region
        $region21: #{gpt_forward.11} parent=11 // pred_check
          %p198 = pneg %p91
        $region22: #{gpt_forward.11} parent=11 // pred_check_branch
          %200 = sbr.rel (%p198) target = $region24
        $region23: #{gpt_forward.11} parent=11 // pred_region
          _
        $region24: #{gpt_forward.11} parent=11 // pred_fallthru
          _
      $region12: #{gpt_forward.11} parent=5 // pred_fallthru
        _
      %p201 = scmp.lt.s32.totalorder %s11, 3
      // Predicated region
      $region25: #{gpt_forward.11} parent=5 // pred_check
        %p202 = pneg %p201
      $region26: #{gpt_forward.11} parent=5 // pred_check_branch
        %204 = sbr.rel (%p202) target = $region28
      $region27: #{gpt_forward.11} parent=5 // pred_region
        // Predicated region
        $region29: #{gpt_forward.11} parent=27 // pred_check
          %p205 = pneg %p111
        $region30: #{gpt_forward.11} parent=27 // pred_check_branch
          %207 = sbr.rel (%p205) target = $region32
        $region31: #{gpt_forward.11} parent=27 // pred_region
          %s208 = sand.u32 %s101, 1
          %s209 = sand.u32 %s101, 1
          %s210 = smul.addr %s209, 128
          %s211 = scalar_lea.vmem [#allocation3], %s210
          %s212 = smul.addr %s19, 8
          %s213 = scalar_lea.vmem %s3, %s212
          // Predicated region
          $region33: #{gpt_forward.11} parent=31 // pred_check
            _
          $region34: #{gpt_forward.11} parent=31 // pred_check_branch
            %215 = sbr.rel (0) target = $region36
          $region35: #{gpt_forward.11} parent=31 // pred_region
            // Predicated region
            $region37: #{gpt_forward.11} parent=35 // pred_check
              _
            $region38: #{gpt_forward.11} parent=35 // pred_check_branch
              %217 = sbr.rel (0) target = $region40
            $region39: #{gpt_forward.11} parent=35 // pred_region
              // Predicated region
              $region52: #{gpt_forward.11} parent=39 // pred_check
                _
              $region53: #{gpt_forward.11} parent=39 // pred_check_branch
                %263 = sbr.rel (0) target = $region55
              $region54: #{gpt_forward.11} parent=39 // pred_region
                loop: start=0, step=1, limit=1
                $region56: #{gpt_forward.11} parent=54 // loop_pre_header
                  _
                $region57: #{gpt_forward.11} parent=54 // loop_header
                  %s265 = sphi 0, %s269
                  %p266 = scmp.ge.s32.totalorder %s265, 1
                  %s270 = sphi %s213, %s213
                  %s271 = sphi %s211, %s211
                $region58: #{gpt_forward.11} parent=54 // loop_header_branch
                  %268 = sbr.rel (%p266) target = $region62
                $region59: #{gpt_forward.11} parent=54 // loop_body
                  %v272 = vld [vmem:[%s270] sm:$0xff]
                  %273 = vst [vmem:[%s271] sm:$0xff] %v272
                  %v274 = vld [vmem:[%s270 + $0x18] sm:$0xff]
                  %275 = vst [vmem:[%s271 + $0x8] sm:$0xff] %v274
                  %v276 = vld [vmem:[%s270 + $0x30] sm:$0xff]
                  %277 = vst [vmem:[%s271 + $0x10] sm:$0xff] %v276
                  %v278 = vld [vmem:[%s270 + $0x48] sm:$0xff]
                  %279 = vst [vmem:[%s271 + $0x18] sm:$0xff] %v278
                  %v280 = vld [vmem:[%s270 + $0x60] sm:$0xff]
                  %281 = vst [vmem:[%s271 + $0x20] sm:$0xff] %v280
                  %v282 = vld [vmem:[%s270 + $0x78] sm:$0xff]
                  %283 = vst [vmem:[%s271 + $0x28] sm:$0xff] %v282
                  %v284 = vld [vmem:[%s270 + $0x90] sm:$0xff]
                  %285 = vst [vmem:[%s271 + $0x30] sm:$0xff] %v284
                  %v286 = vld [vmem:[%s270 + $0xa8] sm:$0xff]
                  %287 = vst [vmem:[%s271 + $0x38] sm:$0xff] %v286
                  %v288 = vld [vmem:[%s270 + $0xc0] sm:$0xff]
                  %289 = vst [vmem:[%s271 + $0x40] sm:$0xff] %v288
                  %v290 = vld [vmem:[%s270 + $0xd8] sm:$0xff]
                  %291 = vst [vmem:[%s271 + $0x48] sm:$0xff] %v290
                  %v292 = vld [vmem:[%s270 + $0xf0] sm:$0xff]
                  %293 = vst [vmem:[%s271 + $0x50] sm:$0xff] %v292
                  %v294 = vld [vmem:[%s270 + $0x108] sm:$0xff]
                  %295 = vst [vmem:[%s271 + $0x58] sm:$0xff] %v294
                  %v296 = vld [vmem:[%s270 + $0x120] sm:$0xff]
                  %297 = vst [vmem:[%s271 + $0x60] sm:$0xff] %v296
                  %v298 = vld [vmem:[%s270 + $0x138] sm:$0xff]
                  %299 = vst [vmem:[%s271 + $0x68] sm:$0xff] %v298
                  %v300 = vld [vmem:[%s270 + $0x150] sm:$0xff]
                  %301 = vst [vmem:[%s271 + $0x70] sm:$0xff] %v300
                  %v302 = vld [vmem:[%s270 + $0x168] sm:$0xff]
                  %303 = vst [vmem:[%s271 + $0x78] sm:$0xff] %v302
                $region60: #{gpt_forward.11} parent=54 // loop_footer
                  %s269 = sadd.s32 1, %s265
                $region61: #{gpt_forward.11} parent=54 // loop_footer_branch
                  %264 = sbr.rel target = $region57
                $region62: #{gpt_forward.11} parent=54 // loop_exit
                  _
              $region55: #{gpt_forward.11} parent=39 // pred_fallthru
                _
              // Predicated region
              $region63: #{gpt_forward.11} parent=39 // pred_check
                _
              $region64: #{gpt_forward.11} parent=39 // pred_check_branch
                %305 = sbr.rel target = $region66
              $region65: #{gpt_forward.11} parent=39 // pred_region
                _
              $region66: #{gpt_forward.11} parent=39 // pred_fallthru
                _
            $region40: #{gpt_forward.11} parent=35 // pred_fallthru
              _
            // Predicated region
            $region41: #{gpt_forward.11} parent=35 // pred_check
              _
            $region42: #{gpt_forward.11} parent=35 // pred_check_branch
              %219 = sbr.rel target = $region44
            $region43: #{gpt_forward.11} parent=35 // pred_region
              %s221 = ssub.s32 256, 1
              loop: start=0, step=1, limit=1
              $region45: #{gpt_forward.11} parent=43 // loop_pre_header
                _
              $region46: #{gpt_forward.11} parent=43 // loop_header
                %s223 = sphi 0, %s227
                %p224 = scmp.ge.s32.totalorder %s223, 1
                %s228 = sphi %s213, %s213
                %s229 = sphi %s211, %s211
              $region47: #{gpt_forward.11} parent=43 // loop_header_branch
                %226 = sbr.rel (%p224) target = $region51
              $region48: #{gpt_forward.11} parent=43 // loop_body
                %v230 = vld [vmem:[%s228] sm:%s221]
                %231 = vst [vmem:[%s229] sm:%s221] %v230
                %v232 = vld [vmem:[%s228 + $0x18] sm:%s221]
                %233 = vst [vmem:[%s229 + $0x8] sm:%s221] %v232
                %v234 = vld [vmem:[%s228 + $0x30] sm:%s221]
                %235 = vst [vmem:[%s229 + $0x10] sm:%s221] %v234
                %v236 = vld [vmem:[%s228 + $0x48] sm:%s221]
                %237 = vst [vmem:[%s229 + $0x18] sm:%s221] %v236
                %v238 = vld [vmem:[%s228 + $0x60] sm:%s221]
                %239 = vst [vmem:[%s229 + $0x20] sm:%s221] %v238
                %v240 = vld [vmem:[%s228 + $0x78] sm:%s221]
                %241 = vst [vmem:[%s229 + $0x28] sm:%s221] %v240
                %v242 = vld [vmem:[%s228 + $0x90] sm:%s221]
                %243 = vst [vmem:[%s229 + $0x30] sm:%s221] %v242
                %v244 = vld [vmem:[%s228 + $0xa8] sm:%s221]
                %245 = vst [vmem:[%s229 + $0x38] sm:%s221] %v244
                %v246 = vld [vmem:[%s228 + $0xc0] sm:%s221]
                %247 = vst [vmem:[%s229 + $0x40] sm:%s221] %v246
                %v248 = vld [vmem:[%s228 + $0xd8] sm:%s221]
                %249 = vst [vmem:[%s229 + $0x48] sm:%s221] %v248
                %v250 = vld [vmem:[%s228 + $0xf0] sm:%s221]
                %251 = vst [vmem:[%s229 + $0x50] sm:%s221] %v250
                %v252 = vld [vmem:[%s228 + $0x108] sm:%s221]
                %253 = vst [vmem:[%s229 + $0x58] sm:%s221] %v252
                %v254 = vld [vmem:[%s228 + $0x120] sm:%s221]
                %255 = vst [vmem:[%s229 + $0x60] sm:%s221] %v254
                %v256 = vld [vmem:[%s228 + $0x138] sm:%s221]
                %257 = vst [vmem:[%s229 + $0x68] sm:%s221] %v256
                %v258 = vld [vmem:[%s228 + $0x150] sm:%s221]
                %259 = vst [vmem:[%s229 + $0x70] sm:%s221] %v258
                %v260 = vld [vmem:[%s228 + $0x168] sm:%s221]
                %261 = vst [vmem:[%s229 + $0x78] sm:%s221] %v260
              $region49: #{gpt_forward.11} parent=43 // loop_footer
                %s227 = sadd.s32 1, %s223
              $region50: #{gpt_forward.11} parent=43 // loop_footer_branch
                %222 = sbr.rel target = $region46
              $region51: #{gpt_forward.11} parent=43 // loop_exit
                _
            $region44: #{gpt_forward.11} parent=35 // pred_fallthru
              _
          $region36: #{gpt_forward.11} parent=31 // pred_fallthru
            _
          %306 = vnop
        $region32: #{gpt_forward.11} parent=27 // pred_fallthru
          _
        // Predicated region
        $region67: #{gpt_forward.11} parent=27 // pred_check
          %p307 = pneg %p137
        $region68: #{gpt_forward.11} parent=27 // pred_check_branch
          %309 = sbr.rel (%p307) target = $region70
        $region69: #{gpt_forward.11} parent=27 // pred_region
          %p310 = scmp.lt.s32.totalorder %s19, 2
          %s311 = scalar_select %p310, %s19, 2
          %s312 = scalar_lea.vmem %s4, %s311
        $region70: #{gpt_forward.11} parent=27 // pred_fallthru
          _
      $region28: #{gpt_forward.11} parent=5 // pred_fallthru
        _
      %p313 = scmp.le.s32.totalorder 1, %s11
      %p314 = scmp.lt.s32.totalorder %s11, 4
      %p315 = pnand %p313, %p314
      %p316 = pneg %p315
      // Predicated region
      $region71: #{gpt_forward.11} parent=5 // pred_check
        _
      $region72: #{gpt_forward.11} parent=5 // pred_check_branch
        %318 = sbr.rel (%p315) target = $region74
      $region73: #{gpt_forward.11} parent=5 // pred_region
        %s319 = ssub.s32 %s11, 1
        %s320 = sand.u32 %s104, 1
        %s321 = sand.u32 %s104, 1
        %s322 = smul.addr %s321, 128
        %s323 = scalar_lea.vmem [#allocation3], %s322
        // Predicated region
        $region75: #{gpt_forward.11} parent=73 // pred_check
          %p324 = pneg %p117
        $region76: #{gpt_forward.11} parent=73 // pred_check_branch
          %326 = sbr.rel (%p324) target = $region78
        $region77: #{gpt_forward.11} parent=73 // pred_region
          _
        $region78: #{gpt_forward.11} parent=73 // pred_fallthru
          _
        %s327 = smul.u32 4, %s20
        %p328 = scmp.lt.s32.totalorder %s327, 3
        %s329 = scalar_select %p328, %s327, 3
        %s330 = smul.addr %s329, 8
        %s331 = scalar_lea.vmem %s0, %s330
        %p332 = pneg %p49
        %p333 = pneg %p46
        %p334 = pneg %p70
        %p335 = pneg %p67
        %p336 = pneg %p91
        %p337 = pneg %p88
        %s338 = sand.u32 %s104, 1
        %s339 = sand.u32 %s104, 1
        %s340 = smul.addr %s339, 128
        %s341 = scalar_lea.vmem [#allocation3], %s340
        %p342 = pneg %p117
        %p343 = pneg %p114
        %p344 = scmp.lt.s32.totalorder %s21, 2
        %s345 = scalar_select %p344, %s21, 2
        %s346 = scalar_lea.vmem %s4, %s345
        %p347 = pneg %p143
        %p348 = pneg %p140
        %p349 = pneg %p171
        %p350 = pneg %p168
        %s351 = sand.u32 %s158, 1
        %s352 = sand.u32 %s158, 1
        %s353 = smul.addr %s352, 32
        %s354 = scalar_lea.vmem [#allocation4], %s353
        %s355 = smul.u32 4, %s20
        %p356 = scmp.lt.s32.totalorder %s355, 3
        %s357 = scalar_select %p356, %s355, 3
        %s358 = smul.addr %s357, 8
        %s359 = scalar_lea.vmem %s0, %s358
        %s360 = smul.u32 4, %s20
        %p361 = scmp.lt.s32.totalorder %s21, 2
        %s362 = scalar_select %p361, %s21, 2
        %s363 = scalar_lea.vmem %s4, %s362
        %s364 = smul.u32 4, %s20
        %p365 = scmp.eq.s32.totalorder %s21, 0
        // Predicated region
        $region79: #{gpt_forward.11} parent=73 // pred_check
          %p366 = pneg %p365
        $region80: #{gpt_forward.11} parent=73 // pred_check_branch
          %368 = sbr.rel (%p366) target = $region82
        $region81: #{gpt_forward.11} parent=73 // pred_region
          %v369 = vld [vmem:[%s359] sm:$0xff]
          %v370 = vld [vmem:[%s359 + $0x8] sm:$0xff]
          %v371 = vld [vmem:[%s359 + $0x10] sm:$0xff]
          %v372 = vld [vmem:[%s359 + $0x18] sm:$0xff]
          %373 = vadd.xlane.f32.xlu0 %v369
          %v374 = vpop.xlane.xlu0 %373
          %375 = vadd.xlane.f32.xlu0 %v370
          %v376 = vpop.xlane.xlu0 %375
          %377 = vadd.xlane.f32.xlu0 %v371
          %v378 = vpop.xlane.xlu0 %377
          %379 = vadd.xlane.f32.xlu0 %v372
          %v380 = vpop.xlane.xlu0 %379
          %v381 = vrcp.pop 128.0
          %v382 = vmul.f32 128.0, %v381
          %v383 = vsub.f32 1.0, %v382
          %v384 = vmul.f32 %v381, %v383
          %v385 = vadd.f32 %v381, %v384
          %vm386 = vweird.f32 %v381
          %v387 = vsel %vm386, %v381, %v385
          %v388 = vmul.f32 %v374, %v387
          %v389 = vmul.f32 %v376, %v387
          %v390 = vmul.f32 %v378, %v387
          %v391 = vmul.f32 %v380, %v387
          %v392 = vsub.f32 %v369, %v388
          %v393 = vsub.f32 %v370, %v389
          %v394 = vsub.f32 %v371, %v390
          %v395 = vsub.f32 %v372, %v391
          %v396 = vmul.f32 %v392, %v392
          %v397 = vmul.f32 %v393, %v393
          %v398 = vmul.f32 %v394, %v394
          %v399 = vmul.f32 %v395, %v395
          %400 = vadd.xlane.f32.xlu0 %v396
          %v401 = vpop.xlane.xlu0 %400
          %402 = vadd.xlane.f32.xlu0 %v397
          %v403 = vpop.xlane.xlu0 %402
          %404 = vadd.xlane.f32.xlu0 %v398
          %v405 = vpop.xlane.xlu0 %404
          %406 = vadd.xlane.f32.xlu0 %v399
          %v407 = vpop.xlane.xlu0 %406
          %v408 = vmul.f32 %v401, %v387
          %v409 = vmul.f32 %v403, %v387
          %v410 = vmul.f32 %v405, %v387
          %v411 = vmul.f32 %v407, %v387
          %v412 = vadd.f32 %v408, 1e-05
          %v413 = vadd.f32 %v409, 1e-05
          %v414 = vadd.f32 %v410, 1e-05
          %v415 = vadd.f32 %v411, 1e-05
          %v416 = vrsqrt.pop %v412
          %v417 = vmul.f32 %v416, %v412
          %v418 = vmul.f32 %v417, %v416
          %v419 = vmul.f32 0.5, %v418
          %v420 = vsub.f32 1.5, %v419
          %v421 = vmul.f32 %v416, %v420
          %vm422 = vweird.f32 %v412
          %vm423 = vweird.f32 %v416
          %vm424 = vmor %vm422, %vm423
          %v425 = vsel %vm424, %v416, %v421
          %v426 = vrsqrt.pop %v413
          %v427 = vmul.f32 %v426, %v413
          %v428 = vmul.f32 %v427, %v426
          %v429 = vmul.f32 0.5, %v428
          %v430 = vsub.f32 1.5, %v429
          %v431 = vmul.f32 %v426, %v430
          %vm432 = vweird.f32 %v413
          %vm433 = vweird.f32 %v426
          %vm434 = vmor %vm432, %vm433
          %v435 = vsel %vm434, %v426, %v431
          %v436 = vrsqrt.pop %v414
          %v437 = vmul.f32 %v436, %v414
          %v438 = vmul.f32 %v437, %v436
          %v439 = vmul.f32 0.5, %v438
          %v440 = vsub.f32 1.5, %v439
          %v441 = vmul.f32 %v436, %v440
          %vm442 = vweird.f32 %v414
          %vm443 = vweird.f32 %v436
          %vm444 = vmor %vm442, %vm443
          %v445 = vsel %vm444, %v436, %v441
          %v446 = vrsqrt.pop %v415
          %v447 = vmul.f32 %v446, %v415
          %v448 = vmul.f32 %v447, %v446
          %v449 = vmul.f32 0.5, %v448
          %v450 = vsub.f32 1.5, %v449
          %v451 = vmul.f32 %v446, %v450
          %vm452 = vweird.f32 %v415
          %vm453 = vweird.f32 %v446
          %vm454 = vmor %vm452, %vm453
          %v455 = vsel %vm454, %v446, %v451
          %v456 = vmul.f32 %v392, %v425
          %v457 = vmul.f32 %v393, %v435
          %v458 = vmul.f32 %v394, %v445
          %v459 = vmul.f32 %v395, %v455
          %v460 = vld [vmem:[%s1] sm:$0x1]
          %v462 = vperm.slane %v460, 0
          %v464 = vmul.f32 %v456, %v462
          %v465 = vmul.f32 %v457, %v462
          %v466 = vmul.f32 %v458, %v462
          %v467 = vmul.f32 %v459, %v462
          %v468 = vld [vmem:[%s2] sm:$0x1]
          %v470 = vperm.slane %v468, 0
          %v472 = vadd.f32 %v464, %v470
          %v473 = vadd.f32 %v465, %v470
          %v474 = vadd.f32 %v466, %v470
          %v475 = vadd.f32 %v467, %v470
          %476 = vst [vmem:[#allocation2] sm:$0xff] %v472
          %477 = vst [vmem:[#allocation2 + $0x8] sm:$0xff] %v473
          %478 = vst [vmem:[#allocation2 + $0x10] sm:$0xff] %v474
          %479 = vst [vmem:[#allocation2 + $0x18] sm:$0xff] %v475
        $region82: #{gpt_forward.11} parent=73 // pred_fallthru
          _
        %v480 = vld [vmem:[#allocation2] sm:$0xff]
        %v481 = vld [vmem:[#allocation2 + $0x8] sm:$0xff]
        %v482 = vld [vmem:[#allocation2 + $0x10] sm:$0xff]
        %v483 = vld [vmem:[#allocation2 + $0x18] sm:$0xff]
        %v484 = vld [vmem:[%s323] sm:$0xff]
        %v485 = vld [vmem:[%s323 + $0x8] sm:$0xff]
        %v486 = vld [vmem:[%s323 + $0x10] sm:$0xff]
        %v487 = vld [vmem:[%s323 + $0x18] sm:$0xff]
        %v488 = vld [vmem:[%s323 + $0x20] sm:$0xff]
        %v489 = vld [vmem:[%s323 + $0x28] sm:$0xff]
        %v490 = vld [vmem:[%s323 + $0x30] sm:$0xff]
        %v491 = vld [vmem:[%s323 + $0x38] sm:$0xff]
        %v492 = vld [vmem:[%s323 + $0x40] sm:$0xff]
        %v493 = vld [vmem:[%s323 + $0x48] sm:$0xff]
        %v494 = vld [vmem:[%s323 + $0x50] sm:$0xff]
        %v495 = vld [vmem:[%s323 + $0x58] sm:$0xff]
        %v496 = vld [vmem:[%s323 + $0x60] sm:$0xff]
        %v497 = vld [vmem:[%s323 + $0x68] sm:$0xff]
        %v498 = vld [vmem:[%s323 + $0x70] sm:$0xff]
        %v499 = vld [vmem:[%s323 + $0x78] sm:$0xff]
        %v500 = vld [vmem:[%s363] sm:$0x1]
        %v502 = vperm.slane %v500, 0
        %504 = vmatpush.msra.mxu0 %v499
        %505 = vmatpush.msra.mxu0 %v498
        %506 = vmatpush.msra.mxu0 %v497
        %507 = vmatpush.msra.mxu0 %v496
        %508 = vmatpush.msra.mxu0 %v495
        %509 = vmatpush.msra.mxu0 %v494
        %510 = vmatpush.msra.mxu0 %v493
        %511 = vmatpush.msra.mxu0 %v492
        %512 = vmatpush.msra.mxu0 %v491
        %513 = vmatpush.msra.mxu0 %v490
        %514 = vmatpush.msra.mxu0 %v489
        %515 = vmatpush.msra.mxu0 %v488
        %516 = vmatpush.msra.mxu0 %v487
        %517 = vmatpush.msra.mxu0 %v486
        %518 = vmatpush.msra.mxu0 %v485
        %519 = vmatpush.msra.mxu0 %v484
        %520 = vmatmul.f32.gmra.mxu0 %v480
        %v521 = vpop.f32.mrf.mxu0
        %v522 = vadd.f32 %v502, %v521
        %523 = vmatmul.f32.gmra.mxu0 %v481
        %v524 = vpop.f32.mrf.mxu0
        %v525 = vadd.f32 %v502, %v524
        %526 = vmatmul.f32.gmra.mxu0 %v482
        %v527 = vpop.f32.mrf.mxu0
        %v528 = vadd.f32 %v502, %v527
        %529 = vmatmul.f32.gmra.mxu0 %v483
        %v530 = vpop.f32.mrf.mxu0
        %v531 = vadd.f32 %v502, %v530
        %532 = vdwg.mxu0
        %533 = vst [vmem:[%s354] sm:$0xff] %v522
        %534 = vst [vmem:[%s354 + $0x8] sm:$0xff] %v525
        %535 = vst [vmem:[%s354 + $0x10] sm:$0xff] %v528
        %536 = vst [vmem:[%s354 + $0x18] sm:$0xff] %v531
        %s537 = sand.u32 %s158, 1
        %s538 = sand.u32 %s158, 1
        %s539 = smul.addr %s538, 32
        %s540 = scalar_lea.vmem [#allocation4], %s539
        // Predicated region
        $region83: #{gpt_forward.11} parent=73 // pred_check
          %p541 = pneg %p168
        $region84: #{gpt_forward.11} parent=73 // pred_check_branch
          %543 = sbr.rel (%p541) target = $region86
        $region85: #{gpt_forward.11} parent=73 // pred_region
          %s544 = smul.u32 4, %s20
          %s545 = smul.addr %s544, 3
          %s546 = sadd.s32 %s21, %s545
          %s547 = smul.addr %s546, 8
          %s548 = scalar_lea.vmem %s5, %s547
          // Predicated region
          $region87: #{gpt_forward.11} parent=85 // pred_check
            _
          $region88: #{gpt_forward.11} parent=85 // pred_check_branch
            %550 = sbr.rel (0) target = $region90
          $region89: #{gpt_forward.11} parent=85 // pred_region
            // Predicated region
            $region91: #{gpt_forward.11} parent=89 // pred_check
              _
            $region92: #{gpt_forward.11} parent=89 // pred_check_branch
              %552 = sbr.rel (0) target = $region94
            $region93: #{gpt_forward.11} parent=89 // pred_region
              // Predicated region
              $region106: #{gpt_forward.11} parent=93 // pred_check
                _
              $region107: #{gpt_forward.11} parent=93 // pred_check_branch
                %574 = sbr.rel (0) target = $region109
              $region108: #{gpt_forward.11} parent=93 // pred_region
                loop: start=0, step=1, limit=1
                $region110: #{gpt_forward.11} parent=108 // loop_pre_header
                  _
                $region111: #{gpt_forward.11} parent=108 // loop_header
                  %s576 = sphi 0, %s580
                  %p577 = scmp.ge.s32.totalorder %s576, 1
                  %s581 = sphi %s540, %s540
                  %s582 = sphi %s548, %s548
                $region112: #{gpt_forward.11} parent=108 // loop_header_branch
                  %579 = sbr.rel (%p577) target = $region116
                $region113: #{gpt_forward.11} parent=108 // loop_body
                  %v583 = vld [vmem:[%s581] sm:$0xff]
                  %584 = vst [vmem:[%s582] sm:$0xff] %v583
                  %v585 = vld [vmem:[%s581 + $0x8] sm:$0xff]
                  %586 = vst [vmem:[%s582 + $0x18] sm:$0xff] %v585
                  %v587 = vld [vmem:[%s581 + $0x10] sm:$0xff]
                  %588 = vst [vmem:[%s582 + $0x30] sm:$0xff] %v587
                  %v589 = vld [vmem:[%s581 + $0x18] sm:$0xff]
                  %590 = vst [vmem:[%s582 + $0x48] sm:$0xff] %v589
                $region114: #{gpt_forward.11} parent=108 // loop_footer
                  %s580 = sadd.s32 1, %s576
                $region115: #{gpt_forward.11} parent=108 // loop_footer_branch
                  %575 = sbr.rel target = $region111
                $region116: #{gpt_forward.11} parent=108 // loop_exit
                  _
              $region109: #{gpt_forward.11} parent=93 // pred_fallthru
                _
              // Predicated region
              $region117: #{gpt_forward.11} parent=93 // pred_check
                _
              $region118: #{gpt_forward.11} parent=93 // pred_check_branch
                %592 = sbr.rel target = $region120
              $region119: #{gpt_forward.11} parent=93 // pred_region
                _
              $region120: #{gpt_forward.11} parent=93 // pred_fallthru
                _
            $region94: #{gpt_forward.11} parent=89 // pred_fallthru
              _
            // Predicated region
            $region95: #{gpt_forward.11} parent=89 // pred_check
              _
            $region96: #{gpt_forward.11} parent=89 // pred_check_branch
              %554 = sbr.rel target = $region98
            $region97: #{gpt_forward.11} parent=89 // pred_region
              %s556 = ssub.s32 256, 1
              loop: start=0, step=1, limit=1
              $region99: #{gpt_forward.11} parent=97 // loop_pre_header
                _
              $region100: #{gpt_forward.11} parent=97 // loop_header
                %s558 = sphi 0, %s562
                %p559 = scmp.ge.s32.totalorder %s558, 1
                %s563 = sphi %s540, %s540
                %s564 = sphi %s548, %s548
              $region101: #{gpt_forward.11} parent=97 // loop_header_branch
                %561 = sbr.rel (%p559) target = $region105
              $region102: #{gpt_forward.11} parent=97 // loop_body
                %v565 = vld [vmem:[%s563] sm:%s556]
                %566 = vst [vmem:[%s564] sm:%s556] %v565
                %v567 = vld [vmem:[%s563 + $0x8] sm:%s556]
                %568 = vst [vmem:[%s564 + $0x18] sm:%s556] %v567
                %v569 = vld [vmem:[%s563 + $0x10] sm:%s556]
                %570 = vst [vmem:[%s564 + $0x30] sm:%s556] %v569
                %v571 = vld [vmem:[%s563 + $0x18] sm:%s556]
                %572 = vst [vmem:[%s564 + $0x48] sm:%s556] %v571
              $region103: #{gpt_forward.11} parent=97 // loop_footer
                %s562 = sadd.s32 1, %s558
              $region104: #{gpt_forward.11} parent=97 // loop_footer_branch
                %557 = sbr.rel target = $region100
              $region105: #{gpt_forward.11} parent=97 // loop_exit
                _
            $region98: #{gpt_forward.11} parent=89 // pred_fallthru
              _
          $region90: #{gpt_forward.11} parent=85 // pred_fallthru
            _
          %593 = vnop
        $region86: #{gpt_forward.11} parent=73 // pred_fallthru
          _
      $region74: #{gpt_forward.11} parent=5 // pred_fallthru
        _
      %p594 = scmp.le.s32.totalorder 2, %s11
      // Predicated region
      $region121: #{gpt_forward.11} parent=5 // pred_check
        %p595 = pneg %p594
      $region122: #{gpt_forward.11} parent=5 // pred_check_branch
        %597 = sbr.rel (%p595) target = $region124
      $region123: #{gpt_forward.11} parent=5 // pred_region
        %s598 = ssub.s32 %s11, 2
        // Predicated region
        $region125: #{gpt_forward.11} parent=123 // pred_check
          %p599 = pneg %p174
        $region126: #{gpt_forward.11} parent=123 // pred_check_branch
          %601 = sbr.rel (%p599) target = $region128
        $region127: #{gpt_forward.11} parent=123 // pred_region
          %s602 = sand.u32 %s159, 1
          %s603 = sand.u32 %s159, 1
          %s604 = smul.addr %s603, 32
          %s605 = scalar_lea.vmem [#allocation4], %s604
        $region128: #{gpt_forward.11} parent=123 // pred_fallthru
          _
      $region124: #{gpt_forward.11} parent=5 // pred_fallthru
        _
    $region6: #{gpt_forward.11} parent=1 // loop_footer
      %s15 = sadd.s32 1, %s11
    $region7: #{gpt_forward.11} parent=1 // loop_footer_branch
      %10 = sbr.rel target = $region3
    $region8: #{gpt_forward.11} parent=1 // loop_exit
      _

// kernel: gpt_forward.13
$region0: #{gpt_forward.13}
  #allocation0 [shape = 'u32[]', space=smem, size = 0x4, offset = 0x4, fixed_abs, tag = 'smem constant byte address 0x4 - core index']
  #allocation1 [shape = 'u32[72,128]{1,0:T(1,128)}', space=vmem, size = 0x9000, scoped, tag = 'internal scratch']
  #allocation2 [shape = 'f32[32,128]{1,0:T(8,128)}', space=vmem, size = 0x4000, scoped, tag = 'scratch operand']
  %s0 = inlined_call_operand.vmem [shape: f32[32,128], index: 0, kind: input, shape index: {}]
  %s1 = inlined_call_operand.hbm [shape: f32[128,128], index: 1, kind: input, shape index: {}]
  %s2 = inlined_call_operand.vmem [shape: f32[1,128], index: 2, kind: input, shape index: {}]
  %s3 = inlined_call_operand.vmem [shape: f32[32,128], index: 3, kind: input, shape index: {}, may-alias: {3,4}]
  %s4 = inlined_call_operand.vmem [shape: f32[32,128], index: 4, kind: output, shape index: {}, may-alias: {3,4}]
  %s5 = sld [smem:[#allocation0]]
  $region38: #{gpt_forward.13} parent=0
    _
  %s7 = ssub.s32 1, %s5
  %s8 = scalar_select 0, %s7, %s5
  $region1: #{gpt_forward.13} parent=0
    #allocation3 [shape = 'u8[65536]{0}', space=vmem, size = 0x10000, scoped, tag = 'input window, operand 1, single buffered']
    #allocation4 [shape = 's32[1]{0}', space=sflag, size = 0x4, scoped, tag = 'scoped memory for gpt_forward.13']
    %9 = vsyncpa [#allocation4], 0
    // Predicated region
    $region2: #{gpt_forward.13} parent=1 // pred_check
      _
    $region3: #{gpt_forward.13} parent=1 // pred_check_branch
      %11 = sbr.rel (0) target = $region5
    $region4: #{gpt_forward.13} parent=1 // pred_region
      _
    $region5: #{gpt_forward.13} parent=1 // pred_fallthru
      _
    // Predicated region
    $region6: #{gpt_forward.13} parent=1 // pred_check
      _
    $region7: #{gpt_forward.13} parent=1 // pred_check_branch
      %13 = sbr.rel (0) target = $region9
    $region8: #{gpt_forward.13} parent=1 // pred_region
      %15 = vsyncadd [#allocation4], 0
      %s16 = sshll.u32 %s1, 4
      %s17 = int_to_ptr.hbm [resolvable:$true] %s16
      %s18 = sshll.u32 [#allocation3], 4
      %s19 = int_to_ptr.vmem [resolvable:$true] %s18
      %24 = dma.hbm_to_vmem [thread:$0]  %s17, 2048, %s19, [#allocation4], 128, 128, 8
    $region9: #{gpt_forward.13} parent=1 // pred_fallthru
      _
    // Predicated region
    $region10: #{gpt_forward.13} parent=1 // pred_check
      _
    $region11: #{gpt_forward.13} parent=1 // pred_check_branch
      %26 = sbr.rel (0) target = $region13
    $region12: #{gpt_forward.13} parent=1 // pred_region
      _
    $region13: #{gpt_forward.13} parent=1 // pred_fallthru
      _
    // Predicated region
    $region14: #{gpt_forward.13} parent=1 // pred_check
      _
    $region15: #{gpt_forward.13} parent=1 // pred_check_branch
      %28 = sbr.rel (0) target = $region17
    $region16: #{gpt_forward.13} parent=1 // pred_region
      _
    $region17: #{gpt_forward.13} parent=1 // pred_fallthru
      _
    // Predicated region
    $region18: #{gpt_forward.13} parent=1 // pred_check
      _
    $region19: #{gpt_forward.13} parent=1 // pred_check_branch
      %30 = sbr.rel (0) target = $region21
    $region20: #{gpt_forward.13} parent=1 // pred_region
      %32 = dma.done [#allocation4], 2048
    $region21: #{gpt_forward.13} parent=1 // pred_fallthru
      _
    %p33 = scmp.eq.s32.totalorder 0, 0
    // Predicated region
    $region22: #{gpt_forward.13} parent=1 // pred_check
      %p34 = pneg %p33
    $region23: #{gpt_forward.13} parent=1 // pred_check_branch
      %36 = sbr.rel (%p34) target = $region25
    $region24: #{gpt_forward.13} parent=1 // pred_region
      %37 = vst [vmem:[#allocation2] sm:$0xff] 0.0
      %38 = vst [vmem:[#allocation2 + $0x8] sm:$0xff] 0.0
      %39 = vst [vmem:[#allocation2 + $0x10] sm:$0xff] 0.0
      %40 = vst [vmem:[#allocation2 + $0x18] sm:$0xff] 0.0
    $region25: #{gpt_forward.13} parent=1 // pred_fallthru
      _
    %v41 = vld [vmem:[#allocation2] sm:$0xff]
    %v42 = vld [vmem:[#allocation2 + $0x8] sm:$0xff]
    %v43 = vld [vmem:[#allocation2 + $0x10] sm:$0xff]
    %v44 = vld [vmem:[#allocation2 + $0x18] sm:$0xff]
    %v45 = vld [vmem:[%s0] sm:$0xff]
    %v46 = vld [vmem:[%s0 + $0x8] sm:$0xff]
    %v47 = vld [vmem:[%s0 + $0x10] sm:$0xff]
    %v48 = vld [vmem:[%s0 + $0x18] sm:$0xff]
    %v49 = vld [vmem:[#allocation3] sm:$0xff]
    %v50 = vld [vmem:[#allocation3 + $0x8] sm:$0xff]
    %v51 = vld [vmem:[#allocation3 + $0x10] sm:$0xff]
    %v52 = vld [vmem:[#allocation3 + $0x18] sm:$0xff]
    %v53 = vld [vmem:[#allocation3 + $0x20] sm:$0xff]
    %v54 = vld [vmem:[#allocation3 + $0x28] sm:$0xff]
    %v55 = vld [vmem:[#allocation3 + $0x30] sm:$0xff]
    %v56 = vld [vmem:[#allocation3 + $0x38] sm:$0xff]
    %v57 = vld [vmem:[#allocation3 + $0x40] sm:$0xff]
    %v58 = vld [vmem:[#allocation3 + $0x48] sm:$0xff]
    %v59 = vld [vmem:[#allocation3 + $0x50] sm:$0xff]
    %v60 = vld [vmem:[#allocation3 + $0x58] sm:$0xff]
    %v61 = vld [vmem:[#allocation3 + $0x60] sm:$0xff]
    %v62 = vld [vmem:[#allocation3 + $0x68] sm:$0xff]
    %v63 = vld [vmem:[#allocation3 + $0x70] sm:$0xff]
    %v64 = vld [vmem:[#allocation3 + $0x78] sm:$0xff]
    %65 = vmatpush.msra.mxu0 %v64
    %66 = vmatpush.msra.mxu0 %v63
    %67 = vmatpush.msra.mxu0 %v62
    %68 = vmatpush.msra.mxu0 %v61
    %69 = vmatpush.msra.mxu0 %v60
    %70 = vmatpush.msra.mxu0 %v59
    %71 = vmatpush.msra.mxu0 %v58
    %72 = vmatpush.msra.mxu0 %v57
    %73 = vmatpush.msra.mxu0 %v56
    %74 = vmatpush.msra.mxu0 %v55
    %75 = vmatpush.msra.mxu0 %v54
    %76 = vmatpush.msra.mxu0 %v53
    %77 = vmatpush.msra.mxu0 %v52
    %78 = vmatpush.msra.mxu0 %v51
    %79 = vmatpush.msra.mxu0 %v50
    %80 = vmatpush.msra.mxu0 %v49
    %81 = vmatmul.f32.gmra.mxu0 %v45
    %v82 = vpop.f32.mrf.mxu0
    %v83 = vadd.f32 0.0, %v82
    %84 = vmatmul.f32.gmra.mxu0 %v46
    %v85 = vpop.f32.mrf.mxu0
    %v86 = vadd.f32 0.0, %v85
    %87 = vmatmul.f32.gmra.mxu0 %v47
    %v88 = vpop.f32.mrf.mxu0
    %v89 = vadd.f32 0.0, %v88
    %90 = vmatmul.f32.gmra.mxu0 %v48
    %v91 = vpop.f32.mrf.mxu0
    %v92 = vadd.f32 0.0, %v91
    %93 = vdwg.mxu0
    %v94 = vadd.f32 %v41, %v83
    %v95 = vadd.f32 %v42, %v86
    %v96 = vadd.f32 %v43, %v89
    %v97 = vadd.f32 %v44, %v92
    %98 = vst [vmem:[#allocation2] sm:$0xff] %v94
    %99 = vst [vmem:[#allocation2 + $0x8] sm:$0xff] %v95
    %100 = vst [vmem:[#allocation2 + $0x10] sm:$0xff] %v96
    %101 = vst [vmem:[#allocation2 + $0x18] sm:$0xff] %v97
    // Predicated region
    $region26: #{gpt_forward.13} parent=1 // pred_check
      %p102 = pneg %p33
    $region27: #{gpt_forward.13} parent=1 // pred_check_branch
      %104 = sbr.rel (%p102) target = $region29
    $region28: #{gpt_forward.13} parent=1 // pred_region
      %v105 = vld [vmem:[#allocation2] sm:$0xff]
      %v106 = vld [vmem:[#allocation2 + $0x8] sm:$0xff]
      %v107 = vld [vmem:[#allocation2 + $0x10] sm:$0xff]
      %v108 = vld [vmem:[#allocation2 + $0x18] sm:$0xff]
      %v109 = vld [vmem:[%s2] sm:$0x1]
      %v111 = vperm.slane %v109, 0
      %v113 = vadd.f32 %v105, %v111
      %v114 = vadd.f32 %v106, %v111
      %v115 = vadd.f32 %v107, %v111
      %v116 = vadd.f32 %v108, %v111
      %v117 = vld [vmem:[%s3] sm:$0xff]
      %v118 = vld [vmem:[%s3 + $0x8] sm:$0xff]
      %v119 = vld [vmem:[%s3 + $0x10] sm:$0xff]
      %v120 = vld [vmem:[%s3 + $0x18] sm:$0xff]
      %v121 = vadd.f32 %v113, %v117
      %v122 = vadd.f32 %v114, %v118
      %v123 = vadd.f32 %v115, %v119
      %v124 = vadd.f32 %v116, %v120
      %125 = vst [vmem:[%s4] sm:$0xff] %v121
      %126 = vst [vmem:[%s4 + $0x8] sm:$0xff] %v122
      %127 = vst [vmem:[%s4 + $0x10] sm:$0xff] %v123
      %128 = vst [vmem:[%s4 + $0x18] sm:$0xff] %v124
    $region29: #{gpt_forward.13} parent=1 // pred_fallthru
      _
    // Predicated region
    $region30: #{gpt_forward.13} parent=1 // pred_check
      _
    $region31: #{gpt_forward.13} parent=1 // pred_check_branch
      %130 = sbr.rel (0) target = $region33
    $region32: #{gpt_forward.13} parent=1 // pred_region
      _
    $region33: #{gpt_forward.13} parent=1 // pred_fallthru
      _
    // Predicated region
    $region34: #{gpt_forward.13} parent=1 // pred_check
      _
    $region35: #{gpt_forward.13} parent=1 // pred_check_branch
      %132 = sbr.rel (0) target = $region37
    $region36: #{gpt_forward.13} parent=1 // pred_region
      _
    $region37: #{gpt_forward.13} parent=1 // pred_fallthru
      _
    %133 = vsyncpa [#allocation4], 1

// kernel: gpt_forward.14
$region0: #{gpt_forward.14}
  #allocation0 [shape = 'u32[]', space=smem, size = 0x4, offset = 0x4, fixed_abs, tag = 'smem constant byte address 0x4 - core index']
  #allocation1 [shape = 'u32[72,128]{1,0:T(1,128)}', space=vmem, size = 0x9000, scoped, tag = 'internal scratch']
  #allocation2 [shape = 'f32[32,128]{1,0:T(8,128)}', space=vmem, size = 0x4000, scoped, tag = 'scratch operand']
  %s0 = inlined_call_operand.vmem [shape: f32[32,128], index: 0, kind: input, shape index: {}]
  %s1 = inlined_call_operand.vmem [shape: f32[1,128], index: 1, kind: input, shape index: {}]
  %s2 = inlined_call_operand.vmem [shape: f32[1,128], index: 2, kind: input, shape index: {}]
  %s3 = inlined_call_operand.hbm [shape: f32[128,512], index: 3, kind: input, shape index: {}]
  %s4 = inlined_call_operand.vmem [shape: f32[1,512], index: 4, kind: input, shape index: {}]
  %s5 = inlined_call_operand.vmem [shape: f32[32,512], index: 5, kind: output, shape index: {}]
  %s6 = sld [smem:[#allocation0]]
  $region80: #{gpt_forward.14} parent=0
    _
  %s8 = ssub.s32 1, %s6
  %s9 = scalar_select 0, %s8, %s6
  $region1: #{gpt_forward.14} parent=0
    #allocation3 [shape = 'u8[262144]{0}', space=vmem, size = 0x40000, scoped, tag = 'input window, operand 3']
    #allocation4 [shape = 's32[2]{0}', space=sflag, size = 0x8, scoped, tag = 'scoped memory for gpt_forward.14']
    #allocation5 [shape = 'u8[65536]{0}', space=vmem, size = 0x10000, scoped, tag = 'output window, operand 0']
    %10 = vsyncpa [#allocation4], 0
    %s11 = scalar_lea.sflag [#allocation4], 1
    %12 = vsyncpa %s11, 0
    loop: start=0, step=1, limit=4
    $region2: #{gpt_forward.14} parent=1 // loop_pre_header
      _
    $region3: #{gpt_forward.14} parent=1 // loop_header
      %s14 = sphi 0, %s18
      %p15 = scmp.ge.s32.totalorder %s14, 4
      %s21 = sphi 0, %s33
      %s22 = sphi 0, %s29
      %s23 = sphi 0, %s21
      %s24 = sphi 0, %s22
      %s25 = sphi 0, %s23
      %s26 = sphi 0, %s24
      %s36 = sphi 0, %s38
      %s39 = sphi 0, %s36
      %s40 = sphi 0, %s39
      %s56 = sphi 0, %s40
      %s60 = sphi 0, %s60
      %s62 = sphi 0, %s60
      %s63 = sphi 0, %s62
      %s77 = sphi 0, %s63
      %s81 = sphi 0, %s81
      %s83 = sphi 0, %s81
      %s84 = sphi 0, %s83
      %s98 = sphi 0, %s84
      %s104 = sphi 0, %s106
      %s107 = sphi 0, %s104
      %s108 = sphi 0, %s107
      %s124 = sphi 0, %s108
      %s130 = sphi 0, %s132
      %s133 = sphi 0, %s130
      %s134 = sphi 0, %s133
      %s150 = sphi 0, %s134
      %s158 = sphi 0, %s160
      %s161 = sphi 0, %s158
      %s162 = sphi 0, %s161
      %s178 = sphi 0, %s162
    $region4: #{gpt_forward.14} parent=1 // loop_header_branch
      %17 = sbr.rel (%p15) target = $region8
    $region5: #{gpt_forward.14} parent=1 // loop_body
      %s19 = ssub.s32 %s14, 1
      %s20 = ssub.s32 %s14, 2
      %s27 = sadd.s32 1, %s22
      %p28 = scmp.ge.s32.totalorder %s27, 2
      %s29 = scalar_select %p28, 0, %s27
      %s30 = sadd.s32 1, %s21
      %s31 = scalar_select %p28, %s30, %s21
      %p32 = scmp.ge.s32.totalorder %s31, 1
      %s33 = scalar_select %p32, 0, %s31
      %s34 = ssub.s32 %s21, %s33
      %p35 = scmp.eq.s32.totalorder %s34, 0
      %s37 = sadd.s32 %s36, 1
      %s38 = scalar_select %p35, %s36, %s37
      %p41 = pneg %p35
      %p42 = scmp.eq.s32.totalorder %s14, 1
      %p43 = por %p41, %p42
      %p44 = scmp.ne.s32.totalorder %s36, %s39
      %p45 = scmp.eq.s32.totalorder %s14, 0
      %p46 = por %p44, %p45
      %p47 = scmp.ne.s32.totalorder %s36, %s39
      %p48 = scmp.eq.s32.totalorder %s19, 1
      %p49 = por %p47, %p48
      %p50 = scmp.ne.s32.totalorder %s39, %s40
      %p51 = scmp.eq.s32.totalorder %s19, 0
      %p52 = por %p50, %p51
      %p53 = scmp.ne.s32.totalorder %s39, %s40
      %p54 = scmp.eq.s32.totalorder %s20, 1
      %p55 = por %p53, %p54
      %p57 = scmp.ne.s32.totalorder %s40, %s56
      %p58 = scmp.eq.s32.totalorder %s20, 0
      %p59 = por %p57, %p58
      %s61 = sadd.s32 %s60, 1
      %p64 = scmp.eq.s32.totalorder %s14, 1
      %p65 = scmp.ne.s32.totalorder %s60, %s62
      %p66 = scmp.eq.s32.totalorder %s14, 0
      %p67 = por %p65, %p66
      %p68 = scmp.ne.s32.totalorder %s60, %s62
      %p69 = scmp.eq.s32.totalorder %s19, 1
      %p70 = por %p68, %p69
      %p71 = scmp.ne.s32.totalorder %s62, %s63
      %p72 = scmp.eq.s32.totalorder %s19, 0
      %p73 = por %p71, %p72
      %p74 = scmp.ne.s32.totalorder %s62, %s63
      %p75 = scmp.eq.s32.totalorder %s20, 1
      %p76 = por %p74, %p75
      %p78 = scmp.ne.s32.totalorder %s63, %s77
      %p79 = scmp.eq.s32.totalorder %s20, 0
      %p80 = por %p78, %p79
      %s82 = sadd.s32 %s81, 1
      %p85 = scmp.eq.s32.totalorder %s14, 1
      %p86 = scmp.ne.s32.totalorder %s81, %s83
      %p87 = scmp.eq.s32.totalorder %s14, 0
      %p88 = por %p86, %p87
      %p89 = scmp.ne.s32.totalorder %s81, %s83
      %p90 = scmp.eq.s32.totalorder %s19, 1
      %p91 = por %p89, %p90
      %p92 = scmp.ne.s32.totalorder %s83, %s84
      %p93 = scmp.eq.s32.totalorder %s19, 0
      %p94 = por %p92, %p93
      %p95 = scmp.ne.s32.totalorder %s83, %s84
      %p96 = scmp.eq.s32.totalorder %s20, 1
      %p97 = por %p95, %p96
      %p99 = scmp.ne.s32.totalorder %s84, %s98
      %p100 = scmp.eq.s32.totalorder %s20, 0
      %p101 = por %p99, %p100
      %s102 = ssub.s32 %s22, %s29
      %p103 = scmp.eq.s32.totalorder %s102, 0
      %s105 = sadd.s32 %s104, 1
      %s106 = scalar_select %p103, %s104, %s105
      %p109 = pneg %p103
      %p110 = scmp.eq.s32.totalorder %s14, 1
      %p111 = por %p109, %p110
      %p112 = scmp.ne.s32.totalorder %s104, %s107
      %p113 = scmp.eq.s32.totalorder %s14, 0
      %p114 = por %p112, %p113
      %p115 = scmp.ne.s32.totalorder %s104, %s107
      %p116 = scmp.eq.s32.totalorder %s19, 1
      %p117 = por %p115, %p116
      %p118 = scmp.ne.s32.totalorder %s107, %s108
      %p119 = scmp.eq.s32.totalorder %s19, 0
      %p120 = por %p118, %p119
      %p121 = scmp.ne.s32.totalorder %s107, %s108
      %p122 = scmp.eq.s32.totalorder %s20, 1
      %p123 = por %p121, %p122
      %p125 = scmp.ne.s32.totalorder %s108, %s124
      %p126 = scmp.eq.s32.totalorder %s20, 0
      %p127 = por %p125, %p126
      %s128 = ssub.s32 %s22, %s29
      %p129 = scmp.eq.s32.totalorder %s128, 0
      %s131 = sadd.s32 %s130, 1
      %s132 = scalar_select %p129, %s130, %s131
      %p135 = pneg %p129
      %p136 = scmp.eq.s32.totalorder %s14, 1
      %p137 = por %p135, %p136
      %p138 = scmp.ne.s32.totalorder %s130, %s133
      %p139 = scmp.eq.s32.totalorder %s14, 0
      %p140 = por %p138, %p139
      %p141 = scmp.ne.s32.totalorder %s130, %s133
      %p142 = scmp.eq.s32.totalorder %s19, 1
      %p143 = por %p141, %p142
      %p144 = scmp.ne.s32.totalorder %s133, %s134
      %p145 = scmp.eq.s32.totalorder %s19, 0
      %p146 = por %p144, %p145
      %p147 = scmp.ne.s32.totalorder %s133, %s134
      %p148 = scmp.eq.s32.totalorder %s20, 1
      %p149 = por %p147, %p148
      %p151 = scmp.ne.s32.totalorder %s134, %s150
      %p152 = scmp.eq.s32.totalorder %s20, 0
      %p153 = por %p151, %p152
      %s154 = ssub.s32 %s21, %s33
      %s155 = ssub.s32 %s22, %s29
      %s156 = sor.u32 %s154, %s155
      %p157 = scmp.eq.s32.totalorder %s156, 0
      %s159 = sadd.s32 %s158, 1
      %s160 = scalar_select %p157, %s158, %s159
      %p163 = pneg %p157
      %p164 = scmp.eq.s32.totalorder %s14, 1
      %p165 = por %p163, %p164
      %p166 = scmp.ne.s32.totalorder %s158, %s161
      %p167 = scmp.eq.s32.totalorder %s14, 0
      %p168 = por %p166, %p167
      %p169 = scmp.ne.s32.totalorder %s158, %s161
      %p170 = scmp.eq.s32.totalorder %s19, 1
      %p171 = por %p169, %p170
      %p172 = scmp.ne.s32.totalorder %s161, %s162
      %p173 = scmp.eq.s32.totalorder %s19, 0
      %p174 = por %p172, %p173
      %p175 = scmp.ne.s32.totalorder %s161, %s162
      %p176 = scmp.eq.s32.totalorder %s20, 1
      %p177 = por %p175, %p176
      %p179 = scmp.ne.s32.totalorder %s162, %s178
      %p180 = scmp.eq.s32.totalorder %s20, 0
      %p181 = por %p179, %p180
      %p182 = scmp.le.s32.totalorder 1, %s14
      %p183 = scmp.lt.s32.totalorder %s14, 3
      %p184 = pnand %p182, %p183
      %p185 = pneg %p184
      // Predicated region
      $region9: #{gpt_forward.14} parent=5 // pred_check
        _
      $region10: #{gpt_forward.14} parent=5 // pred_check_branch
        %187 = sbr.rel (%p184) target = $region12
      $region11: #{gpt_forward.14} parent=5 // pred_region
        %s188 = ssub.s32 %s14, 1
        // Predicated region
        $region13: #{gpt_forward.14} parent=11 // pred_check
          %p189 = pneg %p52
        $region14: #{gpt_forward.14} parent=11 // pred_check_branch
          %191 = sbr.rel (%p189) target = $region16
        $region15: #{gpt_forward.14} parent=11 // pred_region
          %s192 = smul.u32 4, %s23
          %p193 = scmp.lt.s32.totalorder %s192, 3
          %s194 = scalar_select %p193, %s192, 3
          %s195 = smul.addr %s194, 8
          %s196 = scalar_lea.vmem %s0, %s195
          %s197 = smul.u32 4, %s23
        $region16: #{gpt_forward.14} parent=11 // pred_fallthru
          _
        // Predicated region
        $region17: #{gpt_forward.14} parent=11 // pred_check
          %p198 = pneg %p73
        $region18: #{gpt_forward.14} parent=11 // pred_check_branch
          %200 = sbr.rel (%p198) target = $region20
        $region19: #{gpt_forward.14} parent=11 // pred_region
          _
        $region20: #{gpt_forward.14} parent=11 // pred_fallthru
          _
        // Predicated region
        $region21: #{gpt_forward.14} parent=11 // pred_check
          %p201 = pneg %p94
        $region22: #{gpt_forward.14} parent=11 // pred_check_branch
          %203 = sbr.rel (%p201) target = $region24
        $region23: #{gpt_forward.14} parent=11 // pred_region
          _
        $region24: #{gpt_forward.14} parent=11 // pred_fallthru
          _
      $region12: #{gpt_forward.14} parent=5 // pred_fallthru
        _
      %p204 = scmp.lt.s32.totalorder %s14, 2
      // Predicated region
      $region25: #{gpt_forward.14} parent=5 // pred_check
        %p205 = pneg %p204
      $region26: #{gpt_forward.14} parent=5 // pred_check_branch
        %207 = sbr.rel (%p205) target = $region28
      $region27: #{gpt_forward.14} parent=5 // pred_region
        // Predicated region
        $region29: #{gpt_forward.14} parent=27 // pred_check
          %p208 = pneg %p114
        $region30: #{gpt_forward.14} parent=27 // pred_check_branch
          %210 = sbr.rel (%p208) target = $region32
        $region31: #{gpt_forward.14} parent=27 // pred_region
          %s211 = sand.u32 %s104, 1
          %s212 = scalar_lea.sflag [#allocation4], %s211
          %s213 = sand.u32 %s104, 1
          %s214 = smul.addr %s213, 256
          %s215 = scalar_lea.vmem [#allocation3], %s214
          %s216 = smul.u32 2, %s22
          %218 = vsyncadd %s212, 0
          %s219 = smul.addr %s216, 8
          %s220 = scalar_lea.hbm %s3, %s219
          %s221 = sshll.u32 %s220, 4
          %s222 = int_to_ptr.hbm [resolvable:$true] %s221
          %s223 = sshll.u32 %s215, 4
          %s224 = int_to_ptr.vmem [resolvable:$true] %s223
          %229 = dma.hbm_to_vmem [thread:$0]  %s222, 4096, %s224, %s212, 512, 256, 16
        $region32: #{gpt_forward.14} parent=27 // pred_fallthru
          _
        // Predicated region
        $region33: #{gpt_forward.14} parent=27 // pred_check
          %p230 = pneg %p140
        $region34: #{gpt_forward.14} parent=27 // pred_check_branch
          %232 = sbr.rel (%p230) target = $region36
        $region35: #{gpt_forward.14} parent=27 // pred_region
          %s233 = smul.u32 2, %s22
          %p234 = scmp.lt.s32.totalorder %s233, 3
          %s235 = scalar_select %p234, %s233, 3
          %s236 = scalar_lea.vmem %s4, %s235
          %s237 = smul.u32 2, %s22
        $region36: #{gpt_forward.14} parent=27 // pred_fallthru
          _
      $region28: #{gpt_forward.14} parent=5 // pred_fallthru
        _
      %p238 = scmp.le.s32.totalorder 1, %s14
      %p239 = scmp.lt.s32.totalorder %s14, 3
      %p240 = pnand %p238, %p239
      %p241 = pneg %p240
      // Predicated region
      $region37: #{gpt_forward.14} parent=5 // pred_check
        _
      $region38: #{gpt_forward.14} parent=5 // pred_check_branch
        %243 = sbr.rel (%p240) target = $region40
      $region39: #{gpt_forward.14} parent=5 // pred_region
        %s244 = ssub.s32 %s14, 1
        %s245 = sand.u32 %s107, 1
        %s246 = scalar_lea.sflag [#allocation4], %s245
        %s247 = sand.u32 %s107, 1
        %s248 = smul.addr %s247, 256
        %s249 = scalar_lea.vmem [#allocation3], %s248
        // Predicated region
        $region41: #{gpt_forward.14} parent=39 // pred_check
          %p250 = pneg %p120
        $region42: #{gpt_forward.14} parent=39 // pred_check_branch
          %252 = sbr.rel (%p250) target = $region44
        $region43: #{gpt_forward.14} parent=39 // pred_region
          %254 = dma.done %s246, 4096
        $region44: #{gpt_forward.14} parent=39 // pred_fallthru
          _
        %s255 = smul.u32 4, %s23
        %p256 = scmp.lt.s32.totalorder %s255, 3
        %s257 = scalar_select %p256, %s255, 3
        %s258 = smul.addr %s257, 8
        %s259 = scalar_lea.vmem %s0, %s258
        %p260 = pneg %p52
        %p261 = pneg %p49
        %p262 = pneg %p73
        %p263 = pneg %p70
        %p264 = pneg %p94
        %p265 = pneg %p91
        %s266 = sand.u32 %s107, 1
        %s267 = scalar_lea.sflag [#allocation4], %s266
        %s268 = sand.u32 %s107, 1
        %s269 = smul.addr %s268, 256
        %s270 = scalar_lea.vmem [#allocation3], %s269
        %p271 = pneg %p120
        %p272 = pneg %p117
        %s273 = smul.u32 2, %s24
        %p274 = scmp.lt.s32.totalorder %s273, 3
        %s275 = scalar_select %p274, %s273, 3
        %s276 = scalar_lea.vmem %s4, %s275
        %p277 = pneg %p146
        %p278 = pneg %p143
        %p279 = pneg %p174
        %p280 = pneg %p171
        %s281 = sand.u32 %s161, 1
        %s282 = sand.u32 %s161, 1
        %s283 = smul.addr %s282, 64
        %s284 = scalar_lea.vmem [#allocation5], %s283
        %s285 = smul.u32 4, %s23
        %p286 = scmp.lt.s32.totalorder %s285, 3
        %s287 = scalar_select %p286, %s285, 3
        %s288 = smul.addr %s287, 8
        %s289 = scalar_lea.vmem %s0, %s288
        %s290 = smul.u32 4, %s23
        %s291 = smul.u32 2, %s24
        %s292 = smul.u32 2, %s24
        %p293 = scmp.lt.s32.totalorder %s292, 3
        %s294 = scalar_select %p293, %s292, 3
        %s295 = scalar_lea.vmem %s4, %s294
        %s296 = smul.u32 2, %s24
        %s297 = smul.u32 4, %s23
        %s298 = smul.u32 2, %s24
        %p299 = scmp.eq.s32.totalorder %s24, 0
        // Predicated region
        $region45: #{gpt_forward.14} parent=39 // pred_check
          %p300 = pneg %p299
        $region46: #{gpt_forward.14} parent=39 // pred_check_branch
          %302 = sbr.rel (%p300) target = $region48
        $region47: #{gpt_forward.14} parent=39 // pred_region
          %v303 = vld [vmem:[%s289] sm:$0xff]
          %v304 = vld [vmem:[%s289 + $0x8] sm:$0xff]
          %v305 = vld [vmem:[%s289 + $0x10] sm:$0xff]
          %v306 = vld [vmem:[%s289 + $0x18] sm:$0xff]
          %307 = vadd.xlane.f32.xlu0 %v303
          %v308 = vpop.xlane.xlu0 %307
          %309 = vadd.xlane.f32.xlu0 %v304
          %v310 = vpop.xlane.xlu0 %309
          %311 = vadd.xlane.f32.xlu0 %v305
          %v312 = vpop.xlane.xlu0 %311
          %313 = vadd.xlane.f32.xlu0 %v306
          %v314 = vpop.xlane.xlu0 %313
          %v315 = vrcp.pop 128.0
          %v316 = vmul.f32 128.0, %v315
          %v317 = vsub.f32 1.0, %v316
          %v318 = vmul.f32 %v315, %v317
          %v319 = vadd.f32 %v315, %v318
          %vm320 = vweird.f32 %v315
          %v321 = vsel %vm320, %v315, %v319
          %v322 = vmul.f32 %v308, %v321
          %v323 = vmul.f32 %v310, %v321
          %v324 = vmul.f32 %v312, %v321
          %v325 = vmul.f32 %v314, %v321
          %v326 = vsub.f32 %v303, %v322
          %v327 = vsub.f32 %v304, %v323
          %v328 = vsub.f32 %v305, %v324
          %v329 = vsub.f32 %v306, %v325
          %v330 = vmul.f32 %v326, %v326
          %v331 = vmul.f32 %v327, %v327
          %v332 = vmul.f32 %v328, %v328
          %v333 = vmul.f32 %v329, %v329
          %334 = vadd.xlane.f32.xlu0 %v330
          %v335 = vpop.xlane.xlu0 %334
          %336 = vadd.xlane.f32.xlu0 %v331
          %v337 = vpop.xlane.xlu0 %336
          %338 = vadd.xlane.f32.xlu0 %v332
          %v339 = vpop.xlane.xlu0 %338
          %340 = vadd.xlane.f32.xlu0 %v333
          %v341 = vpop.xlane.xlu0 %340
          %v342 = vmul.f32 %v335, %v321
          %v343 = vmul.f32 %v337, %v321
          %v344 = vmul.f32 %v339, %v321
          %v345 = vmul.f32 %v341, %v321
          %v346 = vadd.f32 %v342, 1e-05
          %v347 = vadd.f32 %v343, 1e-05
          %v348 = vadd.f32 %v344, 1e-05
          %v349 = vadd.f32 %v345, 1e-05
          %v350 = vrsqrt.pop %v346
          %v351 = vmul.f32 %v350, %v346
          %v352 = vmul.f32 %v351, %v350
          %v353 = vmul.f32 0.5, %v352
          %v354 = vsub.f32 1.5, %v353
          %v355 = vmul.f32 %v350, %v354
          %vm356 = vweird.f32 %v346
          %vm357 = vweird.f32 %v350
          %vm358 = vmor %vm356, %vm357
          %v359 = vsel %vm358, %v350, %v355
          %v360 = vrsqrt.pop %v347
          %v361 = vmul.f32 %v360, %v347
          %v362 = vmul.f32 %v361, %v360
          %v363 = vmul.f32 0.5, %v362
          %v364 = vsub.f32 1.5, %v363
          %v365 = vmul.f32 %v360, %v364
          %vm366 = vweird.f32 %v347
          %vm367 = vweird.f32 %v360
          %vm368 = vmor %vm366, %vm367
          %v369 = vsel %vm368, %v360, %v365
          %v370 = vrsqrt.pop %v348
          %v371 = vmul.f32 %v370, %v348
          %v372 = vmul.f32 %v371, %v370
          %v373 = vmul.f32 0.5, %v372
          %v374 = vsub.f32 1.5, %v373
          %v375 = vmul.f32 %v370, %v374
          %vm376 = vweird.f32 %v348
          %vm377 = vweird.f32 %v370
          %vm378 = vmor %vm376, %vm377
          %v379 = vsel %vm378, %v370, %v375
          %v380 = vrsqrt.pop %v349
          %v381 = vmul.f32 %v380, %v349
          %v382 = vmul.f32 %v381, %v380
          %v383 = vmul.f32 0.5, %v382
          %v384 = vsub.f32 1.5, %v383
          %v385 = vmul.f32 %v380, %v384
          %vm386 = vweird.f32 %v349
          %vm387 = vweird.f32 %v380
          %vm388 = vmor %vm386, %vm387
          %v389 = vsel %vm388, %v380, %v385
          %v390 = vmul.f32 %v326, %v359
          %v391 = vmul.f32 %v327, %v369
          %v392 = vmul.f32 %v328, %v379
          %v393 = vmul.f32 %v329, %v389
          %v394 = vld [vmem:[%s1] sm:$0x1]
          %v396 = vperm.slane %v394, 0
          %v398 = vmul.f32 %v390, %v396
          %v399 = vmul.f32 %v391, %v396
          %v400 = vmul.f32 %v392, %v396
          %v401 = vmul.f32 %v393, %v396
          %v402 = vld [vmem:[%s2] sm:$0x1]
          %v404 = vperm.slane %v402, 0
          %v406 = vadd.f32 %v398, %v404
          %v407 = vadd.f32 %v399, %v404
          %v408 = vadd.f32 %v400, %v404
          %v409 = vadd.f32 %v401, %v404
          %410 = vst [vmem:[#allocation2] sm:$0xff] %v406
          %411 = vst [vmem:[#allocation2 + $0x8] sm:$0xff] %v407
          %412 = vst [vmem:[#allocation2 + $0x10] sm:$0xff] %v408
          %413 = vst [vmem:[#allocation2 + $0x18] sm:$0xff] %v409
        $region48: #{gpt_forward.14} parent=39 // pred_fallthru
          _
        %v414 = vld [vmem:[#allocation2] sm:$0xff]
        %v415 = vld [vmem:[#allocation2 + $0x8] sm:$0xff]
        %v416 = vld [vmem:[#allocation2 + $0x10] sm:$0xff]
        %v417 = vld [vmem:[#allocation2 + $0x18] sm:$0xff]
        %v418 = vld [vmem:[%s249] sm:$0xff]
        %v419 = vld [vmem:[%s249 + $0x8] sm:$0xff]
        %v420 = vld [vmem:[%s249 + $0x10] sm:$0xff]
        %v421 = vld [vmem:[%s249 + $0x18] sm:$0xff]
        %v422 = vld [vmem:[%s249 + $0x20] sm:$0xff]
        %v423 = vld [vmem:[%s249 + $0x28] sm:$0xff]
        %v424 = vld [vmem:[%s249 + $0x30] sm:$0xff]
        %v425 = vld [vmem:[%s249 + $0x38] sm:$0xff]
        %v426 = vld [vmem:[%s249 + $0x40] sm:$0xff]
        %v427 = vld [vmem:[%s249 + $0x48] sm:$0xff]
        %v428 = vld [vmem:[%s249 + $0x50] sm:$0xff]
        %v429 = vld [vmem:[%s249 + $0x58] sm:$0xff]
        %v430 = vld [vmem:[%s249 + $0x60] sm:$0xff]
        %v431 = vld [vmem:[%s249 + $0x68] sm:$0xff]
        %v432 = vld [vmem:[%s249 + $0x70] sm:$0xff]
        %v433 = vld [vmem:[%s249 + $0x78] sm:$0xff]
        %v434 = vld [vmem:[%s249 + $0x80] sm:$0xff]
        %v435 = vld [vmem:[%s249 + $0x88] sm:$0xff]
        %v436 = vld [vmem:[%s249 + $0x90] sm:$0xff]
        %v437 = vld [vmem:[%s249 + $0x98] sm:$0xff]
        %v438 = vld [vmem:[%s249 + $0xa0] sm:$0xff]
        %v439 = vld [vmem:[%s249 + $0xa8] sm:$0xff]
        %v440 = vld [vmem:[%s249 + $0xb0] sm:$0xff]
        %v441 = vld [vmem:[%s249 + $0xb8] sm:$0xff]
        %v442 = vld [vmem:[%s249 + $0xc0] sm:$0xff]
        %v443 = vld [vmem:[%s249 + $0xc8] sm:$0xff]
        %v444 = vld [vmem:[%s249 + $0xd0] sm:$0xff]
        %v445 = vld [vmem:[%s249 + $0xd8] sm:$0xff]
        %v446 = vld [vmem:[%s249 + $0xe0] sm:$0xff]
        %v447 = vld [vmem:[%s249 + $0xe8] sm:$0xff]
        %v448 = vld [vmem:[%s249 + $0xf0] sm:$0xff]
        %v449 = vld [vmem:[%s249 + $0xf8] sm:$0xff]
        %v450 = vld [vmem:[%s295] sm:$0x3]
        %v452 = vperm.slane %v450, 0
        %v453 = vperm.slane %v450, 1
        %456 = vmatpush.msra.mxu0 %v448
        %457 = vmatpush.msra.mxu0 %v446
        %458 = vmatpush.msra.mxu0 %v444
        %459 = vmatpush.msra.mxu0 %v442
        %460 = vmatpush.msra.mxu0 %v440
        %461 = vmatpush.msra.mxu0 %v438
        %462 = vmatpush.msra.mxu0 %v436
        %463 = vmatpush.msra.mxu0 %v434
        %464 = vmatpush.msra.mxu0 %v432
        %465 = vmatpush.msra.mxu0 %v430
        %466 = vmatpush.msra.mxu0 %v428
        %467 = vmatpush.msra.mxu0 %v426
        %468 = vmatpush.msra.mxu0 %v424
        %469 = vmatpush.msra.mxu0 %v422
        %470 = vmatpush.msra.mxu0 %v420
        %471 = vmatpush.msra.mxu0 %v418
        %472 = vmatmul.f32.gmra.mxu0 %v414
        %v473 = vpop.f32.mrf.mxu0
        %v474 = vadd.f32 %v452, %v473
        %475 = vmatmul.f32.gmra.mxu0 %v415
        %v476 = vpop.f32.mrf.mxu0
        %v477 = vadd.f32 %v452, %v476
        %478 = vmatmul.f32.gmra.mxu0 %v416
        %v479 = vpop.f32.mrf.mxu0
        %v480 = vadd.f32 %v452, %v479
        %481 = vmatmul.f32.gmra.mxu0 %v417
        %v482 = vpop.f32.mrf.mxu0
        %v483 = vadd.f32 %v452, %v482
        %484 = vdwg.mxu0
        %485 = vmatpush.msra.mxu0 %v449
        %486 = vmatpush.msra.mxu0 %v447
        %487 = vmatpush.msra.mxu0 %v445
        %488 = vmatpush.msra.mxu0 %v443
        %489 = vmatpush.msra.mxu0 %v441
        %490 = vmatpush.msra.mxu0 %v439
        %491 = vmatpush.msra.mxu0 %v437
        %492 = vmatpush.msra.mxu0 %v435
        %493 = vmatpush.msra.mxu0 %v433
        %494 = vmatpush.msra.mxu0 %v431
        %495 = vmatpush.msra.mxu0 %v429
        %496 = vmatpush.msra.mxu0 %v427
        %497 = vmatpush.msra.mxu0 %v425
        %498 = vmatpush.msra.mxu0 %v423
        %499 = vmatpush.msra.mxu0 %v421
        %500 = vmatpush.msra.mxu0 %v419
        %501 = vmatmul.f32.gmra.mxu0 %v414
        %v502 = vpop.f32.mrf.mxu0
        %v503 = vadd.f32 %v453, %v502
        %504 = vmatmul.f32.gmra.mxu0 %v415
        %v505 = vpop.f32.mrf.mxu0
        %v506 = vadd.f32 %v453, %v505
        %507 = vmatmul.f32.gmra.mxu0 %v416
        %v508 = vpop.f32.mrf.mxu0
        %v509 = vadd.f32 %v453, %v508
        %510 = vmatmul.f32.gmra.mxu0 %v417
        %v511 = vpop.f32.mrf.mxu0
        %v512 = vadd.f32 %v453, %v511
        %513 = vdwg.mxu0
        %v514 = vmul.f32 %v474, 0.5
        %v515 = vmul.f32 %v503, 0.5
        %v516 = vmul.f32 %v477, 0.5
        %v517 = vmul.f32 %v506, 0.5
        %v518 = vmul.f32 %v480, 0.5
        %v519 = vmul.f32 %v509, 0.5
        %v520 = vmul.f32 %v483, 0.5
        %v521 = vmul.f32 %v512, 0.5
        %v522 = vmul.f32 %v474, 0.044715
        %v523 = vmul.f32 %v503, 0.044715
        %v524 = vmul.f32 %v477, 0.044715
        %v525 = vmul.f32 %v506, 0.044715
        %v526 = vmul.f32 %v480, 0.044715
        %v527 = vmul.f32 %v509, 0.044715
        %v528 = vmul.f32 %v483, 0.044715
        %v529 = vmul.f32 %v512, 0.044715
        %v530 = vmul.f32 %v522, %v474
        %v531 = vmul.f32 %v523, %v503
        %v532 = vmul.f32 %v524, %v477
        %v533 = vmul.f32 %v525, %v506
        %v534 = vmul.f32 %v526, %v480
        %v535 = vmul.f32 %v527, %v509
        %v536 = vmul.f32 %v528, %v483
        %v537 = vmul.f32 %v529, %v512
        %v538 = vmul.f32 %v530, %v474
        %v539 = vmul.f32 %v531, %v503
        %v540 = vmul.f32 %v532, %v477
        %v541 = vmul.f32 %v533, %v506
        %v542 = vmul.f32 %v534, %v480
        %v543 = vmul.f32 %v535, %v509
        %v544 = vmul.f32 %v536, %v483
        %v545 = vmul.f32 %v537, %v512
        %v546 = vadd.f32 %v474, %v538
        %v547 = vadd.f32 %v503, %v539
        %v548 = vadd.f32 %v477, %v540
        %v549 = vadd.f32 %v506, %v541
        %v550 = vadd.f32 %v480, %v542
        %v551 = vadd.f32 %v509, %v543
        %v552 = vadd.f32 %v483, %v544
        %v553 = vadd.f32 %v512, %v545
        %v554 = vmul.f32 %v546, 0.7978846
        %v555 = vmul.f32 %v547, 0.7978846
        %v556 = vmul.f32 %v548, 0.7978846
        %v557 = vmul.f32 %v549, 0.7978846
        %v558 = vmul.f32 %v550, 0.7978846
        %v559 = vmul.f32 %v551, 0.7978846
        %v560 = vmul.f32 %v552, 0.7978846
        %v561 = vmul.f32 %v553, 0.7978846
        %v562 = vtanh.pop %v554
        %v563 = vtanh.pop %v555
        %v564 = vtanh.pop %v556
        %v565 = vtanh.pop %v557
        %v566 = vtanh.pop %v558
        %v567 = vtanh.pop %v559
        %v568 = vtanh.pop %v560
        %v569 = vtanh.pop %v561
        %v570 = vadd.f32 %v562, 1.0
        %v571 = vadd.f32 %v563, 1.0
        %v572 = vadd.f32 %v564, 1.0
        %v573 = vadd.f32 %v565, 1.0
        %v574 = vadd.f32 %v566, 1.0
        %v575 = vadd.f32 %v567, 1.0
        %v576 = vadd.f32 %v568, 1.0
        %v577 = vadd.f32 %v569, 1.0
        %v578 = vmul.f32 %v514, %v570
        %v579 = vmul.f32 %v515, %v571
        %v580 = vmul.f32 %v516, %v572
        %v581 = vmul.f32 %v517, %v573
        %v582 = vmul.f32 %v518, %v574
        %v583 = vmul.f32 %v519, %v575
        %v584 = vmul.f32 %v520, %v576
        %v585 = vmul.f32 %v521, %v577
        %586 = vst [vmem:[%s284] sm:$0xff] %v578
        %587 = vst [vmem:[%s284 + $0x8] sm:$0xff] %v579
        %588 = vst [vmem:[%s284 + $0x10] sm:$0xff] %v580
        %589 = vst [vmem:[%s284 + $0x18] sm:$0xff] %v581
        %590 = vst [vmem:[%s284 + $0x20] sm:$0xff] %v582
        %591 = vst [vmem:[%s284 + $0x28] sm:$0xff] %v583
        %592 = vst [vmem:[%s284 + $0x30] sm:$0xff] %v584
        %593 = vst [vmem:[%s284 + $0x38] sm:$0xff] %v585
        %s594 = sand.u32 %s161, 1
        %s595 = sand.u32 %s161, 1
        %s596 = smul.addr %s595, 64
        %s597 = scalar_lea.vmem [#allocation5], %s596
        // Predicated region
        $region49: #{gpt_forward.14} parent=39 // pred_check
          %p598 = pneg %p171
        $region50: #{gpt_forward.14} parent=39 // pred_check_branch
          %600 = sbr.rel (%p598) target = $region52
        $region51: #{gpt_forward.14} parent=39 // pred_region
          %s601 = smul.u32 4, %s23
          %s602 = smul.u32 2, %s24
          %s603 = smul.addr %s601, 4
          %s604 = sadd.s32 %s602, %s603
          %s605 = smul.addr %s604, 8
          %s606 = scalar_lea.vmem %s5, %s605
          // Predicated region
          $region53: #{gpt_forward.14} parent=51 // pred_check
            _
          $region54: #{gpt_forward.14} parent=51 // pred_check_branch
            %608 = sbr.rel (0) target = $region56
          $region55: #{gpt_forward.14} parent=51 // pred_region
            // Predicated region
            $region57: #{gpt_forward.14} parent=55 // pred_check
              _
            $region58: #{gpt_forward.14} parent=55 // pred_check_branch
              %610 = sbr.rel (0) target = $region60
            $region59: #{gpt_forward.14} parent=55 // pred_region
              loop: start=0, step=1, limit=1
              $region61: #{gpt_forward.14} parent=59 // loop_pre_header
                _
              $region62: #{gpt_forward.14} parent=59 // loop_header
                %s612 = sphi 0, %s616
                %p613 = scmp.ge.s32.totalorder %s612, 1
                %s617 = sphi %s597, %s597
                %s618 = sphi %s606, %s606
              $region63: #{gpt_forward.14} parent=59 // loop_header_branch
                %615 = sbr.rel (%p613) target = $region67
              $region64: #{gpt_forward.14} parent=59 // loop_body
                %v619 = vld [vmem:[%s617] sm:$0xff]
                %620 = vst [vmem:[%s618] sm:$0xff] %v619
                %v621 = vld [vmem:[%s617 + $0x8] sm:$0xff]
                %622 = vst [vmem:[%s618 + $0x8] sm:$0xff] %v621
                %v623 = vld [vmem:[%s617 + $0x10] sm:$0xff]
                %624 = vst [vmem:[%s618 + $0x20] sm:$0xff] %v623
                %v625 = vld [vmem:[%s617 + $0x18] sm:$0xff]
                %626 = vst [vmem:[%s618 + $0x28] sm:$0xff] %v625
                %v627 = vld [vmem:[%s617 + $0x20] sm:$0xff]
                %628 = vst [vmem:[%s618 + $0x40] sm:$0xff] %v627
                %v629 = vld [vmem:[%s617 + $0x28] sm:$0xff]
                %630 = vst [vmem:[%s618 + $0x48] sm:$0xff] %v629
                %v631 = vld [vmem:[%s617 + $0x30] sm:$0xff]
                %632 = vst [vmem:[%s618 + $0x60] sm:$0xff] %v631
                %v633 = vld [vmem:[%s617 + $0x38] sm:$0xff]
                %634 = vst [vmem:[%s618 + $0x68] sm:$0xff] %v633
              $region65: #{gpt_forward.14} parent=59 // loop_footer
                %s616 = sadd.s32 1, %s612
              $region66: #{gpt_forward.14} parent=59 // loop_footer_branch
                %611 = sbr.rel target = $region62
              $region67: #{gpt_forward.14} parent=59 // loop_exit
                _
            $region60: #{gpt_forward.14} parent=55 // pred_fallthru
              _
            // Predicated region
            $region68: #{gpt_forward.14} parent=55 // pred_check
              _
            $region69: #{gpt_forward.14} parent=55 // pred_check_branch
              %636 = sbr.rel target = $region71
            $region70: #{gpt_forward.14} parent=55 // pred_region
              _
            $region71: #{gpt_forward.14} parent=55 // pred_fallthru
              _
          $region56: #{gpt_forward.14} parent=51 // pred_fallthru
            _
          %637 = vnop
        $region52: #{gpt_forward.14} parent=39 // pred_fallthru
          _
      $region40: #{gpt_forward.14} parent=5 // pred_fallthru
        _
      %p638 = scmp.le.s32.totalorder 2, %s14
      // Predicated region
      $region72: #{gpt_forward.14} parent=5 // pred_check
        %p639 = pneg %p638
      $region73: #{gpt_forward.14} parent=5 // pred_check_branch
        %641 = sbr.rel (%p639) target = $region75
      $region74: #{gpt_forward.14} parent=5 // pred_region
        %s642 = ssub.s32 %s14, 2
        // Predicated region
        $region76: #{gpt_forward.14} parent=74 // pred_check
          %p643 = pneg %p177
        $region77: #{gpt_forward.14} parent=74 // pred_check_branch
          %645 = sbr.rel (%p643) target = $region79
        $region78: #{gpt_forward.14} parent=74 // pred_region
          %s646 = sand.u32 %s162, 1
          %s647 = sand.u32 %s162, 1
          %s648 = smul.addr %s647, 64
          %s649 = scalar_lea.vmem [#allocation5], %s648
        $region79: #{gpt_forward.14} parent=74 // pred_fallthru
          _
      $region75: #{gpt_forward.14} parent=5 // pred_fallthru
        _
    $region6: #{gpt_forward.14} parent=1 // loop_footer
      %s18 = sadd.s32 1, %s14
    $region7: #{gpt_forward.14} parent=1 // loop_footer_branch
      %13 = sbr.rel target = $region3
    $region8: #{gpt_forward.14} parent=1 // loop_exit
      _
    %650 = vsyncpa [#allocation4], 1
    %s651 = scalar_lea.sflag [#allocation4], 1
    %652 = vsyncpa %s651, 1

// kernel: gpt_forward.12
$region0: #{gpt_forward.12}
  #allocation0 [shape = 'u32[]', space=smem, size = 0x4, offset = 0x4, fixed_abs, tag = 'smem constant byte address 0x4 - core index']
  #allocation1 [shape = 'u32[72,128]{1,0:T(1,128)}', space=vmem, size = 0x9000, scoped, tag = 'internal scratch']
  %s0 = inlined_call_operand.vmem [shape: f32[32,384], index: 0, kind: input, shape index: {}, may-alias: {0,1,2}]
  %s1 = inlined_call_operand.vmem [shape: f32[32,384], index: 1, kind: input, shape index: {}, may-alias: {0,1,2}]
  %s2 = inlined_call_operand.vmem [shape: f32[32,384], index: 2, kind: input, shape index: {}, may-alias: {0,1,2}]
  %s3 = inlined_call_operand.vmem [shape: f32[32,128], index: 3, kind: output, shape index: {}]
  %s4 = sld [smem:[#allocation0]]
  $region159: #{gpt_forward.12} parent=0
    _
  %s6 = ssub.s32 1, %s4
  %s7 = scalar_select 0, %s6, %s4
  $region1: #{gpt_forward.12} parent=0
    #allocation2 [shape = 'u8[16384]{0}', space=vmem, size = 0x4000, scoped, tag = 'input window, operand 0']
    #allocation3 [shape = 'u8[16384]{0}', space=vmem, size = 0x4000, scoped, tag = 'input window, operand 1']
    #allocation4 [shape = 'u8[16384]{0}', space=vmem, size = 0x4000, scoped, tag = 'input window, operand 2']
    loop: start=0, step=1, limit=4
    $region2: #{gpt_forward.12} parent=1 // loop_pre_header
      _
    $region3: #{gpt_forward.12} parent=1 // loop_header
      %s9 = sphi 0, %s13
      %p10 = scmp.ge.s32.totalorder %s9, 4
      %s19 = sphi 0, %s21
      %s22 = sphi 0, %s19
      %s23 = sphi 0, %s22
      %s39 = sphi 0, %s23
      %s45 = sphi 0, %s47
      %s48 = sphi 0, %s45
      %s49 = sphi 0, %s48
      %s65 = sphi 0, %s49
      %s71 = sphi 0, %s73
      %s74 = sphi 0, %s71
      %s75 = sphi 0, %s74
      %s91 = sphi 0, %s75
      %s97 = sphi 0, %s99
      %s100 = sphi 0, %s97
      %s101 = sphi 0, %s100
      %s117 = sphi 0, %s101
    $region4: #{gpt_forward.12} parent=1 // loop_header_branch
      %12 = sbr.rel (%p10) target = $region8
    $region5: #{gpt_forward.12} parent=1 // loop_body
      %s14 = ssub.s32 %s9, 1
      %s15 = ssub.s32 %s9, 2
      %s16 = sadd.s32 %s9, 1
      %s17 = ssub.s32 %s9, %s16
      %p18 = scmp.eq.s32.totalorder %s17, 0
      %s20 = sadd.s32 %s19, 1
      %s21 = scalar_select %p18, %s19, %s20
      %p24 = pneg %p18
      %p25 = scmp.eq.s32.totalorder %s9, 1
      %p26 = por %p24, %p25
      %p27 = scmp.ne.s32.totalorder %s19, %s22
      %p28 = scmp.eq.s32.totalorder %s9, 0
      %p29 = por %p27, %p28
      %p30 = scmp.ne.s32.totalorder %s19, %s22
      %p31 = scmp.eq.s32.totalorder %s14, 1
      %p32 = por %p30, %p31
      %p33 = scmp.ne.s32.totalorder %s22, %s23
      %p34 = scmp.eq.s32.totalorder %s14, 0
      %p35 = por %p33, %p34
      %p36 = scmp.ne.s32.totalorder %s22, %s23
      %p37 = scmp.eq.s32.totalorder %s15, 1
      %p38 = por %p36, %p37
      %p40 = scmp.ne.s32.totalorder %s23, %s39
      %p41 = scmp.eq.s32.totalorder %s15, 0
      %p42 = por %p40, %p41
      %s43 = ssub.s32 %s9, %s16
      %p44 = scmp.eq.s32.totalorder %s43, 0
      %s46 = sadd.s32 %s45, 1
      %s47 = scalar_select %p44, %s45, %s46
      %p50 = pneg %p44
      %p51 = scmp.eq.s32.totalorder %s9, 1
      %p52 = por %p50, %p51
      %p53 = scmp.ne.s32.totalorder %s45, %s48
      %p54 = scmp.eq.s32.totalorder %s9, 0
      %p55 = por %p53, %p54
      %p56 = scmp.ne.s32.totalorder %s45, %s48
      %p57 = scmp.eq.s32.totalorder %s14, 1
      %p58 = por %p56, %p57
      %p59 = scmp.ne.s32.totalorder %s48, %s49
      %p60 = scmp.eq.s32.totalorder %s14, 0
      %p61 = por %p59, %p60
      %p62 = scmp.ne.s32.totalorder %s48, %s49
      %p63 = scmp.eq.s32.totalorder %s15, 1
      %p64 = por %p62, %p63
      %p66 = scmp.ne.s32.totalorder %s49, %s65
      %p67 = scmp.eq.s32.totalorder %s15, 0
      %p68 = por %p66, %p67
      %s69 = ssub.s32 %s9, %s16
      %p70 = scmp.eq.s32.totalorder %s69, 0
      %s72 = sadd.s32 %s71, 1
      %s73 = scalar_select %p70, %s71, %s72
      %p76 = pneg %p70
      %p77 = scmp.eq.s32.totalorder %s9, 1
      %p78 = por %p76, %p77
      %p79 = scmp.ne.s32.totalorder %s71, %s74
      %p80 = scmp.eq.s32.totalorder %s9, 0
      %p81 = por %p79, %p80
      %p82 = scmp.ne.s32.totalorder %s71, %s74
      %p83 = scmp.eq.s32.totalorder %s14, 1
      %p84 = por %p82, %p83
      %p85 = scmp.ne.s32.totalorder %s74, %s75
      %p86 = scmp.eq.s32.totalorder %s14, 0
      %p87 = por %p85, %p86
      %p88 = scmp.ne.s32.totalorder %s74, %s75
      %p89 = scmp.eq.s32.totalorder %s15, 1
      %p90 = por %p88, %p89
      %p92 = scmp.ne.s32.totalorder %s75, %s91
      %p93 = scmp.eq.s32.totalorder %s15, 0
      %p94 = por %p92, %p93
      %s95 = ssub.s32 %s9, %s16
      %p96 = scmp.eq.s32.totalorder %s95, 0
      %s98 = sadd.s32 %s97, 1
      %s99 = scalar_select %p96, %s97, %s98
      %p102 = pneg %p96
      %p103 = scmp.eq.s32.totalorder %s9, 1
      %p104 = por %p102, %p103
      %p105 = scmp.ne.s32.totalorder %s97, %s100
      %p106 = scmp.eq.s32.totalorder %s9, 0
      %p107 = por %p105, %p106
      %p108 = scmp.ne.s32.totalorder %s97, %s100
      %p109 = scmp.eq.s32.totalorder %s14, 1
      %p110 = por %p108, %p109
      %p111 = scmp.ne.s32.totalorder %s100, %s101
      %p112 = scmp.eq.s32.totalorder %s14, 0
      %p113 = por %p111, %p112
      %p114 = scmp.ne.s32.totalorder %s100, %s101
      %p115 = scmp.eq.s32.totalorder %s15, 1
      %p116 = por %p114, %p115
      %p118 = scmp.ne.s32.totalorder %s101, %s117
      %p119 = scmp.eq.s32.totalorder %s15, 0
      %p120 = por %p118, %p119
      %p121 = scmp.le.s32.totalorder 1, %s9
      %p122 = scmp.lt.s32.totalorder %s9, 3
      %p123 = pnand %p121, %p122
      %p124 = pneg %p123
      // Predicated region
      $region9: #{gpt_forward.12} parent=5 // pred_check
        _
      $region10: #{gpt_forward.12} parent=5 // pred_check_branch
        %126 = sbr.rel (%p123) target = $region12
      $region11: #{gpt_forward.12} parent=5 // pred_region
        %s127 = ssub.s32 %s9, 1
      $region12: #{gpt_forward.12} parent=5 // pred_fallthru
        _
      %p128 = scmp.lt.s32.totalorder %s9, 2
      // Predicated region
      $region13: #{gpt_forward.12} parent=5 // pred_check
        %p129 = pneg %p128
      $region14: #{gpt_forward.12} parent=5 // pred_check_branch
        %131 = sbr.rel (%p129) target = $region16
      $region15: #{gpt_forward.12} parent=5 // pred_region
        // Predicated region
        $region17: #{gpt_forward.12} parent=15 // pred_check
          %p132 = pneg %p29
        $region18: #{gpt_forward.12} parent=15 // pred_check_branch
          %134 = sbr.rel (%p132) target = $region20
        $region19: #{gpt_forward.12} parent=15 // pred_region
          %s135 = sand.u32 %s19, 1
          %s136 = sand.u32 %s19, 1
          %s137 = smul.addr %s136, 16
          %s138 = scalar_lea.vmem [#allocation2], %s137
          %s139 = smul.u32 2, %s9
          %s140 = smul.addr %s139, 3
          %s141 = smul.addr %s140, 8
          %s142 = scalar_lea.vmem %s0, %s141
          // Predicated region
          $region21: #{gpt_forward.12} parent=19 // pred_check
            _
          $region22: #{gpt_forward.12} parent=19 // pred_check_branch
            %144 = sbr.rel (0) target = $region24
          $region23: #{gpt_forward.12} parent=19 // pred_region
            // Predicated region
            $region25: #{gpt_forward.12} parent=23 // pred_check
              _
            $region26: #{gpt_forward.12} parent=23 // pred_check_branch
              %146 = sbr.rel (0) target = $region28
            $region27: #{gpt_forward.12} parent=23 // pred_region
              // Predicated region
              $region40: #{gpt_forward.12} parent=27 // pred_check
                _
              $region41: #{gpt_forward.12} parent=27 // pred_check_branch
                %164 = sbr.rel (0) target = $region43
              $region42: #{gpt_forward.12} parent=27 // pred_region
                loop: start=0, step=1, limit=1
                $region44: #{gpt_forward.12} parent=42 // loop_pre_header
                  _
                $region45: #{gpt_forward.12} parent=42 // loop_header
                  %s166 = sphi 0, %s170
                  %p167 = scmp.ge.s32.totalorder %s166, 1
                  %s171 = sphi %s142, %s142
                  %s172 = sphi %s138, %s138
                $region46: #{gpt_forward.12} parent=42 // loop_header_branch
                  %169 = sbr.rel (%p167) target = $region50
                $region47: #{gpt_forward.12} parent=42 // loop_body
                  %v173 = vld [vmem:[%s171] sm:$0xff]
                  %174 = vst [vmem:[%s172] sm:$0xff] %v173
                  %v175 = vld [vmem:[%s171 + $0x18] sm:$0xff]
                  %176 = vst [vmem:[%s172 + $0x8] sm:$0xff] %v175
                $region48: #{gpt_forward.12} parent=42 // loop_footer
                  %s170 = sadd.s32 1, %s166
                $region49: #{gpt_forward.12} parent=42 // loop_footer_branch
                  %165 = sbr.rel target = $region45
                $region50: #{gpt_forward.12} parent=42 // loop_exit
                  _
              $region43: #{gpt_forward.12} parent=27 // pred_fallthru
                _
              // Predicated region
              $region51: #{gpt_forward.12} parent=27 // pred_check
                _
              $region52: #{gpt_forward.12} parent=27 // pred_check_branch
                %178 = sbr.rel target = $region54
              $region53: #{gpt_forward.12} parent=27 // pred_region
                _
              $region54: #{gpt_forward.12} parent=27 // pred_fallthru
                _
            $region28: #{gpt_forward.12} parent=23 // pred_fallthru
              _
            // Predicated region
            $region29: #{gpt_forward.12} parent=23 // pred_check
              _
            $region30: #{gpt_forward.12} parent=23 // pred_check_branch
              %148 = sbr.rel target = $region32
            $region31: #{gpt_forward.12} parent=23 // pred_region
              %s150 = ssub.s32 256, 1
              loop: start=0, step=1, limit=1
              $region33: #{gpt_forward.12} parent=31 // loop_pre_header
                _
              $region34: #{gpt_forward.12} parent=31 // loop_header
                %s152 = sphi 0, %s156
                %p153 = scmp.ge.s32.totalorder %s152, 1
                %s157 = sphi %s142, %s142
                %s158 = sphi %s138, %s138
              $region35: #{gpt_forward.12} parent=31 // loop_header_branch
                %155 = sbr.rel (%p153) target = $region39
              $region36: #{gpt_forward.12} parent=31 // loop_body
                %v159 = vld [vmem:[%s157] sm:%s150]
                %160 = vst [vmem:[%s158] sm:%s150] %v159
                %v161 = vld [vmem:[%s157 + $0x18] sm:%s150]
                %162 = vst [vmem:[%s158 + $0x8] sm:%s150] %v161
              $region37: #{gpt_forward.12} parent=31 // loop_footer
                %s156 = sadd.s32 1, %s152
              $region38: #{gpt_forward.12} parent=31 // loop_footer_branch
                %151 = sbr.rel target = $region34
              $region39: #{gpt_forward.12} parent=31 // loop_exit
                _
            $region32: #{gpt_forward.12} parent=23 // pred_fallthru
              _
          $region24: #{gpt_forward.12} parent=19 // pred_fallthru
            _
          %179 = vnop
        $region20: #{gpt_forward.12} parent=15 // pred_fallthru
          _
        // Predicated region
        $region55: #{gpt_forward.12} parent=15 // pred_check
          %p180 = pneg %p55
        $region56: #{gpt_forward.12} parent=15 // pred_check_branch
          %182 = sbr.rel (%p180) target = $region58
        $region57: #{gpt_forward.12} parent=15 // pred_region
          %s183 = sand.u32 %s45, 1
          %s184 = sand.u32 %s45, 1
          %s185 = smul.addr %s184, 16
          %s186 = scalar_lea.vmem [#allocation3], %s185
          %s187 = smul.u32 2, %s9
          %s188 = smul.addr %s187, 3
          %s189 = sadd.s32 1, %s188
          %s190 = smul.addr %s189, 8
          %s191 = scalar_lea.vmem %s1, %s190
          // Predicated region
          $region59: #{gpt_forward.12} parent=57 // pred_check
            _
          $region60: #{gpt_forward.12} parent=57 // pred_check_branch
            %193 = sbr.rel (0) target = $region62
          $region61: #{gpt_forward.12} parent=57 // pred_region
            // Predicated region
            $region63: #{gpt_forward.12} parent=61 // pred_check
              _
            $region64: #{gpt_forward.12} parent=61 // pred_check_branch
              %195 = sbr.rel (0) target = $region66
            $region65: #{gpt_forward.12} parent=61 // pred_region
              // Predicated region
              $region78: #{gpt_forward.12} parent=65 // pred_check
                _
              $region79: #{gpt_forward.12} parent=65 // pred_check_branch
                %213 = sbr.rel (0) target = $region81
              $region80: #{gpt_forward.12} parent=65 // pred_region
                loop: start=0, step=1, limit=1
                $region82: #{gpt_forward.12} parent=80 // loop_pre_header
                  _
                $region83: #{gpt_forward.12} parent=80 // loop_header
                  %s215 = sphi 0, %s219
                  %p216 = scmp.ge.s32.totalorder %s215, 1
                  %s220 = sphi %s191, %s191
                  %s221 = sphi %s186, %s186
                $region84: #{gpt_forward.12} parent=80 // loop_header_branch
                  %218 = sbr.rel (%p216) target = $region88
                $region85: #{gpt_forward.12} parent=80 // loop_body
                  %v222 = vld [vmem:[%s220] sm:$0xff]
                  %223 = vst [vmem:[%s221] sm:$0xff] %v222
                  %v224 = vld [vmem:[%s220 + $0x18] sm:$0xff]
                  %225 = vst [vmem:[%s221 + $0x8] sm:$0xff] %v224
                $region86: #{gpt_forward.12} parent=80 // loop_footer
                  %s219 = sadd.s32 1, %s215
                $region87: #{gpt_forward.12} parent=80 // loop_footer_branch
                  %214 = sbr.rel target = $region83
                $region88: #{gpt_forward.12} parent=80 // loop_exit
                  _
              $region81: #{gpt_forward.12} parent=65 // pred_fallthru
                _
              // Predicated region
              $region89: #{gpt_forward.12} parent=65 // pred_check
                _
              $region90: #{gpt_forward.12} parent=65 // pred_check_branch
                %227 = sbr.rel target = $region92
              $region91: #{gpt_forward.12} parent=65 // pred_region
                _
              $region92: #{gpt_forward.12} parent=65 // pred_fallthru
                _
            $region66: #{gpt_forward.12} parent=61 // pred_fallthru
              _
            // Predicated region
            $region67: #{gpt_forward.12} parent=61 // pred_check
              _
            $region68: #{gpt_forward.12} parent=61 // pred_check_branch
              %197 = sbr.rel target = $region70
            $region69: #{gpt_forward.12} parent=61 // pred_region
              %s199 = ssub.s32 256, 1
              loop: start=0, step=1, limit=1
              $region71: #{gpt_forward.12} parent=69 // loop_pre_header
                _
              $region72: #{gpt_forward.12} parent=69 // loop_header
                %s201 = sphi 0, %s205
                %p202 = scmp.ge.s32.totalorder %s201, 1
                %s206 = sphi %s191, %s191
                %s207 = sphi %s186, %s186
              $region73: #{gpt_forward.12} parent=69 // loop_header_branch
                %204 = sbr.rel (%p202) target = $region77
              $region74: #{gpt_forward.12} parent=69 // loop_body
                %v208 = vld [vmem:[%s206] sm:%s199]
                %209 = vst [vmem:[%s207] sm:%s199] %v208
                %v210 = vld [vmem:[%s206 + $0x18] sm:%s199]
                %211 = vst [vmem:[%s207 + $0x8] sm:%s199] %v210
              $region75: #{gpt_forward.12} parent=69 // loop_footer
                %s205 = sadd.s32 1, %s201
              $region76: #{gpt_forward.12} parent=69 // loop_footer_branch
                %200 = sbr.rel target = $region72
              $region77: #{gpt_forward.12} parent=69 // loop_exit
                _
            $region70: #{gpt_forward.12} parent=61 // pred_fallthru
              _
          $region62: #{gpt_forward.12} parent=57 // pred_fallthru
            _
          %228 = vnop
        $region58: #{gpt_forward.12} parent=15 // pred_fallthru
          _
        // Predicated region
        $region93: #{gpt_forward.12} parent=15 // pred_check
          %p229 = pneg %p81
        $region94: #{gpt_forward.12} parent=15 // pred_check_branch
          %231 = sbr.rel (%p229) target = $region96
        $region95: #{gpt_forward.12} parent=15 // pred_region
          %s232 = sand.u32 %s71, 1
          %s233 = sand.u32 %s71, 1
          %s234 = smul.addr %s233, 16
          %s235 = scalar_lea.vmem [#allocation4], %s234
          %s236 = smul.u32 2, %s9
          %s237 = smul.addr %s236, 3
          %s238 = sadd.s32 2, %s237
          %s239 = smul.addr %s238, 8
          %s240 = scalar_lea.vmem %s2, %s239
          // Predicated region
          $region97: #{gpt_forward.12} parent=95 // pred_check
            _
          $region98: #{gpt_forward.12} parent=95 // pred_check_branch
            %242 = sbr.rel (0) target = $region100
          $region99: #{gpt_forward.12} parent=95 // pred_region
            // Predicated region
            $region101: #{gpt_forward.12} parent=99 // pred_check
              _
            $region102: #{gpt_forward.12} parent=99 // pred_check_branch
              %244 = sbr.rel (0) target = $region104
            $region103: #{gpt_forward.12} parent=99 // pred_region
              // Predicated region
              $region116: #{gpt_forward.12} parent=103 // pred_check
                _
              $region117: #{gpt_forward.12} parent=103 // pred_check_branch
                %262 = sbr.rel (0) target = $region119
              $region118: #{gpt_forward.12} parent=103 // pred_region
                loop: start=0, step=1, limit=1
                $region120: #{gpt_forward.12} parent=118 // loop_pre_header
                  _
                $region121: #{gpt_forward.12} parent=118 // loop_header
                  %s264 = sphi 0, %s268
                  %p265 = scmp.ge.s32.totalorder %s264, 1
                  %s269 = sphi %s240, %s240
                  %s270 = sphi %s235, %s235
                $region122: #{gpt_forward.12} parent=118 // loop_header_branch
                  %267 = sbr.rel (%p265) target = $region126
                $region123: #{gpt_forward.12} parent=118 // loop_body
                  %v271 = vld [vmem:[%s269] sm:$0xff]
                  %272 = vst [vmem:[%s270] sm:$0xff] %v271
                  %v273 = vld [vmem:[%s269 + $0x18] sm:$0xff]
                  %274 = vst [vmem:[%s270 + $0x8] sm:$0xff] %v273
                $region124: #{gpt_forward.12} parent=118 // loop_footer
                  %s268 = sadd.s32 1, %s264
                $region125: #{gpt_forward.12} parent=118 // loop_footer_branch
                  %263 = sbr.rel target = $region121
                $region126: #{gpt_forward.12} parent=118 // loop_exit
                  _
              $region119: #{gpt_forward.12} parent=103 // pred_fallthru
                _
              // Predicated region
              $region127: #{gpt_forward.12} parent=103 // pred_check
                _
              $region128: #{gpt_forward.12} parent=103 // pred_check_branch
                %276 = sbr.rel target = $region130
              $region129: #{gpt_forward.12} parent=103 // pred_region
                _
              $region130: #{gpt_forward.12} parent=103 // pred_fallthru
                _
            $region104: #{gpt_forward.12} parent=99 // pred_fallthru
              _
            // Predicated region
            $region105: #{gpt_forward.12} parent=99 // pred_check
              _
            $region106: #{gpt_forward.12} parent=99 // pred_check_branch
              %246 = sbr.rel target = $region108
            $region107: #{gpt_forward.12} parent=99 // pred_region
              %s248 = ssub.s32 256, 1
              loop: start=0, step=1, limit=1
              $region109: #{gpt_forward.12} parent=107 // loop_pre_header
                _
              $region110: #{gpt_forward.12} parent=107 // loop_header
                %s250 = sphi 0, %s254
                %p251 = scmp.ge.s32.totalorder %s250, 1
                %s255 = sphi %s240, %s240
                %s256 = sphi %s235, %s235
              $region111: #{gpt_forward.12} parent=107 // loop_header_branch
                %253 = sbr.rel (%p251) target = $region115
              $region112: #{gpt_forward.12} parent=107 // loop_body
                %v257 = vld [vmem:[%s255] sm:%s248]
                %258 = vst [vmem:[%s256] sm:%s248] %v257
                %v259 = vld [vmem:[%s255 + $0x18] sm:%s248]
                %260 = vst [vmem:[%s256 + $0x8] sm:%s248] %v259
              $region113: #{gpt_forward.12} parent=107 // loop_footer
                %s254 = sadd.s32 1, %s250
              $region114: #{gpt_forward.12} parent=107 // loop_footer_branch
                %249 = sbr.rel target = $region110
              $region115: #{gpt_forward.12} parent=107 // loop_exit
                _
            $region108: #{gpt_forward.12} parent=99 // pred_fallthru
              _
          $region100: #{gpt_forward.12} parent=95 // pred_fallthru
            _
          %277 = vnop
        $region96: #{gpt_forward.12} parent=15 // pred_fallthru
          _
      $region16: #{gpt_forward.12} parent=5 // pred_fallthru
        _
      %p278 = scmp.le.s32.totalorder 1, %s9
      %p279 = scmp.lt.s32.totalorder %s9, 3
      %p280 = pnand %p278, %p279
      %p281 = pneg %p280
      // Predicated region
      $region131: #{gpt_forward.12} parent=5 // pred_check
        _
      $region132: #{gpt_forward.12} parent=5 // pred_check_branch
        %283 = sbr.rel (%p280) target = $region134
      $region133: #{gpt_forward.12} parent=5 // pred_region
        %s284 = ssub.s32 %s9, 1
        %s285 = sand.u32 %s22, 1
        %s286 = sand.u32 %s22, 1
        %s287 = smul.addr %s286, 16
        %s288 = scalar_lea.vmem [#allocation2], %s287
        // Predicated region
        $region135: #{gpt_forward.12} parent=133 // pred_check
          %p289 = pneg %p35
        $region136: #{gpt_forward.12} parent=133 // pred_check_branch
          %291 = sbr.rel (%p289) target = $region138
        $region137: #{gpt_forward.12} parent=133 // pred_region
          _
        $region138: #{gpt_forward.12} parent=133 // pred_fallthru
          _
        %s292 = sand.u32 %s48, 1
        %s293 = sand.u32 %s48, 1
        %s294 = smul.addr %s293, 16
        %s295 = scalar_lea.vmem [#allocation3], %s294
        // Predicated region
        $region139: #{gpt_forward.12} parent=133 // pred_check
          %p296 = pneg %p61
        $region140: #{gpt_forward.12} parent=133 // pred_check_branch
          %298 = sbr.rel (%p296) target = $region142
        $region141: #{gpt_forward.12} parent=133 // pred_region
          _
        $region142: #{gpt_forward.12} parent=133 // pred_fallthru
          _
        %s299 = sand.u32 %s74, 1
        %s300 = sand.u32 %s74, 1
        %s301 = smul.addr %s300, 16
        %s302 = scalar_lea.vmem [#allocation4], %s301
        // Predicated region
        $region143: #{gpt_forward.12} parent=133 // pred_check
          %p303 = pneg %p87
        $region144: #{gpt_forward.12} parent=133 // pred_check_branch
          %305 = sbr.rel (%p303) target = $region146
        $region145: #{gpt_forward.12} parent=133 // pred_region
          _
        $region146: #{gpt_forward.12} parent=133 // pred_fallthru
          _
        %s306 = sand.u32 %s22, 1
        %s307 = sand.u32 %s22, 1
        %s308 = smul.addr %s307, 16
        %s309 = scalar_lea.vmem [#allocation2], %s308
        %p310 = pneg %p35
        %p311 = pneg %p32
        %s312 = sand.u32 %s48, 1
        %s313 = sand.u32 %s48, 1
        %s314 = smul.addr %s313, 16
        %s315 = scalar_lea.vmem [#allocation3], %s314
        %p316 = pneg %p61
        %p317 = pneg %p58
        %s318 = sand.u32 %s74, 1
        %s319 = sand.u32 %s74, 1
        %s320 = smul.addr %s319, 16
        %s321 = scalar_lea.vmem [#allocation4], %s320
        %p322 = pneg %p87
        %p323 = pneg %p84
        %p324 = pneg %p113
        %p325 = pneg %p110
        %s326 = smul.u32 2, %s14
        %p327 = scmp.lt.s32.totalorder %s326, 3
        %s328 = scalar_select %p327, %s326, 3
        %s329 = smul.addr %s328, 8
        %s330 = scalar_lea.vmem %s3, %s329
        %s331 = smul.u32 2, %s14
        %s332 = smul.u32 2, %s14
        %s333 = smul.u32 2, %s14
        %s334 = smul.u32 2, %s14
        %p335 = scmp.lt.s32.totalorder %s334, 3
        %s336 = scalar_select %p335, %s334, 3
        %s337 = smul.addr %s336, 8
        %s338 = scalar_lea.vmem %s3, %s337
        %s339 = smul.u32 2, %s14
        %v340 = vld [vmem:[%s288] sm:$0xff]
        %v341 = vld [vmem:[%s288 + $0x8] sm:$0xff]
        %v342 = vld [vmem:[%s295] sm:$0xff]
        %v343 = vld [vmem:[%s295 + $0x8] sm:$0xff]
        %v344 = vld [vmem:[%s302] sm:$0xff]
        %v345 = vld [vmem:[%s302 + $0x8] sm:$0xff]
        %v346 = vlaneseq
        %v347 = vshrl.u32 %v346, 7
        %v348 = vadd.s32 %v347, 8
        %v349 = vlaneseq
        %v350 = vand.u32 %v349, 127
        %vm351 = vcmp.ge.s32.totalorder %v347, %v350
        %vm352 = vcmp.ge.s32.totalorder %v348, %v350
        %vm353 = vcmask 261120
        %v355 = vsel %vm353, %v340, 0
        %v358 = vsel %vm353, %v341, 0
        %v361 = vsel %vm353, %v342, 0
        %v364 = vsel %vm353, %v343, 0
        %366 = vmatpush.xpose.msra.mxu0 0.0
        %367 = vmatpush.xpose.msra.mxu0 0.0
        %368 = vmatpush.xpose.msra.mxu0 0.0
        %369 = vmatpush.xpose.msra.mxu0 0.0
        %370 = vmatpush.xpose.msra.mxu0 0.0
        %371 = vmatpush.xpose.msra.mxu0 0.0
        %372 = vmatpush.xpose.msra.mxu0 0.0
        %373 = vmatpush.xpose.msra.mxu0 0.0
        %374 = vmatpush.xpose.msra.mxu0 0.0
        %375 = vmatpush.xpose.msra.mxu0 0.0
        %376 = vmatpush.xpose.msra.mxu0 0.0
        %377 = vmatpush.xpose.msra.mxu0 0.0
        %378 = vmatpush.xpose.msra.mxu0 0.0
        %379 = vmatpush.xpose.msra.mxu0 0.0
        %380 = vmatpush.xpose.msra.mxu0 %v364
        %381 = vmatpush.xpose.msra.mxu0 %v361
        %382 = vmatmul.f32.gmra.mxu0 %v355
        %v383 = vpop.f32.mrf.mxu0
        %v384 = vadd.f32 0.0, %v383
        %385 = vmatmul.f32.gmra.mxu0 %v358
        %v386 = vpop.f32.mrf.mxu0
        %v387 = vadd.f32 0.0, %v386
        %388 = vdwg.mxu0
        %v389 = vmul.f32 %v384, 0.17677669
        %v390 = vmul.f32 %v387, 0.17677669
        %v391 = vsel %vm351, %v389, -1e+30
        %v392 = vsel %vm352, %v390, -1e+30
        %vm393 = vcmask 130048
        %v394 = vsel %vm393, %v391, -inf
        %395 = vmax.xlane.f32.xlu0 %v394
        %v396 = vpop.xlane.xlu0 %395
        %v397 = vsel %vm393, %v392, -inf
        %398 = vmax.xlane.f32.xlu0 %v397
        %v399 = vpop.xlane.xlu0 %398
        %v400 = vsub.f32 %v391, %v396
        %v401 = vsub.f32 %v392, %v399
        %v402 = vmul.f32 %v400, 1.442695
        %v403 = vpow.pop %v402
        %v404 = vmul.f32 %v401, 1.442695
        %v405 = vpow.pop %v404
        %v406 = vsel %vm393, %v403, 0.0
        %407 = vadd.xlane.f32.xlu0 %v406
        %v408 = vpop.xlane.xlu0 %407
        %v409 = vsel %vm393, %v405, 0.0
        %410 = vadd.xlane.f32.xlu0 %v409
        %v411 = vpop.xlane.xlu0 %410
        %v412 = vrcp.pop %v408
        %v413 = vrcp.pop %v411
        %v414 = vmul.f32 %v403, %v412
        %v415 = vmul.f32 %v405, %v413
        %v417 = vsel %vm393, %v414, 0
        %v420 = vsel %vm393, %v415, 0
        %422 = vmatpush.msra.mxu0 0.0
        %423 = vmatpush.msra.mxu0 0.0
        %424 = vmatpush.msra.mxu0 0.0
        %425 = vmatpush.msra.mxu0 0.0
        %426 = vmatpush.msra.mxu0 0.0
        %427 = vmatpush.msra.mxu0 0.0
        %428 = vmatpush.msra.mxu0 0.0
        %429 = vmatpush.msra.mxu0 0.0
        %430 = vmatpush.msra.mxu0 0.0
        %431 = vmatpush.msra.mxu0 0.0
        %432 = vmatpush.msra.mxu0 0.0
        %433 = vmatpush.msra.mxu0 0.0
        %434 = vmatpush.msra.mxu0 0.0
        %435 = vmatpush.msra.mxu0 0.0
        %436 = vmatpush.msra.mxu0 %v345
        %437 = vmatpush.msra.mxu0 %v344
        %438 = vmatmul.f32.gmra.mxu0 %v417
        %v439 = vpop.f32.mrf.mxu0
        %v440 = vadd.f32 0.0, %v439
        %441 = vmatmul.f32.gmra.mxu0 %v420
        %v442 = vpop.f32.mrf.mxu0
        %v443 = vadd.f32 0.0, %v442
        %444 = vdwg.mxu0
        %445 = vrot.lane.b32.xlu0 %v340, 96
        %v446 = vpop.permute.xlu0 %445
        %447 = vrot.lane.b32.xlu0 %v341, 96
        %v448 = vpop.permute.xlu0 %447
        %449 = vrot.lane.b32.xlu0 %v342, 96
        %v450 = vpop.permute.xlu0 %449
        %451 = vrot.lane.b32.xlu0 %v343, 96
        %v452 = vpop.permute.xlu0 %451
        %v453 = vsel %vm353, %v446, 0
        %v455 = vsel %vm353, %v448, 0
        %v457 = vsel %vm353, %v450, 0
        %v459 = vsel %vm353, %v452, 0
        %461 = vmatpush.xpose.msra.mxu0 0.0
        %462 = vmatpush.xpose.msra.mxu0 0.0
        %463 = vmatpush.xpose.msra.mxu0 0.0
        %464 = vmatpush.xpose.msra.mxu0 0.0
        %465 = vmatpush.xpose.msra.mxu0 0.0
        %466 = vmatpush.xpose.msra.mxu0 0.0
        %467 = vmatpush.xpose.msra.mxu0 0.0
        %468 = vmatpush.xpose.msra.mxu0 0.0
        %469 = vmatpush.xpose.msra.mxu0 0.0
        %470 = vmatpush.xpose.msra.mxu0 0.0
        %471 = vmatpush.xpose.msra.mxu0 0.0
        %472 = vmatpush.xpose.msra.mxu0 0.0
        %473 = vmatpush.xpose.msra.mxu0 0.0
        %474 = vmatpush.xpose.msra.mxu0 0.0
        %475 = vmatpush.xpose.msra.mxu0 %v459
        %476 = vmatpush.xpose.msra.mxu0 %v457
        %477 = vmatmul.f32.gmra.mxu0 %v453
        %v478 = vpop.f32.mrf.mxu0
        %v479 = vadd.f32 0.0, %v478
        %480 = vmatmul.f32.gmra.mxu0 %v455
        %v481 = vpop.f32.mrf.mxu0
        %v482 = vadd.f32 0.0, %v481
        %483 = vdwg.mxu0
        %v484 = vmul.f32 %v479, 0.17677669
        %v485 = vmul.f32 %v482, 0.17677669
        %v486 = vsel %vm351, %v484, -1e+30
        %v487 = vsel %vm352, %v485, -1e+30
        %v488 = vsel %vm393, %v486, -inf
        %489 = vmax.xlane.f32.xlu0 %v488
        %v490 = vpop.xlane.xlu0 %489
        %v491 = vsel %vm393, %v487, -inf
        %492 = vmax.xlane.f32.xlu0 %v491
        %v493 = vpop.xlane.xlu0 %492
        %v494 = vsub.f32 %v486, %v490
        %v495 = vsub.f32 %v487, %v493
        %v496 = vmul.f32 %v494, 1.442695
        %v497 = vpow.pop %v496
        %v498 = vmul.f32 %v495, 1.442695
        %v499 = vpow.pop %v498
        %v500 = vsel %vm393, %v497, 0.0
        %501 = vadd.xlane.f32.xlu0 %v500
        %v502 = vpop.xlane.xlu0 %501
        %v503 = vsel %vm393, %v499, 0.0
        %504 = vadd.xlane.f32.xlu0 %v503
        %v505 = vpop.xlane.xlu0 %504
        %v506 = vrcp.pop %v502
        %v507 = vrcp.pop %v505
        %v508 = vmul.f32 %v497, %v506
        %v509 = vmul.f32 %v499, %v507
        %512 = vrot.lane.b32.xlu0 %v344, 96
        %v513 = vpop.permute.xlu0 %512
        %514 = vrot.lane.b32.xlu0 %v345, 96
        %v515 = vpop.permute.xlu0 %514
        %v519 = vsel %vm393, %v508, 0
        %v522 = vsel %vm393, %v509, 0
        %524 = vmatpush.msra.mxu0 0.0
        %525 = vmatpush.msra.mxu0 0.0
        %526 = vmatpush.msra.mxu0 0.0
        %527 = vmatpush.msra.mxu0 0.0
        %528 = vmatpush.msra.mxu0 0.0
        %529 = vmatpush.msra.mxu0 0.0
        %530 = vmatpush.msra.mxu0 0.0
        %531 = vmatpush.msra.mxu0 0.0
        %532 = vmatpush.msra.mxu0 0.0
        %533 = vmatpush.msra.mxu0 0.0
        %534 = vmatpush.msra.mxu0 0.0
        %535 = vmatpush.msra.mxu0 0.0
        %536 = vmatpush.msra.mxu0 0.0
        %537 = vmatpush.msra.mxu0 0.0
        %538 = vmatpush.msra.mxu0 %v515
        %539 = vmatpush.msra.mxu0 %v513
        %540 = vmatmul.f32.gmra.mxu0 %v519
        %v541 = vpop.f32.mrf.mxu0
        %v542 = vadd.f32 0.0, %v541
        %543 = vmatmul.f32.gmra.mxu0 %v522
        %v544 = vpop.f32.mrf.mxu0
        %v545 = vadd.f32 0.0, %v544
        %546 = vdwg.mxu0
        %547 = vrot.lane.b32.xlu0 %v340, 64
        %v548 = vpop.permute.xlu0 %547
        %549 = vrot.lane.b32.xlu0 %v341, 64
        %v550 = vpop.permute.xlu0 %549
        %551 = vrot.lane.b32.xlu0 %v342, 64
        %v552 = vpop.permute.xlu0 %551
        %553 = vrot.lane.b32.xlu0 %v343, 64
        %v554 = vpop.permute.xlu0 %553
        %v555 = vsel %vm353, %v548, 0
        %v557 = vsel %vm353, %v550, 0
        %v559 = vsel %vm353, %v552, 0
        %v561 = vsel %vm353, %v554, 0
        %563 = vmatpush.xpose.msra.mxu0 0.0
        %564 = vmatpush.xpose.msra.mxu0 0.0
        %565 = vmatpush.xpose.msra.mxu0 0.0
        %566 = vmatpush.xpose.msra.mxu0 0.0
        %567 = vmatpush.xpose.msra.mxu0 0.0
        %568 = vmatpush.xpose.msra.mxu0 0.0
        %569 = vmatpush.xpose.msra.mxu0 0.0
        %570 = vmatpush.xpose.msra.mxu0 0.0
        %571 = vmatpush.xpose.msra.mxu0 0.0
        %572 = vmatpush.xpose.msra.mxu0 0.0
        %573 = vmatpush.xpose.msra.mxu0 0.0
        %574 = vmatpush.xpose.msra.mxu0 0.0
        %575 = vmatpush.xpose.msra.mxu0 0.0
        %576 = vmatpush.xpose.msra.mxu0 0.0
        %577 = vmatpush.xpose.msra.mxu0 %v561
        %578 = vmatpush.xpose.msra.mxu0 %v559
        %579 = vmatmul.f32.gmra.mxu0 %v555
        %v580 = vpop.f32.mrf.mxu0
        %v581 = vadd.f32 0.0, %v580
        %582 = vmatmul.f32.gmra.mxu0 %v557
        %v583 = vpop.f32.mrf.mxu0
        %v584 = vadd.f32 0.0, %v583
        %585 = vdwg.mxu0
        %v586 = vmul.f32 %v581, 0.17677669
        %v587 = vmul.f32 %v584, 0.17677669
        %v588 = vsel %vm351, %v586, -1e+30
        %v589 = vsel %vm352, %v587, -1e+30
        %v590 = vsel %vm393, %v588, -inf
        %591 = vmax.xlane.f32.xlu0 %v590
        %v592 = vpop.xlane.xlu0 %591
        %v593 = vsel %vm393, %v589, -inf
        %594 = vmax.xlane.f32.xlu0 %v593
        %v595 = vpop.xlane.xlu0 %594
        %v596 = vsub.f32 %v588, %v592
        %v597 = vsub.f32 %v589, %v595
        %v598 = vmul.f32 %v596, 1.442695
        %v599 = vpow.pop %v598
        %v600 = vmul.f32 %v597, 1.442695
        %v601 = vpow.pop %v600
        %v602 = vsel %vm393, %v599, 0.0
        %603 = vadd.xlane.f32.xlu0 %v602
        %v604 = vpop.xlane.xlu0 %603
        %v605 = vsel %vm393, %v601, 0.0
        %606 = vadd.xlane.f32.xlu0 %v605
        %v607 = vpop.xlane.xlu0 %606
        %v608 = vrcp.pop %v604
        %v609 = vrcp.pop %v607
        %v610 = vmul.f32 %v599, %v608
        %v611 = vmul.f32 %v601, %v609
        %612 = vrot.lane.b32.xlu0 %v344, 64
        %v613 = vpop.permute.xlu0 %612
        %614 = vrot.lane.b32.xlu0 %v345, 64
        %v615 = vpop.permute.xlu0 %614
        %v619 = vsel %vm393, %v610, 0
        %v622 = vsel %vm393, %v611, 0
        %624 = vmatpush.msra.mxu0 0.0
        %625 = vmatpush.msra.mxu0 0.0
        %626 = vmatpush.msra.mxu0 0.0
        %627 = vmatpush.msra.mxu0 0.0
        %628 = vmatpush.msra.mxu0 0.0
        %629 = vmatpush.msra.mxu0 0.0
        %630 = vmatpush.msra.mxu0 0.0
        %631 = vmatpush.msra.mxu0 0.0
        %632 = vmatpush.msra.mxu0 0.0
        %633 = vmatpush.msra.mxu0 0.0
        %634 = vmatpush.msra.mxu0 0.0
        %635 = vmatpush.msra.mxu0 0.0
        %636 = vmatpush.msra.mxu0 0.0
        %637 = vmatpush.msra.mxu0 0.0
        %638 = vmatpush.msra.mxu0 %v615
        %639 = vmatpush.msra.mxu0 %v613
        %640 = vmatmul.f32.gmra.mxu0 %v619
        %v641 = vpop.f32.mrf.mxu0
        %v642 = vadd.f32 0.0, %v641
        %643 = vmatmul.f32.gmra.mxu0 %v622
        %v644 = vpop.f32.mrf.mxu0
        %v645 = vadd.f32 0.0, %v644
        %646 = vdwg.mxu0
        %647 = vrot.lane.b32.xlu0 %v340, 32
        %v648 = vpop.permute.xlu0 %647
        %649 = vrot.lane.b32.xlu0 %v341, 32
        %v650 = vpop.permute.xlu0 %649
        %651 = vrot.lane.b32.xlu0 %v342, 32
        %v652 = vpop.permute.xlu0 %651
        %653 = vrot.lane.b32.xlu0 %v343, 32
        %v654 = vpop.permute.xlu0 %653
        %v655 = vsel %vm353, %v648, 0
        %v657 = vsel %vm353, %v650, 0
        %v659 = vsel %vm353, %v652, 0
        %v661 = vsel %vm353, %v654, 0
        %663 = vmatpush.xpose.msra.mxu0 0.0
        %664 = vmatpush.xpose.msra.mxu0 0.0
        %665 = vmatpush.xpose.msra.mxu0 0.0
        %666 = vmatpush.xpose.msra.mxu0 0.0
        %667 = vmatpush.xpose.msra.mxu0 0.0
        %668 = vmatpush.xpose.msra.mxu0 0.0
        %669 = vmatpush.xpose.msra.mxu0 0.0
        %670 = vmatpush.xpose.msra.mxu0 0.0
        %671 = vmatpush.xpose.msra.mxu0 0.0
        %672 = vmatpush.xpose.msra.mxu0 0.0
        %673 = vmatpush.xpose.msra.mxu0 0.0
        %674 = vmatpush.xpose.msra.mxu0 0.0
        %675 = vmatpush.xpose.msra.mxu0 0.0
        %676 = vmatpush.xpose.msra.mxu0 0.0
        %677 = vmatpush.xpose.msra.mxu0 %v661
        %678 = vmatpush.xpose.msra.mxu0 %v659
        %679 = vmatmul.f32.gmra.mxu0 %v655
        %v680 = vpop.f32.mrf.mxu0
        %v681 = vadd.f32 0.0, %v680
        %682 = vmatmul.f32.gmra.mxu0 %v657
        %v683 = vpop.f32.mrf.mxu0
        %v684 = vadd.f32 0.0, %v683
        %685 = vdwg.mxu0
        %v686 = vmul.f32 %v681, 0.17677669
        %v687 = vmul.f32 %v684, 0.17677669
        %v688 = vsel %vm351, %v686, -1e+30
        %v689 = vsel %vm352, %v687, -1e+30
        %v690 = vsel %vm393, %v688, -inf
        %691 = vmax.xlane.f32.xlu0 %v690
        %v692 = vpop.xlane.xlu0 %691
        %v693 = vsel %vm393, %v689, -inf
        %694 = vmax.xlane.f32.xlu0 %v693
        %v695 = vpop.xlane.xlu0 %694
        %v696 = vsub.f32 %v688, %v692
        %v697 = vsub.f32 %v689, %v695
        %v698 = vmul.f32 %v696, 1.442695
        %v699 = vpow.pop %v698
        %v700 = vmul.f32 %v697, 1.442695
        %v701 = vpow.pop %v700
        %v702 = vsel %vm393, %v699, 0.0
        %703 = vadd.xlane.f32.xlu0 %v702
        %v704 = vpop.xlane.xlu0 %703
        %v705 = vsel %vm393, %v701, 0.0
        %706 = vadd.xlane.f32.xlu0 %v705
        %v707 = vpop.xlane.xlu0 %706
        %v708 = vrcp.pop %v704
        %v709 = vrcp.pop %v707
        %v710 = vmul.f32 %v699, %v708
        %v711 = vmul.f32 %v701, %v709
        %712 = vrot.lane.b32.xlu0 %v344, 32
        %v713 = vpop.permute.xlu0 %712
        %714 = vrot.lane.b32.xlu0 %v345, 32
        %v715 = vpop.permute.xlu0 %714
        %v719 = vsel %vm393, %v710, 0
        %v722 = vsel %vm393, %v711, 0
        %724 = vmatpush.msra.mxu0 0.0
        %725 = vmatpush.msra.mxu0 0.0
        %726 = vmatpush.msra.mxu0 0.0
        %727 = vmatpush.msra.mxu0 0.0
        %728 = vmatpush.msra.mxu0 0.0
        %729 = vmatpush.msra.mxu0 0.0
        %730 = vmatpush.msra.mxu0 0.0
        %731 = vmatpush.msra.mxu0 0.0
        %732 = vmatpush.msra.mxu0 0.0
        %733 = vmatpush.msra.mxu0 0.0
        %734 = vmatpush.msra.mxu0 0.0
        %735 = vmatpush.msra.mxu0 0.0
        %736 = vmatpush.msra.mxu0 0.0
        %737 = vmatpush.msra.mxu0 0.0
        %738 = vmatpush.msra.mxu0 %v715
        %739 = vmatpush.msra.mxu0 %v713
        %740 = vmatmul.f32.gmra.mxu0 %v719
        %v741 = vpop.f32.mrf.mxu0
        %v742 = vadd.f32 0.0, %v741
        %743 = vmatmul.f32.gmra.mxu0 %v722
        %v744 = vpop.f32.mrf.mxu0
        %v745 = vadd.f32 0.0, %v744
        %746 = vdwg.mxu0
        %749 = vrot.lane.b32.xlu0 %v542, 32
        %v750 = vpop.permute.xlu0 %749
        %751 = vrot.lane.b32.xlu0 %v545, 32
        %v752 = vpop.permute.xlu0 %751
        %757 = vrot.lane.b32.xlu0 %v642, 64
        %v758 = vpop.permute.xlu0 %757
        %759 = vrot.lane.b32.xlu0 %v645, 64
        %v760 = vpop.permute.xlu0 %759
        %765 = vrot.lane.b32.xlu0 %v742, 96
        %v766 = vpop.permute.xlu0 %765
        %767 = vrot.lane.b32.xlu0 %v745, 96
        %v768 = vpop.permute.xlu0 %767
        %v771 = vsel %vm353, %v440, %v750
        %v772 = vsel %vm353, %v443, %v752
        %vm773 = vcmask 523264
        %v774 = vsel %vm773, %v771, %v758
        %v775 = vsel %vm773, %v772, %v760
        %vm776 = vcmask 785408
        %v777 = vsel %vm776, %v774, %v766
        %v778 = vsel %vm776, %v775, %v768
        %779 = vst [vmem:[%s338] sm:$0xff] %v777
        %780 = vst [vmem:[%s338 + $0x8] sm:$0xff] %v778
        %s781 = smul.u32 2, %s14
        %p782 = scmp.lt.s32.totalorder %s781, 3
        %s783 = scalar_select %p782, %s781, 3
        %s784 = smul.addr %s783, 8
        %s785 = scalar_lea.vmem %s3, %s784
        // Predicated region
        $region147: #{gpt_forward.12} parent=133 // pred_check
          %p786 = pneg %p110
        $region148: #{gpt_forward.12} parent=133 // pred_check_branch
          %788 = sbr.rel (%p786) target = $region150
        $region149: #{gpt_forward.12} parent=133 // pred_region
          %s789 = smul.u32 2, %s14
        $region150: #{gpt_forward.12} parent=133 // pred_fallthru
          _
      $region134: #{gpt_forward.12} parent=5 // pred_fallthru
        _
      %p790 = scmp.le.s32.totalorder 2, %s9
      // Predicated region
      $region151: #{gpt_forward.12} parent=5 // pred_check
        %p791 = pneg %p790
      $region152: #{gpt_forward.12} parent=5 // pred_check_branch
        %793 = sbr.rel (%p791) target = $region154
      $region153: #{gpt_forward.12} parent=5 // pred_region
        %s794 = ssub.s32 %s9, 2
        // Predicated region
        $region155: #{gpt_forward.12} parent=153 // pred_check
          %p795 = pneg %p116
        $region156: #{gpt_forward.12} parent=153 // pred_check_branch
          %797 = sbr.rel (%p795) target = $region158
        $region157: #{gpt_forward.12} parent=153 // pred_region
          %s798 = smul.u32 2, %s15
          %p799 = scmp.lt.s32.totalorder %s798, 3
          %s800 = scalar_select %p799, %s798, 3
          %s801 = smul.addr %s800, 8
          %s802 = scalar_lea.vmem %s3, %s801
        $region158: #{gpt_forward.12} parent=153 // pred_fallthru
          _
      $region154: #{gpt_forward.12} parent=5 // pred_fallthru
        _
    $region6: #{gpt_forward.12} parent=1 // loop_footer
      %s13 = sadd.s32 1, %s9
    $region7: #{gpt_forward.12} parent=1 // loop_footer_branch
      %8 = sbr.rel target = $region3
    $region8: #{gpt_forward.12} parent=1 // loop_exit
      _

// kernel: gpt_forward.15
$region0: #{gpt_forward.15}
  #allocation0 [shape = 'u32[]', space=smem, size = 0x4, offset = 0x4, fixed_abs, tag = 'smem constant byte address 0x4 - core index']
  #allocation1 [shape = 'u32[72,128]{1,0:T(1,128)}', space=vmem, size = 0x9000, scoped, tag = 'internal scratch']
  #allocation2 [shape = 'f32[32,128]{1,0:T(8,128)}', space=vmem, size = 0x4000, scoped, tag = 'scratch operand']
  %s0 = inlined_call_operand.vmem [shape: f32[32,512], index: 0, kind: input, shape index: {}]
  %s1 = inlined_call_operand.hbm [shape: f32[512,128], index: 1, kind: input, shape index: {}]
  %s2 = inlined_call_operand.vmem [shape: f32[1,128], index: 2, kind: input, shape index: {}]
  %s3 = inlined_call_operand.vmem [shape: f32[32,128], index: 3, kind: input, shape index: {}, may-alias: {3,4}]
  %s4 = inlined_call_operand.vmem [shape: f32[32,128], index: 4, kind: output, shape index: {}, may-alias: {3,4}]
  %s5 = sld [smem:[#allocation0]]
  $region38: #{gpt_forward.15} parent=0
    _
  %s7 = ssub.s32 1, %s5
  %s8 = scalar_select 0, %s7, %s5
  $region1: #{gpt_forward.15} parent=0
    #allocation3 [shape = 'u8[262144]{0}', space=vmem, size = 0x40000, scoped, tag = 'input window, operand 1, single buffered']
    #allocation4 [shape = 's32[1]{0}', space=sflag, size = 0x4, scoped, tag = 'scoped memory for gpt_forward.15']
    %9 = vsyncpa [#allocation4], 0
    // Predicated region
    $region2: #{gpt_forward.15} parent=1 // pred_check
      _
    $region3: #{gpt_forward.15} parent=1 // pred_check_branch
      %11 = sbr.rel (0) target = $region5
    $region4: #{gpt_forward.15} parent=1 // pred_region
      _
    $region5: #{gpt_forward.15} parent=1 // pred_fallthru
      _
    // Predicated region
    $region6: #{gpt_forward.15} parent=1 // pred_check
      _
    $region7: #{gpt_forward.15} parent=1 // pred_check_branch
      %13 = sbr.rel (0) target = $region9
    $region8: #{gpt_forward.15} parent=1 // pred_region
      %15 = vsyncadd [#allocation4], 0
      %s16 = sshll.u32 %s1, 4
      %s17 = int_to_ptr.hbm [resolvable:$true] %s16
      %s18 = sshll.u32 [#allocation3], 4
      %s19 = int_to_ptr.vmem [resolvable:$true] %s18
      %24 = dma.hbm_to_vmem [thread:$0]  %s17, 8192, %s19, [#allocation4], 128, 128, 8
    $region9: #{gpt_forward.15} parent=1 // pred_fallthru
      _
    // Predicated region
    $region10: #{gpt_forward.15} parent=1 // pred_check
      _
    $region11: #{gpt_forward.15} parent=1 // pred_check_branch
      %26 = sbr.rel (0) target = $region13
    $region12: #{gpt_forward.15} parent=1 // pred_region
      _
    $region13: #{gpt_forward.15} parent=1 // pred_fallthru
      _
    // Predicated region
    $region14: #{gpt_forward.15} parent=1 // pred_check
      _
    $region15: #{gpt_forward.15} parent=1 // pred_check_branch
      %28 = sbr.rel (0) target = $region17
    $region16: #{gpt_forward.15} parent=1 // pred_region
      _
    $region17: #{gpt_forward.15} parent=1 // pred_fallthru
      _
    // Predicated region
    $region18: #{gpt_forward.15} parent=1 // pred_check
      _
    $region19: #{gpt_forward.15} parent=1 // pred_check_branch
      %30 = sbr.rel (0) target = $region21
    $region20: #{gpt_forward.15} parent=1 // pred_region
      %32 = dma.done [#allocation4], 8192
    $region21: #{gpt_forward.15} parent=1 // pred_fallthru
      _
    %p33 = scmp.eq.s32.totalorder 0, 0
    // Predicated region
    $region22: #{gpt_forward.15} parent=1 // pred_check
      %p34 = pneg %p33
    $region23: #{gpt_forward.15} parent=1 // pred_check_branch
      %36 = sbr.rel (%p34) target = $region25
    $region24: #{gpt_forward.15} parent=1 // pred_region
      %37 = vst [vmem:[#allocation2] sm:$0xff] 0.0
      %38 = vst [vmem:[#allocation2 + $0x8] sm:$0xff] 0.0
      %39 = vst [vmem:[#allocation2 + $0x10] sm:$0xff] 0.0
      %40 = vst [vmem:[#allocation2 + $0x18] sm:$0xff] 0.0
    $region25: #{gpt_forward.15} parent=1 // pred_fallthru
      _
    %v41 = vld [vmem:[#allocation2] sm:$0xff]
    %v42 = vld [vmem:[#allocation2 + $0x8] sm:$0xff]
    %v43 = vld [vmem:[#allocation2 + $0x10] sm:$0xff]
    %v44 = vld [vmem:[#allocation2 + $0x18] sm:$0xff]
    %v45 = vld [vmem:[%s0] sm:$0xff]
    %v46 = vld [vmem:[%s0 + $0x8] sm:$0xff]
    %v47 = vld [vmem:[%s0 + $0x10] sm:$0xff]
    %v48 = vld [vmem:[%s0 + $0x18] sm:$0xff]
    %v49 = vld [vmem:[%s0 + $0x20] sm:$0xff]
    %v50 = vld [vmem:[%s0 + $0x28] sm:$0xff]
    %v51 = vld [vmem:[%s0 + $0x30] sm:$0xff]
    %v52 = vld [vmem:[%s0 + $0x38] sm:$0xff]
    %v53 = vld [vmem:[%s0 + $0x40] sm:$0xff]
    %v54 = vld [vmem:[%s0 + $0x48] sm:$0xff]
    %v55 = vld [vmem:[%s0 + $0x50] sm:$0xff]
    %v56 = vld [vmem:[%s0 + $0x58] sm:$0xff]
    %v57 = vld [vmem:[%s0 + $0x60] sm:$0xff]
    %v58 = vld [vmem:[%s0 + $0x68] sm:$0xff]
    %v59 = vld [vmem:[%s0 + $0x70] sm:$0xff]
    %v60 = vld [vmem:[%s0 + $0x78] sm:$0xff]
    %v61 = vld [vmem:[#allocation3] sm:$0xff]
    %v62 = vld [vmem:[#allocation3 + $0x8] sm:$0xff]
    %v63 = vld [vmem:[#allocation3 + $0x10] sm:$0xff]
    %v64 = vld [vmem:[#allocation3 + $0x18] sm:$0xff]
    %v65 = vld [vmem:[#allocation3 + $0x20] sm:$0xff]
    %v66 = vld [vmem:[#allocation3 + $0x28] sm:$0xff]
    %v67 = vld [vmem:[#allocation3 + $0x30] sm:$0xff]
    %v68 = vld [vmem:[#allocation3 + $0x38] sm:$0xff]
    %v69 = vld [vmem:[#allocation3 + $0x40] sm:$0xff]
    %v70 = vld [vmem:[#allocation3 + $0x48] sm:$0xff]
    %v71 = vld [vmem:[#allocation3 + $0x50] sm:$0xff]
    %v72 = vld [vmem:[#allocation3 + $0x58] sm:$0xff]
    %v73 = vld [vmem:[#allocation3 + $0x60] sm:$0xff]
    %v74 = vld [vmem:[#allocation3 + $0x68] sm:$0xff]
    %v75 = vld [vmem:[#allocation3 + $0x70] sm:$0xff]
    %v76 = vld [vmem:[#allocation3 + $0x78] sm:$0xff]
    %v77 = vld [vmem:[#allocation3 + $0x80] sm:$0xff]
    %v78 = vld [vmem:[#allocation3 + $0x88] sm:$0xff]
    %v79 = vld [vmem:[#allocation3 + $0x90] sm:$0xff]
    %v80 = vld [vmem:[#allocation3 + $0x98] sm:$0xff]
    %v81 = vld [vmem:[#allocation3 + $0xa0] sm:$0xff]
    %v82 = vld [vmem:[#allocation3 + $0xa8] sm:$0xff]
    %v83 = vld [vmem:[#allocation3 + $0xb0] sm:$0xff]
    %v84 = vld [vmem:[#allocation3 + $0xb8] sm:$0xff]
    %v85 = vld [vmem:[#allocation3 + $0xc0] sm:$0xff]
    %v86 = vld [vmem:[#allocation3 + $0xc8] sm:$0xff]
    %v87 = vld [vmem:[#allocation3 + $0xd0] sm:$0xff]
    %v88 = vld [vmem:[#allocation3 + $0xd8] sm:$0xff]
    %v89 = vld [vmem:[#allocation3 + $0xe0] sm:$0xff]
    %v90 = vld [vmem:[#allocation3 + $0xe8] sm:$0xff]
    %v91 = vld [vmem:[#allocation3 + $0xf0] sm:$0xff]
    %v92 = vld [vmem:[#allocation3 + $0xf8] sm:$0xff]
    %v93 = vld [vmem:[#allocation3 + $0x100] sm:$0xff]
    %v94 = vld [vmem:[#allocation3 + $0x108] sm:$0xff]
    %v95 = vld [vmem:[#allocation3 + $0x110] sm:$0xff]
    %v96 = vld [vmem:[#allocation3 + $0x118] sm:$0xff]
    %v97 = vld [vmem:[#allocation3 + $0x120] sm:$0xff]
    %v98 = vld [vmem:[#allocation3 + $0x128] sm:$0xff]
    %v99 = vld [vmem:[#allocation3 + $0x130] sm:$0xff]
    %v100 = vld [vmem:[#allocation3 + $0x138] sm:$0xff]
    %v101 = vld [vmem:[#allocation3 + $0x140] sm:$0xff]
    %v102 = vld [vmem:[#allocation3 + $0x148] sm:$0xff]
    %v103 = vld [vmem:[#allocation3 + $0x150] sm:$0xff]
    %v104 = vld [vmem:[#allocation3 + $0x158] sm:$0xff]
    %v105 = vld [vmem:[#allocation3 + $0x160] sm:$0xff]
    %v106 = vld [vmem:[#allocation3 + $0x168] sm:$0xff]
    %v107 = vld [vmem:[#allocation3 + $0x170] sm:$0xff]
    %v108 = vld [vmem:[#allocation3 + $0x178] sm:$0xff]
    %v109 = vld [vmem:[#allocation3 + $0x180] sm:$0xff]
    %v110 = vld [vmem:[#allocation3 + $0x188] sm:$0xff]
    %v111 = vld [vmem:[#allocation3 + $0x190] sm:$0xff]
    %v112 = vld [vmem:[#allocation3 + $0x198] sm:$0xff]
    %v113 = vld [vmem:[#allocation3 + $0x1a0] sm:$0xff]
    %v114 = vld [vmem:[#allocation3 + $0x1a8] sm:$0xff]
    %v115 = vld [vmem:[#allocation3 + $0x1b0] sm:$0xff]
    %v116 = vld [vmem:[#allocation3 + $0x1b8] sm:$0xff]
    %v117 = vld [vmem:[#allocation3 + $0x1c0] sm:$0xff]
    %v118 = vld [vmem:[#allocation3 + $0x1c8] sm:$0xff]
    %v119 = vld [vmem:[#allocation3 + $0x1d0] sm:$0xff]
    %v120 = vld [vmem:[#allocation3 + $0x1d8] sm:$0xff]
    %v121 = vld [vmem:[#allocation3 + $0x1e0] sm:$0xff]
    %v122 = vld [vmem:[#allocation3 + $0x1e8] sm:$0xff]
    %v123 = vld [vmem:[#allocation3 + $0x1f0] sm:$0xff]
    %v124 = vld [vmem:[#allocation3 + $0x1f8] sm:$0xff]
    %125 = vmatpush.msra.mxu0 %v76
    %126 = vmatpush.msra.mxu0 %v75
    %127 = vmatpush.msra.mxu0 %v74
    %128 = vmatpush.msra.mxu0 %v73
    %129 = vmatpush.msra.mxu0 %v72
    %130 = vmatpush.msra.mxu0 %v71
    %131 = vmatpush.msra.mxu0 %v70
    %132 = vmatpush.msra.mxu0 %v69
    %133 = vmatpush.msra.mxu0 %v68
    %134 = vmatpush.msra.mxu0 %v67
    %135 = vmatpush.msra.mxu0 %v66
    %136 = vmatpush.msra.mxu0 %v65
    %137 = vmatpush.msra.mxu0 %v64
    %138 = vmatpush.msra.mxu0 %v63
    %139 = vmatpush.msra.mxu0 %v62
    %140 = vmatpush.msra.mxu0 %v61
    %141 = vmatmul.f32.gmra.mxu0 %v45
    %v142 = vpop.f32.mrf.mxu0
    %v143 = vadd.f32 0.0, %v142
    %144 = vmatmul.f32.gmra.mxu0 %v49
    %v145 = vpop.f32.mrf.mxu0
    %v146 = vadd.f32 0.0, %v145
    %147 = vmatmul.f32.gmra.mxu0 %v53
    %v148 = vpop.f32.mrf.mxu0
    %v149 = vadd.f32 0.0, %v148
    %150 = vmatmul.f32.gmra.mxu0 %v57
    %v151 = vpop.f32.mrf.mxu0
    %v152 = vadd.f32 0.0, %v151
    %153 = vdwg.mxu0
    %154 = vmatpush.msra.mxu0 %v92
    %155 = vmatpush.msra.mxu0 %v91
    %156 = vmatpush.msra.mxu0 %v90
    %157 = vmatpush.msra.mxu0 %v89
    %158 = vmatpush.msra.mxu0 %v88
    %159 = vmatpush.msra.mxu0 %v87
    %160 = vmatpush.msra.mxu0 %v86
    %161 = vmatpush.msra.mxu0 %v85
    %162 = vmatpush.msra.mxu0 %v84
    %163 = vmatpush.msra.mxu0 %v83
    %164 = vmatpush.msra.mxu0 %v82
    %165 = vmatpush.msra.mxu0 %v81
    %166 = vmatpush.msra.mxu0 %v80
    %167 = vmatpush.msra.mxu0 %v79
    %168 = vmatpush.msra.mxu0 %v78
    %169 = vmatpush.msra.mxu0 %v77
    %170 = vmatmul.f32.gmra.mxu0 %v46
    %v171 = vpop.f32.mrf.mxu0
    %v172 = vadd.f32 %v143, %v171
    %173 = vmatmul.f32.gmra.mxu0 %v50
    %v174 = vpop.f32.mrf.mxu0
    %v175 = vadd.f32 %v146, %v174
    %176 = vmatmul.f32.gmra.mxu0 %v54
    %v177 = vpop.f32.mrf.mxu0
    %v178 = vadd.f32 %v149, %v177
    %179 = vmatmul.f32.gmra.mxu0 %v58
    %v180 = vpop.f32.mrf.mxu0
    %v181 = vadd.f32 %v152, %v180
    %182 = vdwg.mxu0
    %183 = vmatpush.msra.mxu0 %v108
    %184 = vmatpush.msra.mxu0 %v107
    %185 = vmatpush.msra.mxu0 %v106
    %186 = vmatpush.msra.mxu0 %v105
    %187 = vmatpush.msra.mxu0 %v104
    %188 = vmatpush.msra.mxu0 %v103
    %189 = vmatpush.msra.mxu0 %v102
    %190 = vmatpush.msra.mxu0 %v101
    %191 = vmatpush.msra.mxu0 %v100
    %192 = vmatpush.msra.mxu0 %v99
    %193 = vmatpush.msra.mxu0 %v98
    %194 = vmatpush.msra.mxu0 %v97
    %195 = vmatpush.msra.mxu0 %v96
    %196 = vmatpush.msra.mxu0 %v95
    %197 = vmatpush.msra.mxu0 %v94
    %198 = vmatpush.msra.mxu0 %v93
    %199 = vmatmul.f32.gmra.mxu0 %v47
    %v200 = vpop.f32.mrf.mxu0
    %v201 = vadd.f32 %v172, %v200
    %202 = vmatmul.f32.gmra.mxu0 %v51
    %v203 = vpop.f32.mrf.mxu0
    %v204 = vadd.f32 %v175, %v203
    %205 = vmatmul.f32.gmra.mxu0 %v55
    %v206 = vpop.f32.mrf.mxu0
    %v207 = vadd.f32 %v178, %v206
    %208 = vmatmul.f32.gmra.mxu0 %v59
    %v209 = vpop.f32.mrf.mxu0
    %v210 = vadd.f32 %v181, %v209
    %211 = vdwg.mxu0
    %212 = vmatpush.msra.mxu0 %v124
    %213 = vmatpush.msra.mxu0 %v123
    %214 = vmatpush.msra.mxu0 %v122
    %215 = vmatpush.msra.mxu0 %v121
    %216 = vmatpush.msra.mxu0 %v120
    %217 = vmatpush.msra.mxu0 %v119
    %218 = vmatpush.msra.mxu0 %v118
    %219 = vmatpush.msra.mxu0 %v117
    %220 = vmatpush.msra.mxu0 %v116
    %221 = vmatpush.msra.mxu0 %v115
    %222 = vmatpush.msra.mxu0 %v114
    %223 = vmatpush.msra.mxu0 %v113
    %224 = vmatpush.msra.mxu0 %v112
    %225 = vmatpush.msra.mxu0 %v111
    %226 = vmatpush.msra.mxu0 %v110
    %227 = vmatpush.msra.mxu0 %v109
    %228 = vmatmul.f32.gmra.mxu0 %v48
    %v229 = vpop.f32.mrf.mxu0
    %v230 = vadd.f32 %v201, %v229
    %231 = vmatmul.f32.gmra.mxu0 %v52
    %v232 = vpop.f32.mrf.mxu0
    %v233 = vadd.f32 %v204, %v232
    %234 = vmatmul.f32.gmra.mxu0 %v56
    %v235 = vpop.f32.mrf.mxu0
    %v236 = vadd.f32 %v207, %v235
    %237 = vmatmul.f32.gmra.mxu0 %v60
    %v238 = vpop.f32.mrf.mxu0
    %v239 = vadd.f32 %v210, %v238
    %240 = vdwg.mxu0
    %v241 = vadd.f32 %v41, %v230
    %v242 = vadd.f32 %v42, %v233
    %v243 = vadd.f32 %v43, %v236
    %v244 = vadd.f32 %v44, %v239
    %245 = vst [vmem:[#allocation2] sm:$0xff] %v241
    %246 = vst [vmem:[#allocation2 + $0x8] sm:$0xff] %v242
    %247 = vst [vmem:[#allocation2 + $0x10] sm:$0xff] %v243
    %248 = vst [vmem:[#allocation2 + $0x18] sm:$0xff] %v244
    // Predicated region
    $region26: #{gpt_forward.15} parent=1 // pred_check
      %p249 = pneg %p33
    $region27: #{gpt_forward.15} parent=1 // pred_check_branch
      %251 = sbr.rel (%p249) target = $region29
    $region28: #{gpt_forward.15} parent=1 // pred_region
      %v252 = vld [vmem:[#allocation2] sm:$0xff]
      %v253 = vld [vmem:[#allocation2 + $0x8] sm:$0xff]
      %v254 = vld [vmem:[#allocation2 + $0x10] sm:$0xff]
      %v255 = vld [vmem:[#allocation2 + $0x18] sm:$0xff]
      %v256 = vld [vmem:[%s2] sm:$0x1]
      %v258 = vperm.slane %v256, 0
      %v260 = vadd.f32 %v252, %v258
      %v261 = vadd.f32 %v253, %v258
      %v262 = vadd.f32 %v254, %v258
      %v263 = vadd.f32 %v255, %v258
      %v264 = vld [vmem:[%s3] sm:$0xff]
      %v265 = vld [vmem:[%s3 + $0x8] sm:$0xff]
      %v266 = vld [vmem:[%s3 + $0x10] sm:$0xff]
      %v267 = vld [vmem:[%s3 + $0x18] sm:$0xff]
      %v268 = vadd.f32 %v260, %v264
      %v269 = vadd.f32 %v261, %v265
      %v270 = vadd.f32 %v262, %v266
      %v271 = vadd.f32 %v263, %v267
      %272 = vst [vmem:[%s4] sm:$0xff] %v268
      %273 = vst [vmem:[%s4 + $0x8] sm:$0xff] %v269
      %274 = vst [vmem:[%s4 + $0x10] sm:$0xff] %v270
      %275 = vst [vmem:[%s4 + $0x18] sm:$0xff] %v271
    $region29: #{gpt_forward.15} parent=1 // pred_fallthru
      _
    // Predicated region
    $region30: #{gpt_forward.15} parent=1 // pred_check
      _
    $region31: #{gpt_forward.15} parent=1 // pred_check_branch
      %277 = sbr.rel (0) target = $region33
    $region32: #{gpt_forward.15} parent=1 // pred_region
      _
    $region33: #{gpt_forward.15} parent=1 // pred_fallthru
      _
    // Predicated region
    $region34: #{gpt_forward.15} parent=1 // pred_check
      _
    $region35: #{gpt_forward.15} parent=1 // pred_check_branch
      %279 = sbr.rel (0) target = $region37
    $region36: #{gpt_forward.15} parent=1 // pred_region
      _
    $region37: #{gpt_forward.15} parent=1 // pred_fallthru
      _
    %280 = vsyncpa [#allocation4], 1

// kernel: gpt_forward.16
$region0: #{gpt_forward.16}
  #allocation0 [shape = 'u32[]', space=smem, size = 0x4, offset = 0x4, fixed_abs, tag = 'smem constant byte address 0x4 - core index']
  #allocation1 [shape = 'u32[72,128]{1,0:T(1,128)}', space=vmem, size = 0x9000, scoped, tag = 'internal scratch']
  #allocation2 [shape = 'f32[32,128]{1,0:T(8,128)}', space=vmem, size = 0x4000, scoped, tag = 'scratch operand']
  %s0 = inlined_call_operand.vmem [shape: f32[32,128], index: 0, kind: input, shape index: {}]
  %s1 = inlined_call_operand.vmem [shape: f32[1,128], index: 1, kind: input, shape index: {}]
  %s2 = inlined_call_operand.vmem [shape: f32[1,128], index: 2, kind: input, shape index: {}]
  %s3 = inlined_call_operand.hbm [shape: f32[128,384], index: 3, kind: input, shape index: {}]
  %s4 = inlined_call_operand.vmem [shape: f32[1,384], index: 4, kind: input, shape index: {}]
  %s5 = inlined_call_operand.vmem [shape: f32[32,384], index: 5, kind: output, shape index: {}]
  %s6 = sld [smem:[#allocation0]]
  $region95: #{gpt_forward.16} parent=0
    _
  %s8 = ssub.s32 1, %s6
  %s9 = scalar_select 0, %s8, %s6
  $region1: #{gpt_forward.16} parent=0
    #allocation3 [shape = 'u8[131072]{0}', space=vmem, size = 0x20000, scoped, tag = 'input window, operand 3']
    #allocation4 [shape = 's32[2]{0}', space=sflag, size = 0x8, scoped, tag = 'scoped memory for gpt_forward.16']
    #allocation5 [shape = 'u8[32768]{0}', space=vmem, size = 0x8000, scoped, tag = 'output window, operand 0']
    %10 = vsyncpa [#allocation4], 0
    %s11 = scalar_lea.sflag [#allocation4], 1
    %12 = vsyncpa %s11, 0
    loop: start=0, step=1, limit=5
    $region2: #{gpt_forward.16} parent=1 // loop_pre_header
      _
    $region3: #{gpt_forward.16} parent=1 // loop_header
      %s14 = sphi 0, %s18
      %p15 = scmp.ge.s32.totalorder %s14, 5
      %s21 = sphi 0, %s33
      %s22 = sphi 0, %s29
      %s23 = sphi 0, %s21
      %s24 = sphi 0, %s22
      %s25 = sphi 0, %s23
      %s26 = sphi 0, %s24
      %s36 = sphi 0, %s38
      %s39 = sphi 0, %s36
      %s40 = sphi 0, %s39
      %s56 = sphi 0, %s40
      %s60 = sphi 0, %s60
      %s62 = sphi 0, %s60
      %s63 = sphi 0, %s62
      %s77 = sphi 0, %s63
      %s81 = sphi 0, %s81
      %s83 = sphi 0, %s81
      %s84 = sphi 0, %s83
      %s98 = sphi 0, %s84
      %s104 = sphi 0, %s106
      %s107 = sphi 0, %s104
      %s108 = sphi 0, %s107
      %s124 = sphi 0, %s108
      %s130 = sphi 0, %s132
      %s133 = sphi 0, %s130
      %s134 = sphi 0, %s133
      %s150 = sphi 0, %s134
      %s158 = sphi 0, %s160
      %s161 = sphi 0, %s158
      %s162 = sphi 0, %s161
      %s178 = sphi 0, %s162
    $region4: #{gpt_forward.16} parent=1 // loop_header_branch
      %17 = sbr.rel (%p15) target = $region8
    $region5: #{gpt_forward.16} parent=1 // loop_body
      %s19 = ssub.s32 %s14, 1
      %s20 = ssub.s32 %s14, 2
      %s27 = sadd.s32 1, %s22
      %p28 = scmp.ge.s32.totalorder %s27, 3
      %s29 = scalar_select %p28, 0, %s27
      %s30 = sadd.s32 1, %s21
      %s31 = scalar_select %p28, %s30, %s21
      %p32 = scmp.ge.s32.totalorder %s31, 1
      %s33 = scalar_select %p32, 0, %s31
      %s34 = ssub.s32 %s21, %s33
      %p35 = scmp.eq.s32.totalorder %s34, 0
      %s37 = sadd.s32 %s36, 1
      %s38 = scalar_select %p35, %s36, %s37
      %p41 = pneg %p35
      %p42 = scmp.eq.s32.totalorder %s14, 2
      %p43 = por %p41, %p42
      %p44 = scmp.ne.s32.totalorder %s36, %s39
      %p45 = scmp.eq.s32.totalorder %s14, 0
      %p46 = por %p44, %p45
      %p47 = scmp.ne.s32.totalorder %s36, %s39
      %p48 = scmp.eq.s32.totalorder %s19, 2
      %p49 = por %p47, %p48
      %p50 = scmp.ne.s32.totalorder %s39, %s40
      %p51 = scmp.eq.s32.totalorder %s19, 0
      %p52 = por %p50, %p51
      %p53 = scmp.ne.s32.totalorder %s39, %s40
      %p54 = scmp.eq.s32.totalorder %s20, 2
      %p55 = por %p53, %p54
      %p57 = scmp.ne.s32.totalorder %s40, %s56
      %p58 = scmp.eq.s32.totalorder %s20, 0
      %p59 = por %p57, %p58
      %s61 = sadd.s32 %s60, 1
      %p64 = scmp.eq.s32.totalorder %s14, 2
      %p65 = scmp.ne.s32.totalorder %s60, %s62
      %p66 = scmp.eq.s32.totalorder %s14, 0
      %p67 = por %p65, %p66
      %p68 = scmp.ne.s32.totalorder %s60, %s62
      %p69 = scmp.eq.s32.totalorder %s19, 2
      %p70 = por %p68, %p69
      %p71 = scmp.ne.s32.totalorder %s62, %s63
      %p72 = scmp.eq.s32.totalorder %s19, 0
      %p73 = por %p71, %p72
      %p74 = scmp.ne.s32.totalorder %s62, %s63
      %p75 = scmp.eq.s32.totalorder %s20, 2
      %p76 = por %p74, %p75
      %p78 = scmp.ne.s32.totalorder %s63, %s77
      %p79 = scmp.eq.s32.totalorder %s20, 0
      %p80 = por %p78, %p79
      %s82 = sadd.s32 %s81, 1
      %p85 = scmp.eq.s32.totalorder %s14, 2
      %p86 = scmp.ne.s32.totalorder %s81, %s83
      %p87 = scmp.eq.s32.totalorder %s14, 0
      %p88 = por %p86, %p87
      %p89 = scmp.ne.s32.totalorder %s81, %s83
      %p90 = scmp.eq.s32.totalorder %s19, 2
      %p91 = por %p89, %p90
      %p92 = scmp.ne.s32.totalorder %s83, %s84
      %p93 = scmp.eq.s32.totalorder %s19, 0
      %p94 = por %p92, %p93
      %p95 = scmp.ne.s32.totalorder %s83, %s84
      %p96 = scmp.eq.s32.totalorder %s20, 2
      %p97 = por %p95, %p96
      %p99 = scmp.ne.s32.totalorder %s84, %s98
      %p100 = scmp.eq.s32.totalorder %s20, 0
      %p101 = por %p99, %p100
      %s102 = ssub.s32 %s22, %s29
      %p103 = scmp.eq.s32.totalorder %s102, 0
      %s105 = sadd.s32 %s104, 1
      %s106 = scalar_select %p103, %s104, %s105
      %p109 = pneg %p103
      %p110 = scmp.eq.s32.totalorder %s14, 2
      %p111 = por %p109, %p110
      %p112 = scmp.ne.s32.totalorder %s104, %s107
      %p113 = scmp.eq.s32.totalorder %s14, 0
      %p114 = por %p112, %p113
      %p115 = scmp.ne.s32.totalorder %s104, %s107
      %p116 = scmp.eq.s32.totalorder %s19, 2
      %p117 = por %p115, %p116
      %p118 = scmp.ne.s32.totalorder %s107, %s108
      %p119 = scmp.eq.s32.totalorder %s19, 0
      %p120 = por %p118, %p119
      %p121 = scmp.ne.s32.totalorder %s107, %s108
      %p122 = scmp.eq.s32.totalorder %s20, 2
      %p123 = por %p121, %p122
      %p125 = scmp.ne.s32.totalorder %s108, %s124
      %p126 = scmp.eq.s32.totalorder %s20, 0
      %p127 = por %p125, %p126
      %s128 = ssub.s32 %s22, %s29
      %p129 = scmp.eq.s32.totalorder %s128, 0
      %s131 = sadd.s32 %s130, 1
      %s132 = scalar_select %p129, %s130, %s131
      %p135 = pneg %p129
      %p136 = scmp.eq.s32.totalorder %s14, 2
      %p137 = por %p135, %p136
      %p138 = scmp.ne.s32.totalorder %s130, %s133
      %p139 = scmp.eq.s32.totalorder %s14, 0
      %p140 = por %p138, %p139
      %p141 = scmp.ne.s32.totalorder %s130, %s133
      %p142 = scmp.eq.s32.totalorder %s19, 2
      %p143 = por %p141, %p142
      %p144 = scmp.ne.s32.totalorder %s133, %s134
      %p145 = scmp.eq.s32.totalorder %s19, 0
      %p146 = por %p144, %p145
      %p147 = scmp.ne.s32.totalorder %s133, %s134
      %p148 = scmp.eq.s32.totalorder %s20, 2
      %p149 = por %p147, %p148
      %p151 = scmp.ne.s32.totalorder %s134, %s150
      %p152 = scmp.eq.s32.totalorder %s20, 0
      %p153 = por %p151, %p152
      %s154 = ssub.s32 %s21, %s33
      %s155 = ssub.s32 %s22, %s29
      %s156 = sor.u32 %s154, %s155
      %p157 = scmp.eq.s32.totalorder %s156, 0
      %s159 = sadd.s32 %s158, 1
      %s160 = scalar_select %p157, %s158, %s159
      %p163 = pneg %p157
      %p164 = scmp.eq.s32.totalorder %s14, 2
      %p165 = por %p163, %p164
      %p166 = scmp.ne.s32.totalorder %s158, %s161
      %p167 = scmp.eq.s32.totalorder %s14, 0
      %p168 = por %p166, %p167
      %p169 = scmp.ne.s32.totalorder %s158, %s161
      %p170 = scmp.eq.s32.totalorder %s19, 2
      %p171 = por %p169, %p170
      %p172 = scmp.ne.s32.totalorder %s161, %s162
      %p173 = scmp.eq.s32.totalorder %s19, 0
      %p174 = por %p172, %p173
      %p175 = scmp.ne.s32.totalorder %s161, %s162
      %p176 = scmp.eq.s32.totalorder %s20, 2
      %p177 = por %p175, %p176
      %p179 = scmp.ne.s32.totalorder %s162, %s178
      %p180 = scmp.eq.s32.totalorder %s20, 0
      %p181 = por %p179, %p180
      %p182 = scmp.le.s32.totalorder 1, %s14
      %p183 = scmp.lt.s32.totalorder %s14, 4
      %p184 = pnand %p182, %p183
      %p185 = pneg %p184
      // Predicated region
      $region9: #{gpt_forward.16} parent=5 // pred_check
        _
      $region10: #{gpt_forward.16} parent=5 // pred_check_branch
        %187 = sbr.rel (%p184) target = $region12
      $region11: #{gpt_forward.16} parent=5 // pred_region
        %s188 = ssub.s32 %s14, 1
        // Predicated region
        $region13: #{gpt_forward.16} parent=11 // pred_check
          %p189 = pneg %p52
        $region14: #{gpt_forward.16} parent=11 // pred_check_branch
          %191 = sbr.rel (%p189) target = $region16
        $region15: #{gpt_forward.16} parent=11 // pred_region
          %s192 = smul.u32 4, %s23
          %p193 = scmp.lt.s32.totalorder %s192, 3
          %s194 = scalar_select %p193, %s192, 3
          %s195 = smul.addr %s194, 8
          %s196 = scalar_lea.vmem %s0, %s195
          %s197 = smul.u32 4, %s23
        $region16: #{gpt_forward.16} parent=11 // pred_fallthru
          _
        // Predicated region
        $region17: #{gpt_forward.16} parent=11 // pred_check
          %p198 = pneg %p73
        $region18: #{gpt_forward.16} parent=11 // pred_check_branch
          %200 = sbr.rel (%p198) target = $region20
        $region19: #{gpt_forward.16} parent=11 // pred_region
          _
        $region20: #{gpt_forward.16} parent=11 // pred_fallthru
          _
        // Predicated region
        $region21: #{gpt_forward.16} parent=11 // pred_check
          %p201 = pneg %p94
        $region22: #{gpt_forward.16} parent=11 // pred_check_branch
          %203 = sbr.rel (%p201) target = $region24
        $region23: #{gpt_forward.16} parent=11 // pred_region
          _
        $region24: #{gpt_forward.16} parent=11 // pred_fallthru
          _
      $region12: #{gpt_forward.16} parent=5 // pred_fallthru
        _
      %p204 = scmp.lt.s32.totalorder %s14, 3
      // Predicated region
      $region25: #{gpt_forward.16} parent=5 // pred_check
        %p205 = pneg %p204
      $region26: #{gpt_forward.16} parent=5 // pred_check_branch
        %207 = sbr.rel (%p205) target = $region28
      $region27: #{gpt_forward.16} parent=5 // pred_region
        // Predicated region
        $region29: #{gpt_forward.16} parent=27 // pred_check
          %p208 = pneg %p114
        $region30: #{gpt_forward.16} parent=27 // pred_check_branch
          %210 = sbr.rel (%p208) target = $region32
        $region31: #{gpt_forward.16} parent=27 // pred_region
          %s211 = sand.u32 %s104, 1
          %s212 = scalar_lea.sflag [#allocation4], %s211
          %s213 = sand.u32 %s104, 1
          %s214 = smul.addr %s213, 128
          %s215 = scalar_lea.vmem [#allocation3], %s214
          %217 = vsyncadd %s212, 0
          %s218 = smul.addr %s22, 8
          %s219 = scalar_lea.hbm %s3, %s218
          %s220 = sshll.u32 %s219, 4
          %s221 = int_to_ptr.hbm [resolvable:$true] %s220
          %s222 = sshll.u32 %s215, 4
          %s223 = int_to_ptr.vmem [resolvable:$true] %s222
          %228 = dma.hbm_to_vmem [thread:$0]  %s221, 2048, %s223, %s212, 384, 128, 8
        $region32: #{gpt_forward.16} parent=27 // pred_fallthru
          _
        // Predicated region
        $region33: #{gpt_forward.16} parent=27 // pred_check
          %p229 = pneg %p140
        $region34: #{gpt_forward.16} parent=27 // pred_check_branch
          %231 = sbr.rel (%p229) target = $region36
        $region35: #{gpt_forward.16} parent=27 // pred_region
          %p232 = scmp.lt.s32.totalorder %s22, 2
          %s233 = scalar_select %p232, %s22, 2
          %s234 = scalar_lea.vmem %s4, %s233
        $region36: #{gpt_forward.16} parent=27 // pred_fallthru
          _
      $region28: #{gpt_forward.16} parent=5 // pred_fallthru
        _
      %p235 = scmp.le.s32.totalorder 1, %s14
      %p236 = scmp.lt.s32.totalorder %s14, 4
      %p237 = pnand %p235, %p236
      %p238 = pneg %p237
      // Predicated region
      $region37: #{gpt_forward.16} parent=5 // pred_check
        _
      $region38: #{gpt_forward.16} parent=5 // pred_check_branch
        %240 = sbr.rel (%p237) target = $region40
      $region39: #{gpt_forward.16} parent=5 // pred_region
        %s241 = ssub.s32 %s14, 1
        %s242 = sand.u32 %s107, 1
        %s243 = scalar_lea.sflag [#allocation4], %s242
        %s244 = sand.u32 %s107, 1
        %s245 = smul.addr %s244, 128
        %s246 = scalar_lea.vmem [#allocation3], %s245
        // Predicated region
        $region41: #{gpt_forward.16} parent=39 // pred_check
          %p247 = pneg %p120
        $region42: #{gpt_forward.16} parent=39 // pred_check_branch
          %249 = sbr.rel (%p247) target = $region44
        $region43: #{gpt_forward.16} parent=39 // pred_region
          %251 = dma.done %s243, 2048
        $region44: #{gpt_forward.16} parent=39 // pred_fallthru
          _
        %s252 = smul.u32 4, %s23
        %p253 = scmp.lt.s32.totalorder %s252, 3
        %s254 = scalar_select %p253, %s252, 3
        %s255 = smul.addr %s254, 8
        %s256 = scalar_lea.vmem %s0, %s255
        %p257 = pneg %p52
        %p258 = pneg %p49
        %p259 = pneg %p73
        %p260 = pneg %p70
        %p261 = pneg %p94
        %p262 = pneg %p91
        %s263 = sand.u32 %s107, 1
        %s264 = scalar_lea.sflag [#allocation4], %s263
        %s265 = sand.u32 %s107, 1
        %s266 = smul.addr %s265, 128
        %s267 = scalar_lea.vmem [#allocation3], %s266
        %p268 = pneg %p120
        %p269 = pneg %p117
        %p270 = scmp.lt.s32.totalorder %s24, 2
        %s271 = scalar_select %p270, %s24, 2
        %s272 = scalar_lea.vmem %s4, %s271
        %p273 = pneg %p146
        %p274 = pneg %p143
        %p275 = pneg %p174
        %p276 = pneg %p171
        %s277 = sand.u32 %s161, 1
        %s278 = sand.u32 %s161, 1
        %s279 = smul.addr %s278, 32
        %s280 = scalar_lea.vmem [#allocation5], %s279
        %s281 = smul.u32 4, %s23
        %p282 = scmp.lt.s32.totalorder %s281, 3
        %s283 = scalar_select %p282, %s281, 3
        %s284 = smul.addr %s283, 8
        %s285 = scalar_lea.vmem %s0, %s284
        %s286 = smul.u32 4, %s23
        %p287 = scmp.lt.s32.totalorder %s24, 2
        %s288 = scalar_select %p287, %s24, 2
        %s289 = scalar_lea.vmem %s4, %s288
        %s290 = smul.u32 4, %s23
        %p291 = scmp.eq.s32.totalorder %s24, 0
        // Predicated region
        $region45: #{gpt_forward.16} parent=39 // pred_check
          %p292 = pneg %p291
        $region46: #{gpt_forward.16} parent=39 // pred_check_branch
          %294 = sbr.rel (%p292) target = $region48
        $region47: #{gpt_forward.16} parent=39 // pred_region
          %v295 = vld [vmem:[%s285] sm:$0xff]
          %v296 = vld [vmem:[%s285 + $0x8] sm:$0xff]
          %v297 = vld [vmem:[%s285 + $0x10] sm:$0xff]
          %v298 = vld [vmem:[%s285 + $0x18] sm:$0xff]
          %299 = vadd.xlane.f32.xlu0 %v295
          %v300 = vpop.xlane.xlu0 %299
          %301 = vadd.xlane.f32.xlu0 %v296
          %v302 = vpop.xlane.xlu0 %301
          %303 = vadd.xlane.f32.xlu0 %v297
          %v304 = vpop.xlane.xlu0 %303
          %305 = vadd.xlane.f32.xlu0 %v298
          %v306 = vpop.xlane.xlu0 %305
          %v307 = vrcp.pop 128.0
          %v308 = vmul.f32 128.0, %v307
          %v309 = vsub.f32 1.0, %v308
          %v310 = vmul.f32 %v307, %v309
          %v311 = vadd.f32 %v307, %v310
          %vm312 = vweird.f32 %v307
          %v313 = vsel %vm312, %v307, %v311
          %v314 = vmul.f32 %v300, %v313
          %v315 = vmul.f32 %v302, %v313
          %v316 = vmul.f32 %v304, %v313
          %v317 = vmul.f32 %v306, %v313
          %v318 = vsub.f32 %v295, %v314
          %v319 = vsub.f32 %v296, %v315
          %v320 = vsub.f32 %v297, %v316
          %v321 = vsub.f32 %v298, %v317
          %v322 = vmul.f32 %v318, %v318
          %v323 = vmul.f32 %v319, %v319
          %v324 = vmul.f32 %v320, %v320
          %v325 = vmul.f32 %v321, %v321
          %326 = vadd.xlane.f32.xlu0 %v322
          %v327 = vpop.xlane.xlu0 %326
          %328 = vadd.xlane.f32.xlu0 %v323
          %v329 = vpop.xlane.xlu0 %328
          %330 = vadd.xlane.f32.xlu0 %v324
          %v331 = vpop.xlane.xlu0 %330
          %332 = vadd.xlane.f32.xlu0 %v325
          %v333 = vpop.xlane.xlu0 %332
          %v334 = vmul.f32 %v327, %v313
          %v335 = vmul.f32 %v329, %v313
          %v336 = vmul.f32 %v331, %v313
          %v337 = vmul.f32 %v333, %v313
          %v338 = vadd.f32 %v334, 1e-05
          %v339 = vadd.f32 %v335, 1e-05
          %v340 = vadd.f32 %v336, 1e-05
          %v341 = vadd.f32 %v337, 1e-05
          %v342 = vrsqrt.pop %v338
          %v343 = vmul.f32 %v342, %v338
          %v344 = vmul.f32 %v343, %v342
          %v345 = vmul.f32 0.5, %v344
          %v346 = vsub.f32 1.5, %v345
          %v347 = vmul.f32 %v342, %v346
          %vm348 = vweird.f32 %v338
          %vm349 = vweird.f32 %v342
          %vm350 = vmor %vm348, %vm349
          %v351 = vsel %vm350, %v342, %v347
          %v352 = vrsqrt.pop %v339
          %v353 = vmul.f32 %v352, %v339
          %v354 = vmul.f32 %v353, %v352
          %v355 = vmul.f32 0.5, %v354
          %v356 = vsub.f32 1.5, %v355
          %v357 = vmul.f32 %v352, %v356
          %vm358 = vweird.f32 %v339
          %vm359 = vweird.f32 %v352
          %vm360 = vmor %vm358, %vm359
          %v361 = vsel %vm360, %v352, %v357
          %v362 = vrsqrt.pop %v340
          %v363 = vmul.f32 %v362, %v340
          %v364 = vmul.f32 %v363, %v362
          %v365 = vmul.f32 0.5, %v364
          %v366 = vsub.f32 1.5, %v365
          %v367 = vmul.f32 %v362, %v366
          %vm368 = vweird.f32 %v340
          %vm369 = vweird.f32 %v362
          %vm370 = vmor %vm368, %vm369
          %v371 = vsel %vm370, %v362, %v367
          %v372 = vrsqrt.pop %v341
          %v373 = vmul.f32 %v372, %v341
          %v374 = vmul.f32 %v373, %v372
          %v375 = vmul.f32 0.5, %v374
          %v376 = vsub.f32 1.5, %v375
          %v377 = vmul.f32 %v372, %v376
          %vm378 = vweird.f32 %v341
          %vm379 = vweird.f32 %v372
          %vm380 = vmor %vm378, %vm379
          %v381 = vsel %vm380, %v372, %v377
          %v382 = vmul.f32 %v318, %v351
          %v383 = vmul.f32 %v319, %v361
          %v384 = vmul.f32 %v320, %v371
          %v385 = vmul.f32 %v321, %v381
          %v386 = vld [vmem:[%s1] sm:$0x1]
          %v388 = vperm.slane %v386, 0
          %v390 = vmul.f32 %v382, %v388
          %v391 = vmul.f32 %v383, %v388
          %v392 = vmul.f32 %v384, %v388
          %v393 = vmul.f32 %v385, %v388
          %v394 = vld [vmem:[%s2] sm:$0x1]
          %v396 = vperm.slane %v394, 0
          %v398 = vadd.f32 %v390, %v396
          %v399 = vadd.f32 %v391, %v396
          %v400 = vadd.f32 %v392, %v396
          %v401 = vadd.f32 %v393, %v396
          %402 = vst [vmem:[#allocation2] sm:$0xff] %v398
          %403 = vst [vmem:[#allocation2 + $0x8] sm:$0xff] %v399
          %404 = vst [vmem:[#allocation2 + $0x10] sm:$0xff] %v400
          %405 = vst [vmem:[#allocation2 + $0x18] sm:$0xff] %v401
        $region48: #{gpt_forward.16} parent=39 // pred_fallthru
          _
        %v406 = vld [vmem:[#allocation2] sm:$0xff]
        %v407 = vld [vmem:[#allocation2 + $0x8] sm:$0xff]
        %v408 = vld [vmem:[#allocation2 + $0x10] sm:$0xff]
        %v409 = vld [vmem:[#allocation2 + $0x18] sm:$0xff]
        %v410 = vld [vmem:[%s246] sm:$0xff]
        %v411 = vld [vmem:[%s246 + $0x8] sm:$0xff]
        %v412 = vld [vmem:[%s246 + $0x10] sm:$0xff]
        %v413 = vld [vmem:[%s246 + $0x18] sm:$0xff]
        %v414 = vld [vmem:[%s246 + $0x20] sm:$0xff]
        %v415 = vld [vmem:[%s246 + $0x28] sm:$0xff]
        %v416 = vld [vmem:[%s246 + $0x30] sm:$0xff]
        %v417 = vld [vmem:[%s246 + $0x38] sm:$0xff]
        %v418 = vld [vmem:[%s246 + $0x40] sm:$0xff]
        %v419 = vld [vmem:[%s246 + $0x48] sm:$0xff]
        %v420 = vld [vmem:[%s246 + $0x50] sm:$0xff]
        %v421 = vld [vmem:[%s246 + $0x58] sm:$0xff]
        %v422 = vld [vmem:[%s246 + $0x60] sm:$0xff]
        %v423 = vld [vmem:[%s246 + $0x68] sm:$0xff]
        %v424 = vld [vmem:[%s246 + $0x70] sm:$0xff]
        %v425 = vld [vmem:[%s246 + $0x78] sm:$0xff]
        %v426 = vld [vmem:[%s289] sm:$0x1]
        %v428 = vperm.slane %v426, 0
        %430 = vmatpush.msra.mxu0 %v425
        %431 = vmatpush.msra.mxu0 %v424
        %432 = vmatpush.msra.mxu0 %v423
        %433 = vmatpush.msra.mxu0 %v422
        %434 = vmatpush.msra.mxu0 %v421
        %435 = vmatpush.msra.mxu0 %v420
        %436 = vmatpush.msra.mxu0 %v419
        %437 = vmatpush.msra.mxu0 %v418
        %438 = vmatpush.msra.mxu0 %v417
        %439 = vmatpush.msra.mxu0 %v416
        %440 = vmatpush.msra.mxu0 %v415
        %441 = vmatpush.msra.mxu0 %v414
        %442 = vmatpush.msra.mxu0 %v413
        %443 = vmatpush.msra.mxu0 %v412
        %444 = vmatpush.msra.mxu0 %v411
        %445 = vmatpush.msra.mxu0 %v410
        %446 = vmatmul.f32.gmra.mxu0 %v406
        %v447 = vpop.f32.mrf.mxu0
        %v448 = vadd.f32 %v428, %v447
        %449 = vmatmul.f32.gmra.mxu0 %v407
        %v450 = vpop.f32.mrf.mxu0
        %v451 = vadd.f32 %v428, %v450
        %452 = vmatmul.f32.gmra.mxu0 %v408
        %v453 = vpop.f32.mrf.mxu0
        %v454 = vadd.f32 %v428, %v453
        %455 = vmatmul.f32.gmra.mxu0 %v409
        %v456 = vpop.f32.mrf.mxu0
        %v457 = vadd.f32 %v428, %v456
        %458 = vdwg.mxu0
        %459 = vst [vmem:[%s280] sm:$0xff] %v448
        %460 = vst [vmem:[%s280 + $0x8] sm:$0xff] %v451
        %461 = vst [vmem:[%s280 + $0x10] sm:$0xff] %v454
        %462 = vst [vmem:[%s280 + $0x18] sm:$0xff] %v457
        %s463 = sand.u32 %s161, 1
        %s464 = sand.u32 %s161, 1
        %s465 = smul.addr %s464, 32
        %s466 = scalar_lea.vmem [#allocation5], %s465
        // Predicated region
        $region49: #{gpt_forward.16} parent=39 // pred_check
          %p467 = pneg %p171
        $region50: #{gpt_forward.16} parent=39 // pred_check_branch
          %469 = sbr.rel (%p467) target = $region52
        $region51: #{gpt_forward.16} parent=39 // pred_region
          %s470 = smul.u32 4, %s23
          %s471 = smul.addr %s470, 3
          %s472 = sadd.s32 %s24, %s471
          %s473 = smul.addr %s472, 8
          %s474 = scalar_lea.vmem %s5, %s473
          // Predicated region
          $region53: #{gpt_forward.16} parent=51 // pred_check
            _
          $region54: #{gpt_forward.16} parent=51 // pred_check_branch
            %476 = sbr.rel (0) target = $region56
          $region55: #{gpt_forward.16} parent=51 // pred_region
            // Predicated region
            $region57: #{gpt_forward.16} parent=55 // pred_check
              _
            $region58: #{gpt_forward.16} parent=55 // pred_check_branch
              %478 = sbr.rel (0) target = $region60
            $region59: #{gpt_forward.16} parent=55 // pred_region
              // Predicated region
              $region72: #{gpt_forward.16} parent=59 // pred_check
                _
              $region73: #{gpt_forward.16} parent=59 // pred_check_branch
                %500 = sbr.rel (0) target = $region75
              $region74: #{gpt_forward.16} parent=59 // pred_region
                loop: start=0, step=1, limit=1
                $region76: #{gpt_forward.16} parent=74 // loop_pre_header
                  _
                $region77: #{gpt_forward.16} parent=74 // loop_header
                  %s502 = sphi 0, %s506
                  %p503 = scmp.ge.s32.totalorder %s502, 1
                  %s507 = sphi %s466, %s466
                  %s508 = sphi %s474, %s474
                $region78: #{gpt_forward.16} parent=74 // loop_header_branch
                  %505 = sbr.rel (%p503) target = $region82
                $region79: #{gpt_forward.16} parent=74 // loop_body
                  %v509 = vld [vmem:[%s507] sm:$0xff]
                  %510 = vst [vmem:[%s508] sm:$0xff] %v509
                  %v511 = vld [vmem:[%s507 + $0x8] sm:$0xff]
                  %512 = vst [vmem:[%s508 + $0x18] sm:$0xff] %v511
                  %v513 = vld [vmem:[%s507 + $0x10] sm:$0xff]
                  %514 = vst [vmem:[%s508 + $0x30] sm:$0xff] %v513
                  %v515 = vld [vmem:[%s507 + $0x18] sm:$0xff]
                  %516 = vst [vmem:[%s508 + $0x48] sm:$0xff] %v515
                $region80: #{gpt_forward.16} parent=74 // loop_footer
                  %s506 = sadd.s32 1, %s502
                $region81: #{gpt_forward.16} parent=74 // loop_footer_branch
                  %501 = sbr.rel target = $region77
                $region82: #{gpt_forward.16} parent=74 // loop_exit
                  _
              $region75: #{gpt_forward.16} parent=59 // pred_fallthru
                _
              // Predicated region
              $region83: #{gpt_forward.16} parent=59 // pred_check
                _
              $region84: #{gpt_forward.16} parent=59 // pred_check_branch
                %518 = sbr.rel target = $region86
              $region85: #{gpt_forward.16} parent=59 // pred_region
                _
              $region86: #{gpt_forward.16} parent=59 // pred_fallthru
                _
            $region60: #{gpt_forward.16} parent=55 // pred_fallthru
              _
            // Predicated region
            $region61: #{gpt_forward.16} parent=55 // pred_check
              _
            $region62: #{gpt_forward.16} parent=55 // pred_check_branch
              %480 = sbr.rel target = $region64
            $region63: #{gpt_forward.16} parent=55 // pred_region
              %s482 = ssub.s32 256, 1
              loop: start=0, step=1, limit=1
              $region65: #{gpt_forward.16} parent=63 // loop_pre_header
                _
              $region66: #{gpt_forward.16} parent=63 // loop_header
                %s484 = sphi 0, %s488
                %p485 = scmp.ge.s32.totalorder %s484, 1
                %s489 = sphi %s466, %s466
                %s490 = sphi %s474, %s474
              $region67: #{gpt_forward.16} parent=63 // loop_header_branch
                %487 = sbr.rel (%p485) target = $region71
              $region68: #{gpt_forward.16} parent=63 // loop_body
                %v491 = vld [vmem:[%s489] sm:%s482]
                %492 = vst [vmem:[%s490] sm:%s482] %v491
                %v493 = vld [vmem:[%s489 + $0x8] sm:%s482]
                %494 = vst [vmem:[%s490 + $0x18] sm:%s482] %v493
                %v495 = vld [vmem:[%s489 + $0x10] sm:%s482]
                %496 = vst [vmem:[%s490 + $0x30] sm:%s482] %v495
                %v497 = vld [vmem:[%s489 + $0x18] sm:%s482]
                %498 = vst [vmem:[%s490 + $0x48] sm:%s482] %v497
              $region69: #{gpt_forward.16} parent=63 // loop_footer
                %s488 = sadd.s32 1, %s484
              $region70: #{gpt_forward.16} parent=63 // loop_footer_branch
                %483 = sbr.rel target = $region66
              $region71: #{gpt_forward.16} parent=63 // loop_exit
                _
            $region64: #{gpt_forward.16} parent=55 // pred_fallthru
              _
          $region56: #{gpt_forward.16} parent=51 // pred_fallthru
            _
          %519 = vnop
        $region52: #{gpt_forward.16} parent=39 // pred_fallthru
          _
      $region40: #{gpt_forward.16} parent=5 // pred_fallthru
        _
      %p520 = scmp.le.s32.totalorder 2, %s14
      // Predicated region
      $region87: #{gpt_forward.16} parent=5 // pred_check
        %p521 = pneg %p520
      $region88: #{gpt_forward.16} parent=5 // pred_check_branch
        %523 = sbr.rel (%p521) target = $region90
      $region89: #{gpt_forward.16} parent=5 // pred_region
        %s524 = ssub.s32 %s14, 2
        // Predicated region
        $region91: #{gpt_forward.16} parent=89 // pred_check
          %p525 = pneg %p177
        $region92: #{gpt_forward.16} parent=89 // pred_check_branch
          %527 = sbr.rel (%p525) target = $region94
        $region93: #{gpt_forward.16} parent=89 // pred_region
          %s528 = sand.u32 %s162, 1
          %s529 = sand.u32 %s162, 1
          %s530 = smul.addr %s529, 32
          %s531 = scalar_lea.vmem [#allocation5], %s530
        $region94: #{gpt_forward.16} parent=89 // pred_fallthru
          _
      $region90: #{gpt_forward.16} parent=5 // pred_fallthru
        _
    $region6: #{gpt_forward.16} parent=1 // loop_footer
      %s18 = sadd.s32 1, %s14
    $region7: #{gpt_forward.16} parent=1 // loop_footer_branch
      %13 = sbr.rel target = $region3
    $region8: #{gpt_forward.16} parent=1 // loop_exit
      _
    %532 = vsyncpa [#allocation4], 1
    %s533 = scalar_lea.sflag [#allocation4], 1
    %534 = vsyncpa %s533, 1

// kernel: gpt_forward.21
$region0: #{gpt_forward.21}
  #allocation0 [shape = 'u32[]', space=smem, size = 0x4, offset = 0x4, fixed_abs, tag = 'smem constant byte address 0x4 - core index']
  #allocation1 [shape = 'u32[72,128]{1,0:T(1,128)}', space=vmem, size = 0x9000, scoped, tag = 'internal scratch']
  #allocation2 [shape = 'f32[32,128]{1,0:T(8,128)}', space=vmem, size = 0x4000, scoped, tag = 'scratch operand']
  %s0 = inlined_call_operand.vmem [shape: f32[32,128], index: 0, kind: input, shape index: {}]
  %s1 = inlined_call_operand.vmem [shape: f32[1,128], index: 1, kind: input, shape index: {}]
  %s2 = inlined_call_operand.vmem [shape: f32[1,128], index: 2, kind: input, shape index: {}]
  %s3 = inlined_call_operand.hbm [shape: f32[128,256], index: 3, kind: input, shape index: {}]
  %s4 = inlined_call_operand.vmem [shape: f32[1,256], index: 4, kind: input, shape index: {}]
  %s5 = inlined_call_operand.hbm [shape: f32[32,256], index: 5, kind: output, shape index: {}]
  %s6 = sld [smem:[#allocation0]]
  $region38: #{gpt_forward.21} parent=0
    _
  %s8 = ssub.s32 1, %s6
  %s9 = scalar_select 0, %s8, %s6
  $region1: #{gpt_forward.21} parent=0
    #allocation3 [shape = 'u8[131072]{0}', space=vmem, size = 0x20000, scoped, tag = 'input window, operand 3, single buffered']
    #allocation4 [shape = 's32[1]{0}', space=sflag, size = 0x4, scoped, tag = 'scoped memory for gpt_forward.21']
    #allocation5 [shape = 's32[1]{0}', space=sflag, size = 0x4, scoped, tag = 'scoped memory for gpt_forward.21']
    #allocation6 [shape = 'u8[32768]{0}', space=vmem, size = 0x8000, scoped, tag = 'output window, operand 0, single buffered']
    %10 = vsyncpa [#allocation4], 0
    %11 = vsyncpa [#allocation5], 0
    // Predicated region
    $region2: #{gpt_forward.21} parent=1 // pred_check
      _
    $region3: #{gpt_forward.21} parent=1 // pred_check_branch
      %13 = sbr.rel (0) target = $region5
    $region4: #{gpt_forward.21} parent=1 // pred_region
      _
    $region5: #{gpt_forward.21} parent=1 // pred_fallthru
      _
    // Predicated region
    $region6: #{gpt_forward.21} parent=1 // pred_check
      _
    $region7: #{gpt_forward.21} parent=1 // pred_check_branch
      %15 = sbr.rel (0) target = $region9
    $region8: #{gpt_forward.21} parent=1 // pred_region
      _
    $region9: #{gpt_forward.21} parent=1 // pred_fallthru
      _
    // Predicated region
    $region10: #{gpt_forward.21} parent=1 // pred_check
      _
    $region11: #{gpt_forward.21} parent=1 // pred_check_branch
      %17 = sbr.rel (0) target = $region13
    $region12: #{gpt_forward.21} parent=1 // pred_region
      _
    $region13: #{gpt_forward.21} parent=1 // pred_fallthru
      _
    // Predicated region
    $region14: #{gpt_forward.21} parent=1 // pred_check
      _
    $region15: #{gpt_forward.21} parent=1 // pred_check_branch
      %19 = sbr.rel (0) target = $region17
    $region16: #{gpt_forward.21} parent=1 // pred_region
      %21 = vsyncadd [#allocation4], 0
      %s22 = sshll.u32 %s3, 4
      %s23 = int_to_ptr.hbm [resolvable:$true] %s22
      %s24 = sshll.u32 [#allocation3], 4
      %s25 = int_to_ptr.vmem [resolvable:$true] %s24
      %30 = dma.hbm_to_vmem [thread:$0]  %s23, 4096, %s25, [#allocation4], 256, 256, 16
    $region17: #{gpt_forward.21} parent=1 // pred_fallthru
      _
    // Predicated region
    $region18: #{gpt_forward.21} parent=1 // pred_check
      _
    $region19: #{gpt_forward.21} parent=1 // pred_check_branch
      %32 = sbr.rel (0) target = $region21
    $region20: #{gpt_forward.21} parent=1 // pred_region
      _
    $region21: #{gpt_forward.21} parent=1 // pred_fallthru
      _
    // Predicated region
    $region22: #{gpt_forward.21} parent=1 // pred_check
      _
    $region23: #{gpt_forward.21} parent=1 // pred_check_branch
      %34 = sbr.rel (0) target = $region25
    $region24: #{gpt_forward.21} parent=1 // pred_region
      %36 = dma.done [#allocation4], 4096
    $region25: #{gpt_forward.21} parent=1 // pred_fallthru
      _
    %p37 = scmp.eq.s32.totalorder 0, 0
    // Predicated region
    $region26: #{gpt_forward.21} parent=1 // pred_check
      %p38 = pneg %p37
    $region27: #{gpt_forward.21} parent=1 // pred_check_branch
      %40 = sbr.rel (%p38) target = $region29
    $region28: #{gpt_forward.21} parent=1 // pred_region
      %v41 = vld [vmem:[%s0] sm:$0xff]
      %v42 = vld [vmem:[%s0 + $0x8] sm:$0xff]
      %v43 = vld [vmem:[%s0 + $0x10] sm:$0xff]
      %v44 = vld [vmem:[%s0 + $0x18] sm:$0xff]
      %45 = vadd.xlane.f32.xlu0 %v41
      %v46 = vpop.xlane.xlu0 %45
      %47 = vadd.xlane.f32.xlu0 %v42
      %v48 = vpop.xlane.xlu0 %47
      %49 = vadd.xlane.f32.xlu0 %v43
      %v50 = vpop.xlane.xlu0 %49
      %51 = vadd.xlane.f32.xlu0 %v44
      %v52 = vpop.xlane.xlu0 %51
      %v53 = vrcp.pop 128.0
      %v54 = vmul.f32 128.0, %v53
      %v55 = vsub.f32 1.0, %v54
      %v56 = vmul.f32 %v53, %v55
      %v57 = vadd.f32 %v53, %v56
      %vm58 = vweird.f32 %v53
      %v59 = vsel %vm58, %v53, %v57
      %v60 = vmul.f32 %v46, %v59
      %v61 = vmul.f32 %v48, %v59
      %v62 = vmul.f32 %v50, %v59
      %v63 = vmul.f32 %v52, %v59
      %v64 = vsub.f32 %v41, %v60
      %v65 = vsub.f32 %v42, %v61
      %v66 = vsub.f32 %v43, %v62
      %v67 = vsub.f32 %v44, %v63
      %v68 = vmul.f32 %v64, %v64
      %v69 = vmul.f32 %v65, %v65
      %v70 = vmul.f32 %v66, %v66
      %v71 = vmul.f32 %v67, %v67
      %72 = vadd.xlane.f32.xlu0 %v68
      %v73 = vpop.xlane.xlu0 %72
      %74 = vadd.xlane.f32.xlu0 %v69
      %v75 = vpop.xlane.xlu0 %74
      %76 = vadd.xlane.f32.xlu0 %v70
      %v77 = vpop.xlane.xlu0 %76
      %78 = vadd.xlane.f32.xlu0 %v71
      %v79 = vpop.xlane.xlu0 %78
      %v80 = vmul.f32 %v73, %v59
      %v81 = vmul.f32 %v75, %v59
      %v82 = vmul.f32 %v77, %v59
      %v83 = vmul.f32 %v79, %v59
      %v84 = vadd.f32 %v80, 1e-05
      %v85 = vadd.f32 %v81, 1e-05
      %v86 = vadd.f32 %v82, 1e-05
      %v87 = vadd.f32 %v83, 1e-05
      %v88 = vrsqrt.pop %v84
      %v89 = vmul.f32 %v88, %v84
      %v90 = vmul.f32 %v89, %v88
      %v91 = vmul.f32 0.5, %v90
      %v92 = vsub.f32 1.5, %v91
      %v93 = vmul.f32 %v88, %v92
      %vm94 = vweird.f32 %v84
      %vm95 = vweird.f32 %v88
      %vm96 = vmor %vm94, %vm95
      %v97 = vsel %vm96, %v88, %v93
      %v98 = vrsqrt.pop %v85
      %v99 = vmul.f32 %v98, %v85
      %v100 = vmul.f32 %v99, %v98
      %v101 = vmul.f32 0.5, %v100
      %v102 = vsub.f32 1.5, %v101
      %v103 = vmul.f32 %v98, %v102
      %vm104 = vweird.f32 %v85
      %vm105 = vweird.f32 %v98
      %vm106 = vmor %vm104, %vm105
      %v107 = vsel %vm106, %v98, %v103
      %v108 = vrsqrt.pop %v86
      %v109 = vmul.f32 %v108, %v86
      %v110 = vmul.f32 %v109, %v108
      %v111 = vmul.f32 0.5, %v110
      %v112 = vsub.f32 1.5, %v111
      %v113 = vmul.f32 %v108, %v112
      %vm114 = vweird.f32 %v86
      %vm115 = vweird.f32 %v108
      %vm116 = vmor %vm114, %vm115
      %v117 = vsel %vm116, %v108, %v113
      %v118 = vrsqrt.pop %v87
      %v119 = vmul.f32 %v118, %v87
      %v120 = vmul.f32 %v119, %v118
      %v121 = vmul.f32 0.5, %v120
      %v122 = vsub.f32 1.5, %v121
      %v123 = vmul.f32 %v118, %v122
      %vm124 = vweird.f32 %v87
      %vm125 = vweird.f32 %v118
      %vm126 = vmor %vm124, %vm125
      %v127 = vsel %vm126, %v118, %v123
      %v128 = vmul.f32 %v64, %v97
      %v129 = vmul.f32 %v65, %v107
      %v130 = vmul.f32 %v66, %v117
      %v131 = vmul.f32 %v67, %v127
      %v132 = vld [vmem:[%s1] sm:$0x1]
      %v134 = vperm.slane %v132, 0
      %v136 = vmul.f32 %v128, %v134
      %v137 = vmul.f32 %v129, %v134
      %v138 = vmul.f32 %v130, %v134
      %v139 = vmul.f32 %v131, %v134
      %v140 = vld [vmem:[%s2] sm:$0x1]
      %v142 = vperm.slane %v140, 0
      %v144 = vadd.f32 %v136, %v142
      %v145 = vadd.f32 %v137, %v142
      %v146 = vadd.f32 %v138, %v142
      %v147 = vadd.f32 %v139, %v142
      %148 = vst [vmem:[#allocation2] sm:$0xff] %v144
      %149 = vst [vmem:[#allocation2 + $0x8] sm:$0xff] %v145
      %150 = vst [vmem:[#allocation2 + $0x10] sm:$0xff] %v146
      %151 = vst [vmem:[#allocation2 + $0x18] sm:$0xff] %v147
    $region29: #{gpt_forward.21} parent=1 // pred_fallthru
      _
    %v152 = vld [vmem:[#allocation2] sm:$0xff]
    %v153 = vld [vmem:[#allocation2 + $0x8] sm:$0xff]
    %v154 = vld [vmem:[#allocation2 + $0x10] sm:$0xff]
    %v155 = vld [vmem:[#allocation2 + $0x18] sm:$0xff]
    %v156 = vld [vmem:[#allocation3] sm:$0xff]
    %v157 = vld [vmem:[#allocation3 + $0x8] sm:$0xff]
    %v158 = vld [vmem:[#allocation3 + $0x10] sm:$0xff]
    %v159 = vld [vmem:[#allocation3 + $0x18] sm:$0xff]
    %v160 = vld [vmem:[#allocation3 + $0x20] sm:$0xff]
    %v161 = vld [vmem:[#allocation3 + $0x28] sm:$0xff]
    %v162 = vld [vmem:[#allocation3 + $0x30] sm:$0xff]
    %v163 = vld [vmem:[#allocation3 + $0x38] sm:$0xff]
    %v164 = vld [vmem:[#allocation3 + $0x40] sm:$0xff]
    %v165 = vld [vmem:[#allocation3 + $0x48] sm:$0xff]
    %v166 = vld [vmem:[#allocation3 + $0x50] sm:$0xff]
    %v167 = vld [vmem:[#allocation3 + $0x58] sm:$0xff]
    %v168 = vld [vmem:[#allocation3 + $0x60] sm:$0xff]
    %v169 = vld [vmem:[#allocation3 + $0x68] sm:$0xff]
    %v170 = vld [vmem:[#allocation3 + $0x70] sm:$0xff]
    %v171 = vld [vmem:[#allocation3 + $0x78] sm:$0xff]
    %v172 = vld [vmem:[#allocation3 + $0x80] sm:$0xff]
    %v173 = vld [vmem:[#allocation3 + $0x88] sm:$0xff]
    %v174 = vld [vmem:[#allocation3 + $0x90] sm:$0xff]
    %v175 = vld [vmem:[#allocation3 + $0x98] sm:$0xff]
    %v176 = vld [vmem:[#allocation3 + $0xa0] sm:$0xff]
    %v177 = vld [vmem:[#allocation3 + $0xa8] sm:$0xff]
    %v178 = vld [vmem:[#allocation3 + $0xb0] sm:$0xff]
    %v179 = vld [vmem:[#allocation3 + $0xb8] sm:$0xff]
    %v180 = vld [vmem:[#allocation3 + $0xc0] sm:$0xff]
    %v181 = vld [vmem:[#allocation3 + $0xc8] sm:$0xff]
    %v182 = vld [vmem:[#allocation3 + $0xd0] sm:$0xff]
    %v183 = vld [vmem:[#allocation3 + $0xd8] sm:$0xff]
    %v184 = vld [vmem:[#allocation3 + $0xe0] sm:$0xff]
    %v185 = vld [vmem:[#allocation3 + $0xe8] sm:$0xff]
    %v186 = vld [vmem:[#allocation3 + $0xf0] sm:$0xff]
    %v187 = vld [vmem:[#allocation3 + $0xf8] sm:$0xff]
    %v188 = vld [vmem:[%s4] sm:$0x3]
    %v190 = vperm.slane %v188, 0
    %v191 = vperm.slane %v188, 1
    %194 = vmatpush.msra.mxu0 %v186
    %195 = vmatpush.msra.mxu0 %v184
    %196 = vmatpush.msra.mxu0 %v182
    %197 = vmatpush.msra.mxu0 %v180
    %198 = vmatpush.msra.mxu0 %v178
    %199 = vmatpush.msra.mxu0 %v176
    %200 = vmatpush.msra.mxu0 %v174
    %201 = vmatpush.msra.mxu0 %v172
    %202 = vmatpush.msra.mxu0 %v170
    %203 = vmatpush.msra.mxu0 %v168
    %204 = vmatpush.msra.mxu0 %v166
    %205 = vmatpush.msra.mxu0 %v164
    %206 = vmatpush.msra.mxu0 %v162
    %207 = vmatpush.msra.mxu0 %v160
    %208 = vmatpush.msra.mxu0 %v158
    %209 = vmatpush.msra.mxu0 %v156
    %210 = vmatmul.f32.gmra.mxu0 %v152
    %v211 = vpop.f32.mrf.mxu0
    %v212 = vadd.f32 %v190, %v211
    %213 = vmatmul.f32.gmra.mxu0 %v153
    %v214 = vpop.f32.mrf.mxu0
    %v215 = vadd.f32 %v190, %v214
    %216 = vmatmul.f32.gmra.mxu0 %v154
    %v217 = vpop.f32.mrf.mxu0
    %v218 = vadd.f32 %v190, %v217
    %219 = vmatmul.f32.gmra.mxu0 %v155
    %v220 = vpop.f32.mrf.mxu0
    %v221 = vadd.f32 %v190, %v220
    %222 = vdwg.mxu0
    %223 = vmatpush.msra.mxu0 %v187
    %224 = vmatpush.msra.mxu0 %v185
    %225 = vmatpush.msra.mxu0 %v183
    %226 = vmatpush.msra.mxu0 %v181
    %227 = vmatpush.msra.mxu0 %v179
    %228 = vmatpush.msra.mxu0 %v177
    %229 = vmatpush.msra.mxu0 %v175
    %230 = vmatpush.msra.mxu0 %v173
    %231 = vmatpush.msra.mxu0 %v171
    %232 = vmatpush.msra.mxu0 %v169
    %233 = vmatpush.msra.mxu0 %v167
    %234 = vmatpush.msra.mxu0 %v165
    %235 = vmatpush.msra.mxu0 %v163
    %236 = vmatpush.msra.mxu0 %v161
    %237 = vmatpush.msra.mxu0 %v159
    %238 = vmatpush.msra.mxu0 %v157
    %239 = vmatmul.f32.gmra.mxu0 %v152
    %v240 = vpop.f32.mrf.mxu0
    %v241 = vadd.f32 %v191, %v240
    %242 = vmatmul.f32.gmra.mxu0 %v153
    %v243 = vpop.f32.mrf.mxu0
    %v244 = vadd.f32 %v191, %v243
    %245 = vmatmul.f32.gmra.mxu0 %v154
    %v246 = vpop.f32.mrf.mxu0
    %v247 = vadd.f32 %v191, %v246
    %248 = vmatmul.f32.gmra.mxu0 %v155
    %v249 = vpop.f32.mrf.mxu0
    %v250 = vadd.f32 %v191, %v249
    %251 = vdwg.mxu0
    %252 = vst [vmem:[#allocation6] sm:$0xff] %v212
    %253 = vst [vmem:[#allocation6 + $0x8] sm:$0xff] %v241
    %254 = vst [vmem:[#allocation6 + $0x10] sm:$0xff] %v215
    %255 = vst [vmem:[#allocation6 + $0x18] sm:$0xff] %v244
    %256 = vst [vmem:[#allocation6 + $0x20] sm:$0xff] %v218
    %257 = vst [vmem:[#allocation6 + $0x28] sm:$0xff] %v247
    %258 = vst [vmem:[#allocation6 + $0x30] sm:$0xff] %v221
    %259 = vst [vmem:[#allocation6 + $0x38] sm:$0xff] %v250
    // Predicated region
    $region30: #{gpt_forward.21} parent=1 // pred_check
      _
    $region31: #{gpt_forward.21} parent=1 // pred_check_branch
      %261 = sbr.rel (0) target = $region33
    $region32: #{gpt_forward.21} parent=1 // pred_region
      %263 = vsyncadd [#allocation5], 0
      %s264 = sshll.u32 [#allocation6], 4
      %s265 = int_to_ptr.vmem [resolvable:$true] %s264
      %s266 = sshll.u32 %s5, 4
      %s267 = int_to_ptr.hbm [resolvable:$true] %s266
      %272 = dma.vmem_to_hbm [thread:$0]  %s265, 1024, %s267, [#allocation5], 256, 256, 16
    $region33: #{gpt_forward.21} parent=1 // pred_fallthru
      _
    // Predicated region
    $region34: #{gpt_forward.21} parent=1 // pred_check
      _
    $region35: #{gpt_forward.21} parent=1 // pred_check_branch
      %274 = sbr.rel (0) target = $region37
    $region36: #{gpt_forward.21} parent=1 // pred_region
      %276 = dma.done [#allocation5], 1024
    $region37: #{gpt_forward.21} parent=1 // pred_fallthru
      _
    %277 = vsyncpa [#allocation4], 1
    %278 = vsyncpa [#allocation5], 1

</llo_original>
